<compile_context>
chip_gen: v7x
topology: tpu7x:2x2x1
jax: 0.10.0
libtpu: 0.0.40
codegen_flags: <defaults>
</compile_context>

<pallas_src>
import math
from functools import partial

import jax
import jax.numpy as jnp
import numpy as np
from jax.experimental import pallas as pl
from jax.experimental.pallas import tpu as pltpu


# ----------------------------- Pallas kernel --------------------------------
def _toy_disc_kernel(num_res_blocks, data_dim, silu_dtype,
                     x_ref, wmap_ref, wh_ref, vec_ref, b2_ref, out_ref):
    """Whole ToyDiscriminator forward for one batch tile.

    x_ref    : [tb, data_dim]               input tile (f32)
    wmap_ref : [data_dim, hid]              map weight (f32, [in,out])
    wh_ref   : [3*nb + 1, hid, hid]         res-block + out1 weights (bf16, [in,out])
    vec_ref  : [3*nb + 3, 1, hid]           f32 rows: bmap, 3*nb block biases,
                                            bout1, wout2-row (in that order)
    b2_ref   : [1]                          final scalar bias (SMEM)
    out_ref  : [tb, 1]
    """
    inv_sqrt2 = jnp.float32(1.0 / math.sqrt(2.0))
    cdt = wh_ref.dtype                      # bf16 MXU operand dtype
    nb3 = 3 * num_res_blocks

    def silu(v):                            # sigmoid on EUP (bf16 on v6e/v7x),
        s = jax.nn.sigmoid(v.astype(silu_dtype)).astype(jnp.float32)
        return v * s                        # multiply stays f32 on the VPU

    x = x_ref[...]                          # [tb, data_dim] f32

    # h = self.map(x): contraction depth == data_dim (tiny) -> VPU broadcast FMAs
    h = vec_ref[0]                          # bmap row [1, hid]
    for d in range(data_dim):               # static unroll (data_dim is tiny)
        h = h + x[:, d:d + 1] * wmap_ref[d:d + 1, :]

    # residual blocks (num_res_blocks is a compile-time constant -> unrolled)
    for rb in range(num_res_blocks):
        t = h
        for li in range(3):
            idx = rb * 3 + li               # static index into the stacks
            t = jnp.dot(t.astype(cdt), wh_ref[idx],
                        preferred_element_type=jnp.float32) + vec_ref[1 + idx]
            t = silu(t)
        h = (h + t) * inv_sqrt2

    # out_module: Linear(hid, hid) -> SiLU -> Linear(hid, 1)
    u = jnp.dot(h.astype(cdt), wh_ref[nb3],
                preferred_element_type=jnp.float32) + vec_ref[1 + nb3]
    u = silu(u)
    # final Linear(hid, 1): VPU multiply by wout2 row + XLU lane reduction
    w2 = vec_ref[2 + nb3]                   # [1, hid] f32
    o = jnp.sum(u * w2, axis=-1, keepdims=True) + b2_ref[0]   # [tb, 1]

    out_ref[...] = o.astype(out_ref.dtype)


# ------------------------------ wrapper --------------------------------------
def toy_discriminator_forward(x, params, *, num_res_blocks=3,
                              silu_dtype=jnp.float32,
                              max_tile_rows=1024, min_grid_steps=2):
    """x: [B, data_dim] f32 -> [B, 1] f32."""
    B, data_dim = x.shape
    hid = params["wmap"].shape[1]
    nb3 = 3 * num_res_blocks

    # Tile selection: >= min_grid_steps steps (v7x megacore / pipelining), tb
    # derived from B so last-tile padding is <= 7 rows, capped at max_tile_rows.
    n_steps = max(min_grid_steps, -(-B // max_tile_rows))
    tb = max(8, ((-(-B // n_steps) + 7) // 8) * 8)
    Bp = ((B + tb - 1) // tb) * tb
    if Bp != B:
        x = jnp.pad(x, ((0, Bp - B), (0, 0)))
    grid = (Bp // tb,)

    kernel = partial(_toy_disc_kernel, num_res_blocks, data_dim, silu_dtype)

    out = pl.pallas_call(
        kernel,
        out_shape=jax.ShapeDtypeStruct((Bp, 1), jnp.float32),
        grid_spec=pltpu.PrefetchScalarGridSpec(
            num_scalar_prefetch=0,
            grid=grid,
            in_specs=[
                pl.BlockSpec((tb, data_dim), lambda i: (i, 0)),          # x tile
                pl.BlockSpec((data_dim, hid), lambda i: (0, 0)),         # wmap
                pl.BlockSpec((nb3 + 1, hid, hid), lambda i: (0, 0, 0)),  # W stack
                pl.BlockSpec((nb3 + 3, 1, hid), lambda i: (0, 0, 0)),    # bias/row stack
                pl.BlockSpec(memory_space=pltpu.MemorySpace.SMEM),       # bout2 scalar
            ],
            out_specs=pl.BlockSpec((tb, 1), lambda i: (i, 0)),
        ),
        compiler_params=pltpu.CompilerParams(
            dimension_semantics=("parallel",)),
    )(x, params["wmap"], params["w_hid"], params["vec"], params["bout2"])

    return out[:B]


# -------------------------- deterministic params ------------------------------
def init_params(key, data_dim, hidden_dim, num_res_blocks):
    """PyTorch-style Linear init (uniform +-1/sqrt(fan_in)).

    Hidden-layer weights are stored [in, out] (transposed vs. PyTorch) in bf16
    and stacked; all hid-sized bias rows (+ the wout2 row) are stacked in f32.
    """
    n_linear = 1 + 3 * num_res_blocks + 2
    ks = jax.random.split(key, 2 * n_linear)
    k_iter = iter(ks)

    def linear(fan_in, fan_out):
        bound = 1.0 / math.sqrt(fan_in)
        w = jax.random.uniform(next(k_iter), (fan_in, fan_out),
                               jnp.float32, -bound, bound)
        b = jax.random.uniform(next(k_iter), (fan_out,),
                               jnp.float32, -bound, bound)
        return w, b

    wmap, bmap = linear(data_dim, hidden_dim)

    w_hid, vec = [], [bmap]                       # vec rows, each shape (hid,)
    for _ in range(num_res_blocks):
        for _ in range(3):
            w, b = linear(hidden_dim, hidden_dim)
            w_hid.append(w.astype(jnp.bfloat16))
            vec.append(b)
    wout1, bout1 = linear(hidden_dim, hidden_dim)
    w_hid.append(wout1.astype(jnp.bfloat16))
    vec.append(bout1)
    wout2, bout2 = linear(hidden_dim, 1)          # wout2: [hid, 1]
    vec.append(wout2[:, 0])                       # stored as a row (VPU path)

    return {
        "wmap": wmap,                                  # [data_dim, hid] f32
        "w_hid": jnp.stack(w_hid, axis=0),             # [3*nb+1, hid, hid] bf16
        "vec": jnp.stack(vec, axis=0)[:, None, :],     # [3*nb+3, 1, hid]   f32
        "bout2": bout2,                                # [1]                f32
    }


# ---------------------------- pure-JAX reference -------------------------------
def reference_forward(x, p, num_res_blocks, silu_dtype):
    """Mirrors the kernel's math exactly (bf16 MXU operands, f32 accumulate)."""
    cdt = p["w_hid"].dtype
    nb3 = 3 * num_res_blocks

    def silu(v):
        return v * jax.nn.sigmoid(v.astype(silu_dtype)).astype(jnp.float32)

    h = p["vec"][0]
    for d in range(x.shape[1]):
        h = h + x[:, d:d + 1] * p["wmap"][d:d + 1, :]
    for rb in range(num_res_blocks):
        t = h
        for li in range(3):
            idx = rb * 3 + li
            t = jnp.dot(t.astype(cdt), p["w_hid"][idx],
                        preferred_element_type=jnp.float32) + p["vec"][1 + idx]
            t = silu(t)
        h = (h + t) * jnp.float32(1.0 / math.sqrt(2.0))
    u = jnp.dot(h.astype(cdt), p["w_hid"][nb3],
                preferred_element_type=jnp.float32) + p["vec"][1 + nb3]
    u = silu(u)
    return jnp.sum(u * p["vec"][2 + nb3], axis=-1, keepdims=True) + p["bout2"][0]


def _default_silu_dtype():
    """bf16 sigmoid on v6e/v7x (bf16 EUP), f32 elsewhere (v5e has no bf16 EUP)."""
    kind = jax.devices()[0].device_kind.lower()
    if "v6" in kind or "v7" in kind:
        return jnp.bfloat16
    return jnp.float32


if __name__ == "__main__":
    data_dim = 2
    hidden_dim = 128
    num_res_blocks = 3
    batch = 256            # -> 2 grid steps of 128 rows (pipelined, v7x megacore)

    key = jax.random.PRNGKey(0)
    kx, kp = jax.random.split(key)
    x = jax.random.normal(kx, (batch, data_dim), dtype=jnp.float32)
    params = init_params(kp, data_dim, hidden_dim, num_res_blocks)

    silu_dtype = _default_silu_dtype()

    out = toy_discriminator_forward(x, params,
                                    num_res_blocks=num_res_blocks,
                                    silu_dtype=silu_dtype)
    out = jax.block_until_ready(out)
    assert out.shape == (batch, 1)

    ref = reference_forward(x, params, num_res_blocks, silu_dtype)
    if silu_dtype == jnp.float32:
        rtol = atol = 1e-4
    else:
        # bf16 sigmoid: XLA vs Mosaic EUP rounding may differ by a few bf16 ulps
        rtol = atol = 3e-2
    np.testing.assert_allclose(np.asarray(out), np.asarray(ref),
                               rtol=rtol, atol=atol)
    print("KERNEL_OK")
</pallas_src>

<mosaic_0001>
module attributes {stable_mosaic.version = 11 : i64} {
  func.func @_toy_disc_kernel(%arg0: i32, %arg1: memref<128x2xf32, #tpu.memory_space<vmem>>, %arg2: memref<2x128xf32, #tpu.memory_space<vmem>>, %arg3: memref<10x128x128xbf16, #tpu.memory_space<vmem>>, %arg4: memref<12x1x128xf32, #tpu.memory_space<vmem>>, %arg5: memref<1xf32, #tpu.memory_space<smem>>, %arg6: memref<128x1xf32, #tpu.memory_space<vmem>>) attributes {dimension_semantics = [#tpu.dimension_semantics<parallel>], iteration_bounds = array<i64: 2>, scalar_prefetch = 0 : i64, scratch_operands = 0 : i64, tpu.core_type = #tpu.core_type<tc>, window_params = [{transform_indices = @transform_0, window_bounds = array<i64: 128, 2>}, {pipeline_mode = #tpu.pipeline_mode<synchronous>, transform_indices = @transform_1, window_bounds = array<i64: 2, 128>}, {pipeline_mode = #tpu.pipeline_mode<synchronous>, transform_indices = @transform_2, window_bounds = array<i64: 10, 128, 128>}, {pipeline_mode = #tpu.pipeline_mode<synchronous>, transform_indices = @transform_3, window_bounds = array<i64: 12, 1, 128>}, {transform_indices = @transform_4, window_bounds = array<i64: 1>}, {transform_indices = @transform_5, window_bounds = array<i64: 128, 1>}]} {
    %c0 = arith.constant 0 : index
    %c0_0 = arith.constant 0 : index
    %0 = vector.load %arg1[%c0, %c0_0] : memref<128x2xf32, #tpu.memory_space<vmem>>, vector<128x2xf32>
    %c0_1 = arith.constant 0 : index
    %c0_2 = arith.constant 0 : index
    %c0_3 = arith.constant 0 : index
    %1 = vector.load %arg4[%c0_1, %c0_2, %c0_3] : memref<12x1x128xf32, #tpu.memory_space<vmem>>, vector<1x1x128xf32>
    %2 = vector.shape_cast %1 : vector<1x1x128xf32> to vector<1x128xf32>
    %3 = vector.extract_strided_slice %0 {offsets = [0, 0], sizes = [128, 1], strides = [1, 1]} : vector<128x2xf32> to vector<128x1xf32>
    %c0_4 = arith.constant 0 : index
    %c0_5 = arith.constant 0 : index
    %4 = vector.load %arg2[%c0_4, %c0_5] : memref<2x128xf32, #tpu.memory_space<vmem>>, vector<1x128xf32>
    %5 = vector.broadcast %3 : vector<128x1xf32> to vector<128x128xf32>
    %6 = vector.broadcast %4 : vector<1x128xf32> to vector<128x128xf32>
    %7 = arith.mulf %5, %6 : vector<128x128xf32>
    %8 = vector.broadcast %2 : vector<1x128xf32> to vector<128x128xf32>
    %9 = arith.addf %8, %7 : vector<128x128xf32>
    %10 = vector.extract_strided_slice %0 {offsets = [0, 1], sizes = [128, 1], strides = [1, 1]} : vector<128x2xf32> to vector<128x1xf32>
    %c1 = arith.constant 1 : index
    %c0_6 = arith.constant 0 : index
    %11 = vector.load %arg2[%c1, %c0_6] : memref<2x128xf32, #tpu.memory_space<vmem>>, vector<1x128xf32>
    %12 = vector.broadcast %10 : vector<128x1xf32> to vector<128x128xf32>
    %13 = vector.broadcast %11 : vector<1x128xf32> to vector<128x128xf32>
    %14 = arith.mulf %12, %13 : vector<128x128xf32>
    %15 = arith.addf %9, %14 : vector<128x128xf32>
    %16 = arith.truncf %15 : vector<128x128xf32> to vector<128x128xbf16>
    %c0_7 = arith.constant 0 : index
    %c0_8 = arith.constant 0 : index
    %c0_9 = arith.constant 0 : index
    %17 = vector.load %arg3[%c0_7, %c0_8, %c0_9] : memref<10x128x128xbf16, #tpu.memory_space<vmem>>, vector<1x128x128xbf16>
    %18 = vector.shape_cast %17 : vector<1x128x128xbf16> to vector<128x128xbf16>
    %cst = arith.constant dense<0.000000e+00> : vector<128x128xf32>
    %19 = tpu.matmul %16, %18, %cst {dimension_numbers = #tpu.dot_dimension_numbers<[1], [0], [0], [1], [0, 0, 1, 1], [], []>} : vector<128x128xbf16>, vector<128x128xbf16>, vector<128x128xf32> -> vector<128x128xf32>
    %c1_10 = arith.constant 1 : index
    %c0_11 = arith.constant 0 : index
    %c0_12 = arith.constant 0 : index
    %20 = vector.load %arg4[%c1_10, %c0_11, %c0_12] : memref<12x1x128xf32, #tpu.memory_space<vmem>>, vector<1x1x128xf32>
    %21 = vector.shape_cast %20 : vector<1x1x128xf32> to vector<1x128xf32>
    %22 = vector.broadcast %21 : vector<1x128xf32> to vector<128x128xf32>
    %23 = arith.addf %19, %22 : vector<128x128xf32>
    %24 = arith.negf %23 : vector<128x128xf32>
    %25 = math.exp %24 : vector<128x128xf32>
    %cst_13 = arith.constant 1.000000e+00 : f32
    %26 = vector.broadcast %cst_13 : f32 to vector<128x128xf32>
    %27 = arith.addf %26, %25 : vector<128x128xf32>
    %28 = arith.divf %26, %27 : vector<128x128xf32>
    %29 = arith.mulf %23, %28 : vector<128x128xf32>
    %30 = arith.truncf %29 : vector<128x128xf32> to vector<128x128xbf16>
    %c1_14 = arith.constant 1 : index
    %c0_15 = arith.constant 0 : index
    %c0_16 = arith.constant 0 : index
    %31 = vector.load %arg3[%c1_14, %c0_15, %c0_16] : memref<10x128x128xbf16, #tpu.memory_space<vmem>>, vector<1x128x128xbf16>
    %32 = vector.shape_cast %31 : vector<1x128x128xbf16> to vector<128x128xbf16>
    %cst_17 = arith.constant dense<0.000000e+00> : vector<128x128xf32>
    %33 = tpu.matmul %30, %32, %cst_17 {dimension_numbers = #tpu.dot_dimension_numbers<[1], [0], [0], [1], [0, 0, 1, 1], [], []>} : vector<128x128xbf16>, vector<128x128xbf16>, vector<128x128xf32> -> vector<128x128xf32>
    %c2 = arith.constant 2 : index
    %c0_18 = arith.constant 0 : index
    %c0_19 = arith.constant 0 : index
    %34 = vector.load %arg4[%c2, %c0_18, %c0_19] : memref<12x1x128xf32, #tpu.memory_space<vmem>>, vector<1x1x128xf32>
    %35 = vector.shape_cast %34 : vector<1x1x128xf32> to vector<1x128xf32>
    %36 = vector.broadcast %35 : vector<1x128xf32> to vector<128x128xf32>
    %37 = arith.addf %33, %36 : vector<128x128xf32>
    %38 = arith.negf %37 : vector<128x128xf32>
    %39 = math.exp %38 : vector<128x128xf32>
    %cst_20 = arith.constant 1.000000e+00 : f32
    %40 = vector.broadcast %cst_20 : f32 to vector<128x128xf32>
    %41 = arith.addf %40, %39 : vector<128x128xf32>
    %42 = arith.divf %40, %41 : vector<128x128xf32>
    %43 = arith.mulf %37, %42 : vector<128x128xf32>
    %44 = arith.truncf %43 : vector<128x128xf32> to vector<128x128xbf16>
    %c2_21 = arith.constant 2 : index
    %c0_22 = arith.constant 0 : index
    %c0_23 = arith.constant 0 : index
    %45 = vector.load %arg3[%c2_21, %c0_22, %c0_23] : memref<10x128x128xbf16, #tpu.memory_space<vmem>>, vector<1x128x128xbf16>
    %46 = vector.shape_cast %45 : vector<1x128x128xbf16> to vector<128x128xbf16>
    %cst_24 = arith.constant dense<0.000000e+00> : vector<128x128xf32>
    %47 = tpu.matmul %44, %46, %cst_24 {dimension_numbers = #tpu.dot_dimension_numbers<[1], [0], [0], [1], [0, 0, 1, 1], [], []>} : vector<128x128xbf16>, vector<128x128xbf16>, vector<128x128xf32> -> vector<128x128xf32>
    %c3 = arith.constant 3 : index
    %c0_25 = arith.constant 0 : index
    %c0_26 = arith.constant 0 : index
    %48 = vector.load %arg4[%c3, %c0_25, %c0_26] : memref<12x1x128xf32, #tpu.memory_space<vmem>>, vector<1x1x128xf32>
    %49 = vector.shape_cast %48 : vector<1x1x128xf32> to vector<1x128xf32>
    %50 = vector.broadcast %49 : vector<1x128xf32> to vector<128x128xf32>
    %51 = arith.addf %47, %50 : vector<128x128xf32>
    %52 = arith.negf %51 : vector<128x128xf32>
    %53 = math.exp %52 : vector<128x128xf32>
    %cst_27 = arith.constant 1.000000e+00 : f32
    %54 = vector.broadcast %cst_27 : f32 to vector<128x128xf32>
    %55 = arith.addf %54, %53 : vector<128x128xf32>
    %56 = arith.divf %54, %55 : vector<128x128xf32>
    %57 = arith.mulf %51, %56 : vector<128x128xf32>
    %58 = arith.addf %15, %57 : vector<128x128xf32>
    %cst_28 = arith.constant 0.707106769 : f32
    %59 = vector.broadcast %cst_28 : f32 to vector<128x128xf32>
    %60 = arith.mulf %58, %59 : vector<128x128xf32>
    %61 = arith.truncf %60 : vector<128x128xf32> to vector<128x128xbf16>
    %c3_29 = arith.constant 3 : index
    %c0_30 = arith.constant 0 : index
    %c0_31 = arith.constant 0 : index
    %62 = vector.load %arg3[%c3_29, %c0_30, %c0_31] : memref<10x128x128xbf16, #tpu.memory_space<vmem>>, vector<1x128x128xbf16>
    %63 = vector.shape_cast %62 : vector<1x128x128xbf16> to vector<128x128xbf16>
    %cst_32 = arith.constant dense<0.000000e+00> : vector<128x128xf32>
    %64 = tpu.matmul %61, %63, %cst_32 {dimension_numbers = #tpu.dot_dimension_numbers<[1], [0], [0], [1], [0, 0, 1, 1], [], []>} : vector<128x128xbf16>, vector<128x128xbf16>, vector<128x128xf32> -> vector<128x128xf32>
    %c4 = arith.constant 4 : index
    %c0_33 = arith.constant 0 : index
    %c0_34 = arith.constant 0 : index
    %65 = vector.load %arg4[%c4, %c0_33, %c0_34] : memref<12x1x128xf32, #tpu.memory_space<vmem>>, vector<1x1x128xf32>
    %66 = vector.shape_cast %65 : vector<1x1x128xf32> to vector<1x128xf32>
    %67 = vector.broadcast %66 : vector<1x128xf32> to vector<128x128xf32>
    %68 = arith.addf %64, %67 : vector<128x128xf32>
    %69 = arith.negf %68 : vector<128x128xf32>
    %70 = math.exp %69 : vector<128x128xf32>
    %cst_35 = arith.constant 1.000000e+00 : f32
    %71 = vector.broadcast %cst_35 : f32 to vector<128x128xf32>
    %72 = arith.addf %71, %70 : vector<128x128xf32>
    %73 = arith.divf %71, %72 : vector<128x128xf32>
    %74 = arith.mulf %68, %73 : vector<128x128xf32>
    %75 = arith.truncf %74 : vector<128x128xf32> to vector<128x128xbf16>
    %c4_36 = arith.constant 4 : index
    %c0_37 = arith.constant 0 : index
    %c0_38 = arith.constant 0 : index
    %76 = vector.load %arg3[%c4_36, %c0_37, %c0_38] : memref<10x128x128xbf16, #tpu.memory_space<vmem>>, vector<1x128x128xbf16>
    %77 = vector.shape_cast %76 : vector<1x128x128xbf16> to vector<128x128xbf16>
    %cst_39 = arith.constant dense<0.000000e+00> : vector<128x128xf32>
    %78 = tpu.matmul %75, %77, %cst_39 {dimension_numbers = #tpu.dot_dimension_numbers<[1], [0], [0], [1], [0, 0, 1, 1], [], []>} : vector<128x128xbf16>, vector<128x128xbf16>, vector<128x128xf32> -> vector<128x128xf32>
    %c5 = arith.constant 5 : index
    %c0_40 = arith.constant 0 : index
    %c0_41 = arith.constant 0 : index
    %79 = vector.load %arg4[%c5, %c0_40, %c0_41] : memref<12x1x128xf32, #tpu.memory_space<vmem>>, vector<1x1x128xf32>
    %80 = vector.shape_cast %79 : vector<1x1x128xf32> to vector<1x128xf32>
    %81 = vector.broadcast %80 : vector<1x128xf32> to vector<128x128xf32>
    %82 = arith.addf %78, %81 : vector<128x128xf32>
    %83 = arith.negf %82 : vector<128x128xf32>
    %84 = math.exp %83 : vector<128x128xf32>
    %cst_42 = arith.constant 1.000000e+00 : f32
    %85 = vector.broadcast %cst_42 : f32 to vector<128x128xf32>
    %86 = arith.addf %85, %84 : vector<128x128xf32>
    %87 = arith.divf %85, %86 : vector<128x128xf32>
    %88 = arith.mulf %82, %87 : vector<128x128xf32>
    %89 = arith.truncf %88 : vector<128x128xf32> to vector<128x128xbf16>
    %c5_43 = arith.constant 5 : index
    %c0_44 = arith.constant 0 : index
    %c0_45 = arith.constant 0 : index
    %90 = vector.load %arg3[%c5_43, %c0_44, %c0_45] : memref<10x128x128xbf16, #tpu.memory_space<vmem>>, vector<1x128x128xbf16>
    %91 = vector.shape_cast %90 : vector<1x128x128xbf16> to vector<128x128xbf16>
    %cst_46 = arith.constant dense<0.000000e+00> : vector<128x128xf32>
    %92 = tpu.matmul %89, %91, %cst_46 {dimension_numbers = #tpu.dot_dimension_numbers<[1], [0], [0], [1], [0, 0, 1, 1], [], []>} : vector<128x128xbf16>, vector<128x128xbf16>, vector<128x128xf32> -> vector<128x128xf32>
    %c6 = arith.constant 6 : index
    %c0_47 = arith.constant 0 : index
    %c0_48 = arith.constant 0 : index
    %93 = vector.load %arg4[%c6, %c0_47, %c0_48] : memref<12x1x128xf32, #tpu.memory_space<vmem>>, vector<1x1x128xf32>
    %94 = vector.shape_cast %93 : vector<1x1x128xf32> to vector<1x128xf32>
    %95 = vector.broadcast %94 : vector<1x128xf32> to vector<128x128xf32>
    %96 = arith.addf %92, %95 : vector<128x128xf32>
    %97 = arith.negf %96 : vector<128x128xf32>
    %98 = math.exp %97 : vector<128x128xf32>
    %cst_49 = arith.constant 1.000000e+00 : f32
    %99 = vector.broadcast %cst_49 : f32 to vector<128x128xf32>
    %100 = arith.addf %99, %98 : vector<128x128xf32>
    %101 = arith.divf %99, %100 : vector<128x128xf32>
    %102 = arith.mulf %96, %101 : vector<128x128xf32>
    %103 = arith.addf %60, %102 : vector<128x128xf32>
    %cst_50 = arith.constant 0.707106769 : f32
    %104 = vector.broadcast %cst_50 : f32 to vector<128x128xf32>
    %105 = arith.mulf %103, %104 : vector<128x128xf32>
    %106 = arith.truncf %105 : vector<128x128xf32> to vector<128x128xbf16>
    %c6_51 = arith.constant 6 : index
    %c0_52 = arith.constant 0 : index
    %c0_53 = arith.constant 0 : index
    %107 = vector.load %arg3[%c6_51, %c0_52, %c0_53] : memref<10x128x128xbf16, #tpu.memory_space<vmem>>, vector<1x128x128xbf16>
    %108 = vector.shape_cast %107 : vector<1x128x128xbf16> to vector<128x128xbf16>
    %cst_54 = arith.constant dense<0.000000e+00> : vector<128x128xf32>
    %109 = tpu.matmul %106, %108, %cst_54 {dimension_numbers = #tpu.dot_dimension_numbers<[1], [0], [0], [1], [0, 0, 1, 1], [], []>} : vector<128x128xbf16>, vector<128x128xbf16>, vector<128x128xf32> -> vector<128x128xf32>
    %c7 = arith.constant 7 : index
    %c0_55 = arith.constant 0 : index
    %c0_56 = arith.constant 0 : index
    %110 = vector.load %arg4[%c7, %c0_55, %c0_56] : memref<12x1x128xf32, #tpu.memory_space<vmem>>, vector<1x1x128xf32>
    %111 = vector.shape_cast %110 : vector<1x1x128xf32> to vector<1x128xf32>
    %112 = vector.broadcast %111 : vector<1x128xf32> to vector<128x128xf32>
    %113 = arith.addf %109, %112 : vector<128x128xf32>
    %114 = arith.negf %113 : vector<128x128xf32>
    %115 = math.exp %114 : vector<128x128xf32>
    %cst_57 = arith.constant 1.000000e+00 : f32
    %116 = vector.broadcast %cst_57 : f32 to vector<128x128xf32>
    %117 = arith.addf %116, %115 : vector<128x128xf32>
    %118 = arith.divf %116, %117 : vector<128x128xf32>
    %119 = arith.mulf %113, %118 : vector<128x128xf32>
    %120 = arith.truncf %119 : vector<128x128xf32> to vector<128x128xbf16>
    %c7_58 = arith.constant 7 : index
    %c0_59 = arith.constant 0 : index
    %c0_60 = arith.constant 0 : index
    %121 = vector.load %arg3[%c7_58, %c0_59, %c0_60] : memref<10x128x128xbf16, #tpu.memory_space<vmem>>, vector<1x128x128xbf16>
    %122 = vector.shape_cast %121 : vector<1x128x128xbf16> to vector<128x128xbf16>
    %cst_61 = arith.constant dense<0.000000e+00> : vector<128x128xf32>
    %123 = tpu.matmul %120, %122, %cst_61 {dimension_numbers = #tpu.dot_dimension_numbers<[1], [0], [0], [1], [0, 0, 1, 1], [], []>} : vector<128x128xbf16>, vector<128x128xbf16>, vector<128x128xf32> -> vector<128x128xf32>
    %c8 = arith.constant 8 : index
    %c0_62 = arith.constant 0 : index
    %c0_63 = arith.constant 0 : index
    %124 = vector.load %arg4[%c8, %c0_62, %c0_63] : memref<12x1x128xf32, #tpu.memory_space<vmem>>, vector<1x1x128xf32>
    %125 = vector.shape_cast %124 : vector<1x1x128xf32> to vector<1x128xf32>
    %126 = vector.broadcast %125 : vector<1x128xf32> to vector<128x128xf32>
    %127 = arith.addf %123, %126 : vector<128x128xf32>
    %128 = arith.negf %127 : vector<128x128xf32>
    %129 = math.exp %128 : vector<128x128xf32>
    %cst_64 = arith.constant 1.000000e+00 : f32
    %130 = vector.broadcast %cst_64 : f32 to vector<128x128xf32>
    %131 = arith.addf %130, %129 : vector<128x128xf32>
    %132 = arith.divf %130, %131 : vector<128x128xf32>
    %133 = arith.mulf %127, %132 : vector<128x128xf32>
    %134 = arith.truncf %133 : vector<128x128xf32> to vector<128x128xbf16>
    %c8_65 = arith.constant 8 : index
    %c0_66 = arith.constant 0 : index
    %c0_67 = arith.constant 0 : index
    %135 = vector.load %arg3[%c8_65, %c0_66, %c0_67] : memref<10x128x128xbf16, #tpu.memory_space<vmem>>, vector<1x128x128xbf16>
    %136 = vector.shape_cast %135 : vector<1x128x128xbf16> to vector<128x128xbf16>
    %cst_68 = arith.constant dense<0.000000e+00> : vector<128x128xf32>
    %137 = tpu.matmul %134, %136, %cst_68 {dimension_numbers = #tpu.dot_dimension_numbers<[1], [0], [0], [1], [0, 0, 1, 1], [], []>} : vector<128x128xbf16>, vector<128x128xbf16>, vector<128x128xf32> -> vector<128x128xf32>
    %c9 = arith.constant 9 : index
    %c0_69 = arith.constant 0 : index
    %c0_70 = arith.constant 0 : index
    %138 = vector.load %arg4[%c9, %c0_69, %c0_70] : memref<12x1x128xf32, #tpu.memory_space<vmem>>, vector<1x1x128xf32>
    %139 = vector.shape_cast %138 : vector<1x1x128xf32> to vector<1x128xf32>
    %140 = vector.broadcast %139 : vector<1x128xf32> to vector<128x128xf32>
    %141 = arith.addf %137, %140 : vector<128x128xf32>
    %142 = arith.negf %141 : vector<128x128xf32>
    %143 = math.exp %142 : vector<128x128xf32>
    %cst_71 = arith.constant 1.000000e+00 : f32
    %144 = vector.broadcast %cst_71 : f32 to vector<128x128xf32>
    %145 = arith.addf %144, %143 : vector<128x128xf32>
    %146 = arith.divf %144, %145 : vector<128x128xf32>
    %147 = arith.mulf %141, %146 : vector<128x128xf32>
    %148 = arith.addf %105, %147 : vector<128x128xf32>
    %cst_72 = arith.constant 0.707106769 : f32
    %149 = vector.broadcast %cst_72 : f32 to vector<128x128xf32>
    %150 = arith.mulf %148, %149 : vector<128x128xf32>
    %151 = arith.truncf %150 : vector<128x128xf32> to vector<128x128xbf16>
    %c9_73 = arith.constant 9 : index
    %c0_74 = arith.constant 0 : index
    %c0_75 = arith.constant 0 : index
    %152 = vector.load %arg3[%c9_73, %c0_74, %c0_75] : memref<10x128x128xbf16, #tpu.memory_space<vmem>>, vector<1x128x128xbf16>
    %153 = vector.shape_cast %152 : vector<1x128x128xbf16> to vector<128x128xbf16>
    %cst_76 = arith.constant dense<0.000000e+00> : vector<128x128xf32>
    %154 = tpu.matmul %151, %153, %cst_76 {dimension_numbers = #tpu.dot_dimension_numbers<[1], [0], [0], [1], [0, 0, 1, 1], [], []>} : vector<128x128xbf16>, vector<128x128xbf16>, vector<128x128xf32> -> vector<128x128xf32>
    %c10 = arith.constant 10 : index
    %c0_77 = arith.constant 0 : index
    %c0_78 = arith.constant 0 : index
    %155 = vector.load %arg4[%c10, %c0_77, %c0_78] : memref<12x1x128xf32, #tpu.memory_space<vmem>>, vector<1x1x128xf32>
    %156 = vector.shape_cast %155 : vector<1x1x128xf32> to vector<1x128xf32>
    %157 = vector.broadcast %156 : vector<1x128xf32> to vector<128x128xf32>
    %158 = arith.addf %154, %157 : vector<128x128xf32>
    %159 = arith.negf %158 : vector<128x128xf32>
    %160 = math.exp %159 : vector<128x128xf32>
    %cst_79 = arith.constant 1.000000e+00 : f32
    %161 = vector.broadcast %cst_79 : f32 to vector<128x128xf32>
    %162 = arith.addf %161, %160 : vector<128x128xf32>
    %163 = arith.divf %161, %162 : vector<128x128xf32>
    %164 = arith.mulf %158, %163 : vector<128x128xf32>
    %c11 = arith.constant 11 : index
    %c0_80 = arith.constant 0 : index
    %c0_81 = arith.constant 0 : index
    %165 = vector.load %arg4[%c11, %c0_80, %c0_81] : memref<12x1x128xf32, #tpu.memory_space<vmem>>, vector<1x1x128xf32>
    %166 = vector.shape_cast %165 : vector<1x1x128xf32> to vector<1x128xf32>
    %167 = vector.broadcast %166 : vector<1x128xf32> to vector<128x128xf32>
    %168 = arith.mulf %164, %167 : vector<128x128xf32>
    %cst_82 = arith.constant dense<0.000000e+00> : vector<128xf32>
    %169 = vector.multi_reduction <add>, %168, %cst_82 [1] : vector<128x128xf32> to vector<128xf32>
    %170 = vector.shape_cast %169 : vector<128xf32> to vector<128x1xf32>
    %c0_83 = arith.constant 0 : index
    %171 = memref.load %arg5[%c0_83] : memref<1xf32, #tpu.memory_space<smem>>
    %172 = vector.broadcast %171 : f32 to vector<128x1xf32>
    %173 = arith.addf %170, %172 : vector<128x1xf32>
    %c0_84 = arith.constant 0 : index
    %c0_85 = arith.constant 0 : index
    %174 = vector.load %arg6[%c0_84, %c0_85] : memref<128x1xf32, #tpu.memory_space<vmem>>, vector<128x1xf32>
    tpu.vector_store %arg6[%c0_84, %c0_85], %173 {strides = array<i32>} : memref<128x1xf32, #tpu.memory_space<vmem>>, vector<128x1xf32>,
    return
  }
  func.func @transform_0(%arg0: i32) -> (i32, i32) {
    %c0_i32 = arith.constant 0 : i32
    %c0_i32_0 = arith.constant 0 : i32
    return %arg0, %c0_i32 : i32, i32
  }
  func.func @transform_1(%arg0: i32) -> (i32, i32) {
    %c0_i32 = arith.constant 0 : i32
    %c0_i32_0 = arith.constant 0 : i32
    %c0_i32_1 = arith.constant 0 : i32
    return %c0_i32, %c0_i32_0 : i32, i32
  }
  func.func @transform_2(%arg0: i32) -> (i32, i32, i32) {
    %c0_i32 = arith.constant 0 : i32
    %c0_i32_0 = arith.constant 0 : i32
    %c0_i32_1 = arith.constant 0 : i32
    %c0_i32_2 = arith.constant 0 : i32
    return %c0_i32, %c0_i32_0, %c0_i32_1 : i32, i32, i32
  }
  func.func @transform_3(%arg0: i32) -> (i32, i32, i32) {
    %c0_i32 = arith.constant 0 : i32
    %c0_i32_0 = arith.constant 0 : i32
    %c0_i32_1 = arith.constant 0 : i32
    %c0_i32_2 = arith.constant 0 : i32
    return %c0_i32, %c0_i32_0, %c0_i32_1 : i32, i32, i32
  }
  func.func @transform_4(%arg0: i32) -> i32 {
    %c0_i32 = arith.constant 0 : i32
    %c0_i32_0 = arith.constant 0 : i32
    return %c0_i32 : i32
  }
  func.func @transform_5(%arg0: i32) -> (i32, i32) {
    %c0_i32 = arith.constant 0 : i32
    %c0_i32_0 = arith.constant 0 : i32
    return %arg0, %c0_i32 : i32, i32
  }
}

</mosaic_0001>

<llo_original>
// kernel: tpu_custom_call.1
$region0: #{tpu_custom_call.1}
  #allocation0 [shape = 'u32[]', space=smem, size = 0x4, offset = 0x4, fixed_abs, tag = 'smem constant byte address 0x4 - core index']
  #allocation1 [shape = 'u32[144,128]{1,0:T(1,128)}', space=vmem, size = 0x12000, scoped, tag = 'internal scratch']
  #allocation2 [shape = 'f32[1]{0:T(128)S(6)}', space=smem, size = 0x200, scoped, tag = 'scoped memory for tpu_custom_call.1']
  %s0 = inlined_call_operand.vmem [shape: f32[256,2], index: 0, kind: input, shape index: {}]
  %s1 = inlined_call_operand.vmem [shape: f32[2,128], index: 1, kind: input, shape index: {}]
  %s2 = inlined_call_operand.hbm [shape: bf16[10,128,128], index: 2, kind: input, shape index: {}]
  %s3 = inlined_call_operand.vmem [shape: f32[12,1,128], index: 3, kind: input, shape index: {}]
  %s4 = inlined_call_operand.<no memory space> [shape: f32[1], index: 4, kind: input, shape index: {}]
  %s5 = inlined_call_operand.vmem [shape: f32[256,1], index: 5, kind: output, shape index: {}]
  %s6 = sld [smem:[#allocation0]]
  $region57: #{tpu_custom_call.1} parent=0
    _
  %s8 = ssub.s32 1, %s6
  %s9 = scalar_select 0, %s8, %s6
  %10 = sst [smem:[#allocation2]] %s4
  $region1: #{tpu_custom_call.1} parent=0
    #allocation3 [shape = 'u8[327680]{0}', space=vmem, size = 0x50000, scoped, tag = 'input window, operand 2, single buffered']
    #allocation4 [shape = 's32[2]{0}', space=sflag, size = 0x8, scoped, tag = 'scoped memory for tpu_custom_call.1']
    %11 = vsyncpa [#allocation4], 0
    loop: start=0, step=1, limit=4
    $region2: #{tpu_custom_call.1} parent=1 // loop_pre_header
      _
    $region3: #{tpu_custom_call.1} parent=1 // loop_header
      %s13 = sphi 0, %s17
      %p14 = scmp.ge.s32.totalorder %s13, 4
      %s23 = sphi 0, %s25
      %s26 = sphi 0, %s23
      %s27 = sphi 0, %s26
      %s43 = sphi 0, %s27
      %s47 = sphi 0, %s47
      %s49 = sphi 0, %s47
      %s50 = sphi 0, %s49
      %s64 = sphi 0, %s50
      %s68 = sphi 0, %s68
      %s70 = sphi 0, %s68
      %s71 = sphi 0, %s70
      %s85 = sphi 0, %s71
      %s89 = sphi 0, %s89
      %s91 = sphi 0, %s89
      %s92 = sphi 0, %s91
      %s106 = sphi 0, %s92
      %s110 = sphi 0, %s110
      %s112 = sphi 0, %s110
      %s113 = sphi 0, %s112
      %s127 = sphi 0, %s113
      %s133 = sphi 0, %s135
      %s136 = sphi 0, %s133
      %s137 = sphi 0, %s136
      %s153 = sphi 0, %s137
    $region4: #{tpu_custom_call.1} parent=1 // loop_header_branch
      %16 = sbr.rel (%p14) target = $region8
    $region5: #{tpu_custom_call.1} parent=1 // loop_body
      %s18 = ssub.s32 %s13, 1
      %s19 = ssub.s32 %s13, 2
      %s20 = sadd.s32 %s13, 1
      %s21 = ssub.s32 %s13, %s20
      %p22 = scmp.eq.s32.totalorder %s21, 0
      %s24 = sadd.s32 %s23, 1
      %s25 = scalar_select %p22, %s23, %s24
      %p28 = pneg %p22
      %p29 = scmp.eq.s32.totalorder %s13, 1
      %p30 = por %p28, %p29
      %p31 = scmp.ne.s32.totalorder %s23, %s26
      %p32 = scmp.eq.s32.totalorder %s13, 0
      %p33 = por %p31, %p32
      %p34 = scmp.ne.s32.totalorder %s23, %s26
      %p35 = scmp.eq.s32.totalorder %s18, 1
      %p36 = por %p34, %p35
      %p37 = scmp.ne.s32.totalorder %s26, %s27
      %p38 = scmp.eq.s32.totalorder %s18, 0
      %p39 = por %p37, %p38
      %p40 = scmp.ne.s32.totalorder %s26, %s27
      %p41 = scmp.eq.s32.totalorder %s19, 1
      %p42 = por %p40, %p41
      %p44 = scmp.ne.s32.totalorder %s27, %s43
      %p45 = scmp.eq.s32.totalorder %s19, 0
      %p46 = por %p44, %p45
      %s48 = sadd.s32 %s47, 1
      %p51 = scmp.eq.s32.totalorder %s13, 1
      %p52 = scmp.ne.s32.totalorder %s47, %s49
      %p53 = scmp.eq.s32.totalorder %s13, 0
      %p54 = por %p52, %p53
      %p55 = scmp.ne.s32.totalorder %s47, %s49
      %p56 = scmp.eq.s32.totalorder %s18, 1
      %p57 = por %p55, %p56
      %p58 = scmp.ne.s32.totalorder %s49, %s50
      %p59 = scmp.eq.s32.totalorder %s18, 0
      %p60 = por %p58, %p59
      %p61 = scmp.ne.s32.totalorder %s49, %s50
      %p62 = scmp.eq.s32.totalorder %s19, 1
      %p63 = por %p61, %p62
      %p65 = scmp.ne.s32.totalorder %s50, %s64
      %p66 = scmp.eq.s32.totalorder %s19, 0
      %p67 = por %p65, %p66
      %s69 = sadd.s32 %s68, 1
      %p72 = scmp.eq.s32.totalorder %s13, 1
      %p73 = scmp.ne.s32.totalorder %s68, %s70
      %p74 = scmp.eq.s32.totalorder %s13, 0
      %p75 = por %p73, %p74
      %p76 = scmp.ne.s32.totalorder %s68, %s70
      %p77 = scmp.eq.s32.totalorder %s18, 1
      %p78 = por %p76, %p77
      %p79 = scmp.ne.s32.totalorder %s70, %s71
      %p80 = scmp.eq.s32.totalorder %s18, 0
      %p81 = por %p79, %p80
      %p82 = scmp.ne.s32.totalorder %s70, %s71
      %p83 = scmp.eq.s32.totalorder %s19, 1
      %p84 = por %p82, %p83
      %p86 = scmp.ne.s32.totalorder %s71, %s85
      %p87 = scmp.eq.s32.totalorder %s19, 0
      %p88 = por %p86, %p87
      %s90 = sadd.s32 %s89, 1
      %p93 = scmp.eq.s32.totalorder %s13, 1
      %p94 = scmp.ne.s32.totalorder %s89, %s91
      %p95 = scmp.eq.s32.totalorder %s13, 0
      %p96 = por %p94, %p95
      %p97 = scmp.ne.s32.totalorder %s89, %s91
      %p98 = scmp.eq.s32.totalorder %s18, 1
      %p99 = por %p97, %p98
      %p100 = scmp.ne.s32.totalorder %s91, %s92
      %p101 = scmp.eq.s32.totalorder %s18, 0
      %p102 = por %p100, %p101
      %p103 = scmp.ne.s32.totalorder %s91, %s92
      %p104 = scmp.eq.s32.totalorder %s19, 1
      %p105 = por %p103, %p104
      %p107 = scmp.ne.s32.totalorder %s92, %s106
      %p108 = scmp.eq.s32.totalorder %s19, 0
      %p109 = por %p107, %p108
      %s111 = sadd.s32 %s110, 1
      %p114 = scmp.eq.s32.totalorder %s13, 1
      %p115 = scmp.ne.s32.totalorder %s110, %s112
      %p116 = scmp.eq.s32.totalorder %s13, 0
      %p117 = por %p115, %p116
      %p118 = scmp.ne.s32.totalorder %s110, %s112
      %p119 = scmp.eq.s32.totalorder %s18, 1
      %p120 = por %p118, %p119
      %p121 = scmp.ne.s32.totalorder %s112, %s113
      %p122 = scmp.eq.s32.totalorder %s18, 0
      %p123 = por %p121, %p122
      %p124 = scmp.ne.s32.totalorder %s112, %s113
      %p125 = scmp.eq.s32.totalorder %s19, 1
      %p126 = por %p124, %p125
      %p128 = scmp.ne.s32.totalorder %s113, %s127
      %p129 = scmp.eq.s32.totalorder %s19, 0
      %p130 = por %p128, %p129
      %s131 = ssub.s32 %s13, %s20
      %p132 = scmp.eq.s32.totalorder %s131, 0
      %s134 = sadd.s32 %s133, 1
      %s135 = scalar_select %p132, %s133, %s134
      %p138 = pneg %p132
      %p139 = scmp.eq.s32.totalorder %s13, 1
      %p140 = por %p138, %p139
      %p141 = scmp.ne.s32.totalorder %s133, %s136
      %p142 = scmp.eq.s32.totalorder %s13, 0
      %p143 = por %p141, %p142
      %p144 = scmp.ne.s32.totalorder %s133, %s136
      %p145 = scmp.eq.s32.totalorder %s18, 1
      %p146 = por %p144, %p145
      %p147 = scmp.ne.s32.totalorder %s136, %s137
      %p148 = scmp.eq.s32.totalorder %s18, 0
      %p149 = por %p147, %p148
      %p150 = scmp.ne.s32.totalorder %s136, %s137
      %p151 = scmp.eq.s32.totalorder %s19, 1
      %p152 = por %p150, %p151
      %p154 = scmp.ne.s32.totalorder %s137, %s153
      %p155 = scmp.eq.s32.totalorder %s19, 0
      %p156 = por %p154, %p155
      %p157 = scmp.le.s32.totalorder 1, %s13
      %p158 = scmp.lt.s32.totalorder %s13, 3
      %p159 = pnand %p157, %p158
      %p160 = pneg %p159
      // Predicated region
      $region9: #{tpu_custom_call.1} parent=5 // pred_check
        _
      $region10: #{tpu_custom_call.1} parent=5 // pred_check_branch
        %162 = sbr.rel (%p159) target = $region12
      $region11: #{tpu_custom_call.1} parent=5 // pred_region
        %s163 = ssub.s32 %s13, 1
        // Predicated region
        $region13: #{tpu_custom_call.1} parent=11 // pred_check
          %p164 = pneg %p60
        $region14: #{tpu_custom_call.1} parent=11 // pred_check_branch
          %166 = sbr.rel (%p164) target = $region16
        $region15: #{tpu_custom_call.1} parent=11 // pred_region
          _
        $region16: #{tpu_custom_call.1} parent=11 // pred_fallthru
          _
        // Predicated region
        $region17: #{tpu_custom_call.1} parent=11 // pred_check
          %p167 = pneg %p81
        $region18: #{tpu_custom_call.1} parent=11 // pred_check_branch
          %169 = sbr.rel (%p167) target = $region20
        $region19: #{tpu_custom_call.1} parent=11 // pred_region
          %s171 = ssub.s32 10240, 10240
          %172 = vsyncadd [#allocation4], %s171
          %s173 = sshll.u32 [#allocation3], 4
          %s174 = int_to_ptr.vmem [resolvable:$true] %s173
          %179 = dma.hbm_to_vmem [thread:$0]  %s2, 10240, %s174, [#allocation4], 64, 64, 4
        $region20: #{tpu_custom_call.1} parent=11 // pred_fallthru
          _
        // Predicated region
        $region21: #{tpu_custom_call.1} parent=11 // pred_check
          %p180 = pneg %p102
        $region22: #{tpu_custom_call.1} parent=11 // pred_check_branch
          %182 = sbr.rel (%p180) target = $region24
        $region23: #{tpu_custom_call.1} parent=11 // pred_region
          _
        $region24: #{tpu_custom_call.1} parent=11 // pred_fallthru
          _
        // Predicated region
        $region25: #{tpu_custom_call.1} parent=11 // pred_check
          %p183 = pneg %p123
        $region26: #{tpu_custom_call.1} parent=11 // pred_check_branch
          %185 = sbr.rel (%p183) target = $region28
        $region27: #{tpu_custom_call.1} parent=11 // pred_region
          _
        $region28: #{tpu_custom_call.1} parent=11 // pred_fallthru
          _
      $region12: #{tpu_custom_call.1} parent=5 // pred_fallthru
        _
      %p186 = scmp.lt.s32.totalorder %s13, 2
      // Predicated region
      $region29: #{tpu_custom_call.1} parent=5 // pred_check
        %p187 = pneg %p186
      $region30: #{tpu_custom_call.1} parent=5 // pred_check_branch
        %189 = sbr.rel (%p187) target = $region32
      $region31: #{tpu_custom_call.1} parent=5 // pred_region
        // Predicated region
        $region33: #{tpu_custom_call.1} parent=31 // pred_check
          %p190 = pneg %p33
        $region34: #{tpu_custom_call.1} parent=31 // pred_check_branch
          %192 = sbr.rel (%p190) target = $region36
        $region35: #{tpu_custom_call.1} parent=31 // pred_region
          %s193 = smul.u32 16, %s13
          %p194 = scmp.lt.s32.totalorder %s193, 31
          %s195 = scalar_select %p194, %s193, 31
          %s196 = smul.addr %s195, 8
          %s197 = scalar_lea.vmem %s0, %s196
          %s198 = smul.u32 16, %s13
        $region36: #{tpu_custom_call.1} parent=31 // pred_fallthru
          _
      $region32: #{tpu_custom_call.1} parent=5 // pred_fallthru
        _
      %p199 = scmp.le.s32.totalorder 1, %s13
      %p200 = scmp.lt.s32.totalorder %s13, 3
      %p201 = pnand %p199, %p200
      %p202 = pneg %p201
      // Predicated region
      $region37: #{tpu_custom_call.1} parent=5 // pred_check
        _
      $region38: #{tpu_custom_call.1} parent=5 // pred_check_branch
        %204 = sbr.rel (%p201) target = $region40
      $region39: #{tpu_custom_call.1} parent=5 // pred_region
        %s205 = ssub.s32 %s13, 1
        // Predicated region
        $region41: #{tpu_custom_call.1} parent=39 // pred_check
          %p206 = pneg %p81
        $region42: #{tpu_custom_call.1} parent=39 // pred_check_branch
          %208 = sbr.rel (%p206) target = $region44
        $region43: #{tpu_custom_call.1} parent=39 // pred_region
          %209 = dma.done [#allocation4], 10240
        $region44: #{tpu_custom_call.1} parent=39 // pred_fallthru
          _
        %s210 = smul.u32 16, %s18
        %p211 = scmp.lt.s32.totalorder %s210, 31
        %s212 = scalar_select %p211, %s210, 31
        %s213 = smul.addr %s212, 8
        %s214 = scalar_lea.vmem %s0, %s213
        %p215 = pneg %p39
        %p216 = pneg %p36
        %p217 = pneg %p60
        %p218 = pneg %p57
        %p219 = pneg %p81
        %p220 = pneg %p78
        %p221 = pneg %p102
        %p222 = pneg %p99
        %p223 = pneg %p123
        %p224 = pneg %p120
        %p225 = pneg %p149
        %p226 = pneg %p146
        %s227 = smul.u32 16, %s18
        %p228 = scmp.lt.s32.totalorder %s227, 31
        %s229 = scalar_select %p228, %s227, 31
        %s230 = smul.addr %s229, 8
        %s231 = scalar_lea.vmem %s5, %s230
        %s232 = smul.u32 16, %s18
        %p233 = scmp.lt.s32.totalorder %s232, 31
        %s234 = scalar_select %p233, %s232, 31
        %s235 = smul.addr %s234, 8
        %s236 = scalar_lea.vmem %s0, %s235
        %s237 = smul.u32 16, %s18
        %s238 = smul.u32 16, %s18
        %p239 = scmp.lt.s32.totalorder %s238, 31
        %s240 = scalar_select %p239, %s238, 31
        %s241 = smul.addr %s240, 8
        %s242 = scalar_lea.vmem %s5, %s241
        %s243 = smul.u32 16, %s18
        %v245 = vld [vmem:[%s236] sm:$0xff]
        %v246 = vld [vmem:[%s236 + $0x8] sm:$0xff]
        %v247 = vld [vmem:[%s236 + $0x10] sm:$0xff]
        %v248 = vld [vmem:[%s236 + $0x18] sm:$0xff]
        %v249 = vld [vmem:[%s236 + $0x20] sm:$0xff]
        %v250 = vld [vmem:[%s236 + $0x28] sm:$0xff]
        %v251 = vld [vmem:[%s236 + $0x30] sm:$0xff]
        %v252 = vld [vmem:[%s236 + $0x38] sm:$0xff]
        %v253 = vld [vmem:[%s236 + $0x40] sm:$0xff]
        %v254 = vld [vmem:[%s236 + $0x48] sm:$0xff]
        %v255 = vld [vmem:[%s236 + $0x50] sm:$0xff]
        %v256 = vld [vmem:[%s236 + $0x58] sm:$0xff]
        %v257 = vld [vmem:[%s236 + $0x60] sm:$0xff]
        %v258 = vld [vmem:[%s236 + $0x68] sm:$0xff]
        %v259 = vld [vmem:[%s236 + $0x70] sm:$0xff]
        %v260 = vld [vmem:[%s236 + $0x78] sm:$0xff]
        %v261 = vld [vmem:[%s3] sm:$0x1]
        %v262 = vld [vmem:[%s1] sm:$0x1]
        %264 = vset.pattern.permute.xlu0 0
        %265 = vperm.xlu0 %264, %v245
        %v266 = vpop.permute.xlu0 %265
        %269 = vset.pattern.permute.xlu0 0
        %270 = vperm.xlu0 %269, %v246
        %v271 = vpop.permute.xlu0 %270
        %274 = vset.pattern.permute.xlu0 0
        %275 = vperm.xlu0 %274, %v247
        %v276 = vpop.permute.xlu0 %275
        %279 = vset.pattern.permute.xlu0 0
        %280 = vperm.xlu0 %279, %v248
        %v281 = vpop.permute.xlu0 %280
        %284 = vset.pattern.permute.xlu0 0
        %285 = vperm.xlu0 %284, %v249
        %v286 = vpop.permute.xlu0 %285
        %289 = vset.pattern.permute.xlu0 0
        %290 = vperm.xlu0 %289, %v250
        %v291 = vpop.permute.xlu0 %290
        %294 = vset.pattern.permute.xlu0 0
        %295 = vperm.xlu0 %294, %v251
        %v296 = vpop.permute.xlu0 %295
        %299 = vset.pattern.permute.xlu0 0
        %300 = vperm.xlu0 %299, %v252
        %v301 = vpop.permute.xlu0 %300
        %304 = vset.pattern.permute.xlu0 0
        %305 = vperm.xlu0 %304, %v253
        %v306 = vpop.permute.xlu0 %305
        %309 = vset.pattern.permute.xlu0 0
        %310 = vperm.xlu0 %309, %v254
        %v311 = vpop.permute.xlu0 %310
        %314 = vset.pattern.permute.xlu0 0
        %315 = vperm.xlu0 %314, %v255
        %v316 = vpop.permute.xlu0 %315
        %319 = vset.pattern.permute.xlu0 0
        %320 = vperm.xlu0 %319, %v256
        %v321 = vpop.permute.xlu0 %320
        %324 = vset.pattern.permute.xlu0 0
        %325 = vperm.xlu0 %324, %v257
        %v326 = vpop.permute.xlu0 %325
        %329 = vset.pattern.permute.xlu0 0
        %330 = vperm.xlu0 %329, %v258
        %v331 = vpop.permute.xlu0 %330
        %334 = vset.pattern.permute.xlu0 0
        %335 = vperm.xlu0 %334, %v259
        %v336 = vpop.permute.xlu0 %335
        %339 = vset.pattern.permute.xlu0 0
        %340 = vperm.xlu0 %339, %v260
        %v341 = vpop.permute.xlu0 %340
        %v343 = vlaneseq
        %v344 = vshrl.u32 %v343, 7
        %v345 = vsub.s32 0, %v344
        %v346 = vrot.slane %v262, %v345
        %v347 = vmul.f32 %v266, %v346
        %v348 = vmul.f32 %v271, %v346
        %v349 = vmul.f32 %v276, %v346
        %v350 = vmul.f32 %v281, %v346
        %v351 = vmul.f32 %v286, %v346
        %v352 = vmul.f32 %v291, %v346
        %v353 = vmul.f32 %v296, %v346
        %v354 = vmul.f32 %v301, %v346
        %v355 = vmul.f32 %v306, %v346
        %v356 = vmul.f32 %v311, %v346
        %v357 = vmul.f32 %v316, %v346
        %v358 = vmul.f32 %v321, %v346
        %v359 = vmul.f32 %v326, %v346
        %v360 = vmul.f32 %v331, %v346
        %v361 = vmul.f32 %v336, %v346
        %v362 = vmul.f32 %v341, %v346
        %v364 = vlaneseq
        %v365 = vshrl.u32 %v364, 7
        %v366 = vsub.s32 0, %v365
        %v367 = vrot.slane %v261, %v366
        %v369 = vadd.f32 %v367, %v347
        %v370 = vadd.f32 %v367, %v348
        %v371 = vadd.f32 %v367, %v349
        %v372 = vadd.f32 %v367, %v350
        %v373 = vadd.f32 %v367, %v351
        %v374 = vadd.f32 %v367, %v352
        %v375 = vadd.f32 %v367, %v353
        %v376 = vadd.f32 %v367, %v354
        %v377 = vadd.f32 %v367, %v355
        %v378 = vadd.f32 %v367, %v356
        %v379 = vadd.f32 %v367, %v357
        %v380 = vadd.f32 %v367, %v358
        %v381 = vadd.f32 %v367, %v359
        %v382 = vadd.f32 %v367, %v360
        %v383 = vadd.f32 %v367, %v361
        %v384 = vadd.f32 %v367, %v362
        %v385 = vld [vmem:[%s1 + $0x1] sm:$0x1]
        %386 = vset.pattern.permute.xlu0 1
        %387 = vperm.xlu0 %386, %v245
        %v388 = vpop.permute.xlu0 %387
        %390 = vset.pattern.permute.xlu0 1
        %391 = vperm.xlu0 %390, %v246
        %v392 = vpop.permute.xlu0 %391
        %394 = vset.pattern.permute.xlu0 1
        %395 = vperm.xlu0 %394, %v247
        %v396 = vpop.permute.xlu0 %395
        %398 = vset.pattern.permute.xlu0 1
        %399 = vperm.xlu0 %398, %v248
        %v400 = vpop.permute.xlu0 %399
        %402 = vset.pattern.permute.xlu0 1
        %403 = vperm.xlu0 %402, %v249
        %v404 = vpop.permute.xlu0 %403
        %406 = vset.pattern.permute.xlu0 1
        %407 = vperm.xlu0 %406, %v250
        %v408 = vpop.permute.xlu0 %407
        %410 = vset.pattern.permute.xlu0 1
        %411 = vperm.xlu0 %410, %v251
        %v412 = vpop.permute.xlu0 %411
        %414 = vset.pattern.permute.xlu0 1
        %415 = vperm.xlu0 %414, %v252
        %v416 = vpop.permute.xlu0 %415
        %418 = vset.pattern.permute.xlu0 1
        %419 = vperm.xlu0 %418, %v253
        %v420 = vpop.permute.xlu0 %419
        %422 = vset.pattern.permute.xlu0 1
        %423 = vperm.xlu0 %422, %v254
        %v424 = vpop.permute.xlu0 %423
        %426 = vset.pattern.permute.xlu0 1
        %427 = vperm.xlu0 %426, %v255
        %v428 = vpop.permute.xlu0 %427
        %430 = vset.pattern.permute.xlu0 1
        %431 = vperm.xlu0 %430, %v256
        %v432 = vpop.permute.xlu0 %431
        %434 = vset.pattern.permute.xlu0 1
        %435 = vperm.xlu0 %434, %v257
        %v436 = vpop.permute.xlu0 %435
        %438 = vset.pattern.permute.xlu0 1
        %439 = vperm.xlu0 %438, %v258
        %v440 = vpop.permute.xlu0 %439
        %442 = vset.pattern.permute.xlu0 1
        %443 = vperm.xlu0 %442, %v259
        %v444 = vpop.permute.xlu0 %443
        %446 = vset.pattern.permute.xlu0 1
        %447 = vperm.xlu0 %446, %v260
        %v448 = vpop.permute.xlu0 %447
        %v450 = vlaneseq
        %v451 = vshrl.u32 %v450, 7
        %v452 = vsub.s32 0, %v451
        %v453 = vrot.slane %v385, %v452
        %v454 = vmul.f32 %v388, %v453
        %v455 = vmul.f32 %v392, %v453
        %v456 = vmul.f32 %v396, %v453
        %v457 = vmul.f32 %v400, %v453
        %v458 = vmul.f32 %v404, %v453
        %v459 = vmul.f32 %v408, %v453
        %v460 = vmul.f32 %v412, %v453
        %v461 = vmul.f32 %v416, %v453
        %v462 = vmul.f32 %v420, %v453
        %v463 = vmul.f32 %v424, %v453
        %v464 = vmul.f32 %v428, %v453
        %v465 = vmul.f32 %v432, %v453
        %v466 = vmul.f32 %v436, %v453
        %v467 = vmul.f32 %v440, %v453
        %v468 = vmul.f32 %v444, %v453
        %v469 = vmul.f32 %v448, %v453
        %v470 = vadd.f32 %v369, %v454
        %v471 = vadd.f32 %v370, %v455
        %v472 = vadd.f32 %v371, %v456
        %v473 = vadd.f32 %v372, %v457
        %v474 = vadd.f32 %v373, %v458
        %v475 = vadd.f32 %v374, %v459
        %v476 = vadd.f32 %v375, %v460
        %v477 = vadd.f32 %v376, %v461
        %v478 = vadd.f32 %v377, %v462
        %v479 = vadd.f32 %v378, %v463
        %v480 = vadd.f32 %v379, %v464
        %v481 = vadd.f32 %v380, %v465
        %v482 = vadd.f32 %v381, %v466
        %v483 = vadd.f32 %v382, %v467
        %v484 = vadd.f32 %v383, %v468
        %v485 = vadd.f32 %v384, %v469
        %v486 = vpack.c.bf16 %v471, %v470
        %v487 = vpack.c.bf16 %v473, %v472
        %v488 = vpack.c.bf16 %v475, %v474
        %v489 = vpack.c.bf16 %v477, %v476
        %v490 = vpack.c.bf16 %v479, %v478
        %v491 = vpack.c.bf16 %v481, %v480
        %v492 = vpack.c.bf16 %v483, %v482
        %v493 = vpack.c.bf16 %v485, %v484
        %v494 = vld [vmem:[#allocation3] sm:$0xf]
        %v495 = vld [vmem:[#allocation3 + $0x4] sm:$0xf]
        %v496 = vld [vmem:[#allocation3 + $0x8] sm:$0xf]
        %v497 = vld [vmem:[#allocation3 + $0xc] sm:$0xf]
        %v498 = vld [vmem:[#allocation3 + $0x10] sm:$0xf]
        %v499 = vld [vmem:[#allocation3 + $0x14] sm:$0xf]
        %v500 = vld [vmem:[#allocation3 + $0x18] sm:$0xf]
        %v501 = vld [vmem:[#allocation3 + $0x1c] sm:$0xf]
        %v502 = vld [vmem:[#allocation3 + $0x20] sm:$0xf]
        %v503 = vld [vmem:[#allocation3 + $0x24] sm:$0xf]
        %v504 = vld [vmem:[#allocation3 + $0x28] sm:$0xf]
        %v505 = vld [vmem:[#allocation3 + $0x2c] sm:$0xf]
        %v506 = vld [vmem:[#allocation3 + $0x30] sm:$0xf]
        %v507 = vld [vmem:[#allocation3 + $0x34] sm:$0xf]
        %v508 = vld [vmem:[#allocation3 + $0x38] sm:$0xf]
        %v509 = vld [vmem:[#allocation3 + $0x3c] sm:$0xf]
        %s510 = scalar_lea.vmem %s3, 1
        %v511 = vld [vmem:[%s510] sm:$0x1]
        %v513 = vlaneseq
        %v514 = vshrl.u32 %v513, 7
        %v515 = vsub.s32 0, %v514
        %v516 = vrot.slane %v511, %v515
        %v534 = vunpack.c.l.b16 %v494
        %v535 = vunpack.c.l.b16 %v495
        %v536 = vunpack.c.l.b16 %v496
        %v537 = vunpack.c.l.b16 %v497
        %v538 = vunpack.c.l.b16 %v498
        %v539 = vunpack.c.l.b16 %v499
        %v540 = vunpack.c.l.b16 %v500
        %v541 = vunpack.c.l.b16 %v501
        %v542 = vunpack.c.l.b16 %v502
        %v543 = vunpack.c.l.b16 %v503
        %v544 = vunpack.c.l.b16 %v504
        %v545 = vunpack.c.l.b16 %v505
        %v546 = vunpack.c.l.b16 %v506
        %v547 = vunpack.c.l.b16 %v507
        %v548 = vunpack.c.l.b16 %v508
        %v549 = vunpack.c.l.b16 %v509
        %v550 = vpack.c.b16 %v535, %v534
        %v551 = vpack.c.b16 %v537, %v536
        %v552 = vpack.c.b16 %v539, %v538
        %v553 = vpack.c.b16 %v541, %v540
        %v554 = vpack.c.b16 %v543, %v542
        %v555 = vpack.c.b16 %v545, %v544
        %v556 = vpack.c.b16 %v547, %v546
        %v557 = vpack.c.b16 %v549, %v548
        %566 = vmatprep.subr.bf16.mxu0 0
        %567 = vmatpush1.bf16.msra.mxu0 %v550
        %568 = vmatprep.subr.bf16.mxu0 0
        %569 = vmatpush1.bf16.msra.mxu0 %v551
        %570 = vmatprep.subr.bf16.mxu0 0
        %571 = vmatpush1.bf16.msra.mxu0 %v552
        %572 = vmatprep.subr.bf16.mxu0 0
        %573 = vmatpush1.bf16.msra.mxu0 %v553
        %574 = vmatprep.subr.bf16.mxu0 0
        %575 = vmatpush1.bf16.msra.mxu0 %v554
        %576 = vmatprep.subr.bf16.mxu0 0
        %577 = vmatpush1.bf16.msra.mxu0 %v555
        %578 = vmatprep.subr.bf16.mxu0 0
        %579 = vmatpush1.bf16.msra.mxu0 %v556
        %580 = vmatprep.subr.bf16.mxu0 0
        %581 = vmatpush1.bf16.msra.mxu0 %v557
        %582 = vmatprep.subr.bf16.mxu0 0
        %583 = vmatpush1.bf16.msra.mxu0 0
        %584 = vmatprep.subr.bf16.mxu0 0
        %585 = vmatpush1.bf16.msra.mxu0 0
        %586 = vmatprep.subr.bf16.mxu0 0
        %587 = vmatpush1.bf16.msra.mxu0 0
        %588 = vmatprep.subr.bf16.mxu0 0
        %589 = vmatpush1.bf16.msra.mxu0 0
        %590 = vmatprep.subr.bf16.mxu0 0
        %591 = vmatpush1.bf16.msra.mxu0 0
        %592 = vmatprep.subr.bf16.mxu0 0
        %593 = vmatpush1.bf16.msra.mxu0 0
        %594 = vmatprep.subr.bf16.mxu0 0
        %595 = vmatpush1.bf16.msra.mxu0 0
        %596 = vmatprep.subr.bf16.mxu0 0
        %597 = vmatpush1.bf16.msra.mxu0 0
        %598 = vmatprep.mubr.bf16.mxu0 0
        %599 = vmatmul.mubr.bf16.gmra.mrb[0].mxu0 %v486
        %v600 = vpop.f32.mrb[0].mxu0
        %v601 = vadd.f32 %v516, %v600
        %v602 = vpop.f32.mrb[0].mxu0
        %v603 = vpop.f32.mrb[0].mxu0
        %v604 = vadd.f32 %v516, %v603
        %v605 = vpop.f32.mrb[0].mxu0
        %606 = vmatprep.mubr.bf16.mxu0 0
        %607 = vmatmul.mubr.bf16.gmra.mrb[0].mxu0 %v487
        %v608 = vpop.f32.mrb[0].mxu0
        %v609 = vadd.f32 %v516, %v608
        %v610 = vpop.f32.mrb[0].mxu0
        %v611 = vpop.f32.mrb[0].mxu0
        %v612 = vadd.f32 %v516, %v611
        %v613 = vpop.f32.mrb[0].mxu0
        %614 = vmatprep.mubr.bf16.mxu0 0
        %615 = vmatmul.mubr.bf16.gmra.mrb[0].mxu0 %v488
        %v616 = vpop.f32.mrb[0].mxu0
        %v617 = vadd.f32 %v516, %v616
        %v618 = vpop.f32.mrb[0].mxu0
        %v619 = vpop.f32.mrb[0].mxu0
        %v620 = vadd.f32 %v516, %v619
        %v621 = vpop.f32.mrb[0].mxu0
        %622 = vmatprep.mubr.bf16.mxu0 0
        %623 = vmatmul.mubr.bf16.gmra.mrb[0].mxu0 %v489
        %v624 = vpop.f32.mrb[0].mxu0
        %v625 = vadd.f32 %v516, %v624
        %v626 = vpop.f32.mrb[0].mxu0
        %v627 = vpop.f32.mrb[0].mxu0
        %v628 = vadd.f32 %v516, %v627
        %v629 = vpop.f32.mrb[0].mxu0
        %630 = vmatprep.mubr.bf16.mxu0 0
        %631 = vmatmul.mubr.bf16.gmra.mrb[0].mxu0 %v490
        %v632 = vpop.f32.mrb[0].mxu0
        %v633 = vadd.f32 %v516, %v632
        %v634 = vpop.f32.mrb[0].mxu0
        %v635 = vpop.f32.mrb[0].mxu0
        %v636 = vadd.f32 %v516, %v635
        %v637 = vpop.f32.mrb[0].mxu0
        %638 = vmatprep.mubr.bf16.mxu0 0
        %639 = vmatmul.mubr.bf16.gmra.mrb[0].mxu0 %v491
        %v640 = vpop.f32.mrb[0].mxu0
        %v641 = vadd.f32 %v516, %v640
        %v642 = vpop.f32.mrb[0].mxu0
        %v643 = vpop.f32.mrb[0].mxu0
        %v644 = vadd.f32 %v516, %v643
        %v645 = vpop.f32.mrb[0].mxu0
        %646 = vmatprep.mubr.bf16.mxu0 0
        %647 = vmatmul.mubr.bf16.gmra.mrb[0].mxu0 %v492
        %v648 = vpop.f32.mrb[0].mxu0
        %v649 = vadd.f32 %v516, %v648
        %v650 = vpop.f32.mrb[0].mxu0
        %v651 = vpop.f32.mrb[0].mxu0
        %v652 = vadd.f32 %v516, %v651
        %v653 = vpop.f32.mrb[0].mxu0
        %654 = vmatprep.mubr.bf16.mxu0 0
        %655 = vmatmul.mubr.bf16.gmra.mrb[0].mxu0 %v493
        %v656 = vpop.f32.mrb[0].mxu0
        %v657 = vadd.f32 %v516, %v656
        %v658 = vpop.f32.mrb[0].mxu0
        %v659 = vpop.f32.mrb[0].mxu0
        %v660 = vadd.f32 %v516, %v659
        %v661 = vpop.f32.mrb[0].mxu0
        %662 = vdwg.mxu0
        %v663 = vxor.u32 %v601, 2147483648
        %v664 = vxor.u32 %v604, 2147483648
        %v665 = vxor.u32 %v609, 2147483648
        %v666 = vxor.u32 %v612, 2147483648
        %v667 = vxor.u32 %v617, 2147483648
        %v668 = vxor.u32 %v620, 2147483648
        %v669 = vxor.u32 %v625, 2147483648
        %v670 = vxor.u32 %v628, 2147483648
        %v671 = vxor.u32 %v633, 2147483648
        %v672 = vxor.u32 %v636, 2147483648
        %v673 = vxor.u32 %v641, 2147483648
        %v674 = vxor.u32 %v644, 2147483648
        %v675 = vxor.u32 %v649, 2147483648
        %v676 = vxor.u32 %v652, 2147483648
        %v677 = vxor.u32 %v657, 2147483648
        %v678 = vxor.u32 %v660, 2147483648
        %v679 = vmul.f32 %v663, 1.442695
        %v680 = vpow.pop %v679
        %v681 = vmul.f32 %v664, 1.442695
        %v682 = vpow.pop %v681
        %v683 = vmul.f32 %v665, 1.442695
        %v684 = vpow.pop %v683
        %v685 = vmul.f32 %v666, 1.442695
        %v686 = vpow.pop %v685
        %v687 = vmul.f32 %v667, 1.442695
        %v688 = vpow.pop %v687
        %v689 = vmul.f32 %v668, 1.442695
        %v690 = vpow.pop %v689
        %v691 = vmul.f32 %v669, 1.442695
        %v692 = vpow.pop %v691
        %v693 = vmul.f32 %v670, 1.442695
        %v694 = vpow.pop %v693
        %v695 = vmul.f32 %v671, 1.442695
        %v696 = vpow.pop %v695
        %v697 = vmul.f32 %v672, 1.442695
        %v698 = vpow.pop %v697
        %v699 = vmul.f32 %v673, 1.442695
        %v700 = vpow.pop %v699
        %v701 = vmul.f32 %v674, 1.442695
        %v702 = vpow.pop %v701
        %v703 = vmul.f32 %v675, 1.442695
        %v704 = vpow.pop %v703
        %v705 = vmul.f32 %v676, 1.442695
        %v706 = vpow.pop %v705
        %v707 = vmul.f32 %v677, 1.442695
        %v708 = vpow.pop %v707
        %v709 = vmul.f32 %v678, 1.442695
        %v710 = vpow.pop %v709
        %v711 = vadd.f32 %v680, 1.0
        %v712 = vadd.f32 %v682, 1.0
        %v713 = vadd.f32 %v684, 1.0
        %v714 = vadd.f32 %v686, 1.0
        %v715 = vadd.f32 %v688, 1.0
        %v716 = vadd.f32 %v690, 1.0
        %v717 = vadd.f32 %v692, 1.0
        %v718 = vadd.f32 %v694, 1.0
        %v719 = vadd.f32 %v696, 1.0
        %v720 = vadd.f32 %v698, 1.0
        %v721 = vadd.f32 %v700, 1.0
        %v722 = vadd.f32 %v702, 1.0
        %v723 = vadd.f32 %v704, 1.0
        %v724 = vadd.f32 %v706, 1.0
        %v725 = vadd.f32 %v708, 1.0
        %v726 = vadd.f32 %v710, 1.0
        %v727 = vrcp.pop %v711
        %v728 = vmul.f32 1.0, %v727
        %v729 = vrcp.pop %v712
        %v730 = vmul.f32 1.0, %v729
        %v731 = vrcp.pop %v713
        %v732 = vmul.f32 1.0, %v731
        %v733 = vrcp.pop %v714
        %v734 = vmul.f32 1.0, %v733
        %v735 = vrcp.pop %v715
        %v736 = vmul.f32 1.0, %v735
        %v737 = vrcp.pop %v716
        %v738 = vmul.f32 1.0, %v737
        %v739 = vrcp.pop %v717
        %v740 = vmul.f32 1.0, %v739
        %v741 = vrcp.pop %v718
        %v742 = vmul.f32 1.0, %v741
        %v743 = vrcp.pop %v719
        %v744 = vmul.f32 1.0, %v743
        %v745 = vrcp.pop %v720
        %v746 = vmul.f32 1.0, %v745
        %v747 = vrcp.pop %v721
        %v748 = vmul.f32 1.0, %v747
        %v749 = vrcp.pop %v722
        %v750 = vmul.f32 1.0, %v749
        %v751 = vrcp.pop %v723
        %v752 = vmul.f32 1.0, %v751
        %v753 = vrcp.pop %v724
        %v754 = vmul.f32 1.0, %v753
        %v755 = vrcp.pop %v725
        %v756 = vmul.f32 1.0, %v755
        %v757 = vrcp.pop %v726
        %v758 = vmul.f32 1.0, %v757
        %v759 = vmul.f32 %v601, %v728
        %v760 = vmul.f32 %v604, %v730
        %v761 = vmul.f32 %v609, %v732
        %v762 = vmul.f32 %v612, %v734
        %v763 = vmul.f32 %v617, %v736
        %v764 = vmul.f32 %v620, %v738
        %v765 = vmul.f32 %v625, %v740
        %v766 = vmul.f32 %v628, %v742
        %v767 = vmul.f32 %v633, %v744
        %v768 = vmul.f32 %v636, %v746
        %v769 = vmul.f32 %v641, %v748
        %v770 = vmul.f32 %v644, %v750
        %v771 = vmul.f32 %v649, %v752
        %v772 = vmul.f32 %v652, %v754
        %v773 = vmul.f32 %v657, %v756
        %v774 = vmul.f32 %v660, %v758
        %v775 = vpack.c.bf16 %v760, %v759
        %v776 = vpack.c.bf16 %v762, %v761
        %v777 = vpack.c.bf16 %v764, %v763
        %v778 = vpack.c.bf16 %v766, %v765
        %v779 = vpack.c.bf16 %v768, %v767
        %v780 = vpack.c.bf16 %v770, %v769
        %v781 = vpack.c.bf16 %v772, %v771
        %v782 = vpack.c.bf16 %v774, %v773
        %s783 = scalar_lea.vmem [#allocation3], 64
        %v784 = vld [vmem:[%s783] sm:$0xf]
        %v785 = vld [vmem:[%s783 + $0x4] sm:$0xf]
        %v786 = vld [vmem:[%s783 + $0x8] sm:$0xf]
        %v787 = vld [vmem:[%s783 + $0xc] sm:$0xf]
        %v788 = vld [vmem:[%s783 + $0x10] sm:$0xf]
        %v789 = vld [vmem:[%s783 + $0x14] sm:$0xf]
        %v790 = vld [vmem:[%s783 + $0x18] sm:$0xf]
        %v791 = vld [vmem:[%s783 + $0x1c] sm:$0xf]
        %v792 = vld [vmem:[%s783 + $0x20] sm:$0xf]
        %v793 = vld [vmem:[%s783 + $0x24] sm:$0xf]
        %v794 = vld [vmem:[%s783 + $0x28] sm:$0xf]
        %v795 = vld [vmem:[%s783 + $0x2c] sm:$0xf]
        %v796 = vld [vmem:[%s783 + $0x30] sm:$0xf]
        %v797 = vld [vmem:[%s783 + $0x34] sm:$0xf]
        %v798 = vld [vmem:[%s783 + $0x38] sm:$0xf]
        %v799 = vld [vmem:[%s783 + $0x3c] sm:$0xf]
        %s800 = scalar_lea.vmem %s3, 2
        %v801 = vld [vmem:[%s800] sm:$0x1]
        %v803 = vlaneseq
        %v804 = vshrl.u32 %v803, 7
        %v805 = vsub.s32 0, %v804
        %v806 = vrot.slane %v801, %v805
        %v824 = vunpack.c.l.b16 %v784
        %v825 = vunpack.c.l.b16 %v785
        %v826 = vunpack.c.l.b16 %v786
        %v827 = vunpack.c.l.b16 %v787
        %v828 = vunpack.c.l.b16 %v788
        %v829 = vunpack.c.l.b16 %v789
        %v830 = vunpack.c.l.b16 %v790
        %v831 = vunpack.c.l.b16 %v791
        %v832 = vunpack.c.l.b16 %v792
        %v833 = vunpack.c.l.b16 %v793
        %v834 = vunpack.c.l.b16 %v794
        %v835 = vunpack.c.l.b16 %v795
        %v836 = vunpack.c.l.b16 %v796
        %v837 = vunpack.c.l.b16 %v797
        %v838 = vunpack.c.l.b16 %v798
        %v839 = vunpack.c.l.b16 %v799
        %v840 = vpack.c.b16 %v825, %v824
        %v841 = vpack.c.b16 %v827, %v826
        %v842 = vpack.c.b16 %v829, %v828
        %v843 = vpack.c.b16 %v831, %v830
        %v844 = vpack.c.b16 %v833, %v832
        %v845 = vpack.c.b16 %v835, %v834
        %v846 = vpack.c.b16 %v837, %v836
        %v847 = vpack.c.b16 %v839, %v838
        %856 = vmatprep.subr.bf16.mxu0 0
        %857 = vmatpush1.bf16.msra.mxu0 %v840
        %858 = vmatprep.subr.bf16.mxu0 0
        %859 = vmatpush1.bf16.msra.mxu0 %v841
        %860 = vmatprep.subr.bf16.mxu0 0
        %861 = vmatpush1.bf16.msra.mxu0 %v842
        %862 = vmatprep.subr.bf16.mxu0 0
        %863 = vmatpush1.bf16.msra.mxu0 %v843
        %864 = vmatprep.subr.bf16.mxu0 0
        %865 = vmatpush1.bf16.msra.mxu0 %v844
        %866 = vmatprep.subr.bf16.mxu0 0
        %867 = vmatpush1.bf16.msra.mxu0 %v845
        %868 = vmatprep.subr.bf16.mxu0 0
        %869 = vmatpush1.bf16.msra.mxu0 %v846
        %870 = vmatprep.subr.bf16.mxu0 0
        %871 = vmatpush1.bf16.msra.mxu0 %v847
        %872 = vmatprep.subr.bf16.mxu0 0
        %873 = vmatpush1.bf16.msra.mxu0 0
        %874 = vmatprep.subr.bf16.mxu0 0
        %875 = vmatpush1.bf16.msra.mxu0 0
        %876 = vmatprep.subr.bf16.mxu0 0
        %877 = vmatpush1.bf16.msra.mxu0 0
        %878 = vmatprep.subr.bf16.mxu0 0
        %879 = vmatpush1.bf16.msra.mxu0 0
        %880 = vmatprep.subr.bf16.mxu0 0
        %881 = vmatpush1.bf16.msra.mxu0 0
        %882 = vmatprep.subr.bf16.mxu0 0
        %883 = vmatpush1.bf16.msra.mxu0 0
        %884 = vmatprep.subr.bf16.mxu0 0
        %885 = vmatpush1.bf16.msra.mxu0 0
        %886 = vmatprep.subr.bf16.mxu0 0
        %887 = vmatpush1.bf16.msra.mxu0 0
        %888 = vmatprep.mubr.bf16.mxu0 0
        %889 = vmatmul.mubr.bf16.gmra.mrb[0].mxu0 %v775
        %v890 = vpop.f32.mrb[0].mxu0
        %v891 = vadd.f32 %v806, %v890
        %v892 = vpop.f32.mrb[0].mxu0
        %v893 = vpop.f32.mrb[0].mxu0
        %v894 = vadd.f32 %v806, %v893
        %v895 = vpop.f32.mrb[0].mxu0
        %896 = vmatprep.mubr.bf16.mxu0 0
        %897 = vmatmul.mubr.bf16.gmra.mrb[0].mxu0 %v776
        %v898 = vpop.f32.mrb[0].mxu0
        %v899 = vadd.f32 %v806, %v898
        %v900 = vpop.f32.mrb[0].mxu0
        %v901 = vpop.f32.mrb[0].mxu0
        %v902 = vadd.f32 %v806, %v901
        %v903 = vpop.f32.mrb[0].mxu0
        %904 = vmatprep.mubr.bf16.mxu0 0
        %905 = vmatmul.mubr.bf16.gmra.mrb[0].mxu0 %v777
        %v906 = vpop.f32.mrb[0].mxu0
        %v907 = vadd.f32 %v806, %v906
        %v908 = vpop.f32.mrb[0].mxu0
        %v909 = vpop.f32.mrb[0].mxu0
        %v910 = vadd.f32 %v806, %v909
        %v911 = vpop.f32.mrb[0].mxu0
        %912 = vmatprep.mubr.bf16.mxu0 0
        %913 = vmatmul.mubr.bf16.gmra.mrb[0].mxu0 %v778
        %v914 = vpop.f32.mrb[0].mxu0
        %v915 = vadd.f32 %v806, %v914
        %v916 = vpop.f32.mrb[0].mxu0
        %v917 = vpop.f32.mrb[0].mxu0
        %v918 = vadd.f32 %v806, %v917
        %v919 = vpop.f32.mrb[0].mxu0
        %920 = vmatprep.mubr.bf16.mxu0 0
        %921 = vmatmul.mubr.bf16.gmra.mrb[0].mxu0 %v779
        %v922 = vpop.f32.mrb[0].mxu0
        %v923 = vadd.f32 %v806, %v922
        %v924 = vpop.f32.mrb[0].mxu0
        %v925 = vpop.f32.mrb[0].mxu0
        %v926 = vadd.f32 %v806, %v925
        %v927 = vpop.f32.mrb[0].mxu0
        %928 = vmatprep.mubr.bf16.mxu0 0
        %929 = vmatmul.mubr.bf16.gmra.mrb[0].mxu0 %v780
        %v930 = vpop.f32.mrb[0].mxu0
        %v931 = vadd.f32 %v806, %v930
        %v932 = vpop.f32.mrb[0].mxu0
        %v933 = vpop.f32.mrb[0].mxu0
        %v934 = vadd.f32 %v806, %v933
        %v935 = vpop.f32.mrb[0].mxu0
        %936 = vmatprep.mubr.bf16.mxu0 0
        %937 = vmatmul.mubr.bf16.gmra.mrb[0].mxu0 %v781
        %v938 = vpop.f32.mrb[0].mxu0
        %v939 = vadd.f32 %v806, %v938
        %v940 = vpop.f32.mrb[0].mxu0
        %v941 = vpop.f32.mrb[0].mxu0
        %v942 = vadd.f32 %v806, %v941
        %v943 = vpop.f32.mrb[0].mxu0
        %944 = vmatprep.mubr.bf16.mxu0 0
        %945 = vmatmul.mubr.bf16.gmra.mrb[0].mxu0 %v782
        %v946 = vpop.f32.mrb[0].mxu0
        %v947 = vadd.f32 %v806, %v946
        %v948 = vpop.f32.mrb[0].mxu0
        %v949 = vpop.f32.mrb[0].mxu0
        %v950 = vadd.f32 %v806, %v949
        %v951 = vpop.f32.mrb[0].mxu0
        %952 = vdwg.mxu0
        %v953 = vxor.u32 %v891, 2147483648
        %v954 = vxor.u32 %v894, 2147483648
        %v955 = vxor.u32 %v899, 2147483648
        %v956 = vxor.u32 %v902, 2147483648
        %v957 = vxor.u32 %v907, 2147483648
        %v958 = vxor.u32 %v910, 2147483648
        %v959 = vxor.u32 %v915, 2147483648
        %v960 = vxor.u32 %v918, 2147483648
        %v961 = vxor.u32 %v923, 2147483648
        %v962 = vxor.u32 %v926, 2147483648
        %v963 = vxor.u32 %v931, 2147483648
        %v964 = vxor.u32 %v934, 2147483648
        %v965 = vxor.u32 %v939, 2147483648
        %v966 = vxor.u32 %v942, 2147483648
        %v967 = vxor.u32 %v947, 2147483648
        %v968 = vxor.u32 %v950, 2147483648
        %v969 = vmul.f32 %v953, 1.442695
        %v970 = vpow.pop %v969
        %v971 = vmul.f32 %v954, 1.442695
        %v972 = vpow.pop %v971
        %v973 = vmul.f32 %v955, 1.442695
        %v974 = vpow.pop %v973
        %v975 = vmul.f32 %v956, 1.442695
        %v976 = vpow.pop %v975
        %v977 = vmul.f32 %v957, 1.442695
        %v978 = vpow.pop %v977
        %v979 = vmul.f32 %v958, 1.442695
        %v980 = vpow.pop %v979
        %v981 = vmul.f32 %v959, 1.442695
        %v982 = vpow.pop %v981
        %v983 = vmul.f32 %v960, 1.442695
        %v984 = vpow.pop %v983
        %v985 = vmul.f32 %v961, 1.442695
        %v986 = vpow.pop %v985
        %v987 = vmul.f32 %v962, 1.442695
        %v988 = vpow.pop %v987
        %v989 = vmul.f32 %v963, 1.442695
        %v990 = vpow.pop %v989
        %v991 = vmul.f32 %v964, 1.442695
        %v992 = vpow.pop %v991
        %v993 = vmul.f32 %v965, 1.442695
        %v994 = vpow.pop %v993
        %v995 = vmul.f32 %v966, 1.442695
        %v996 = vpow.pop %v995
        %v997 = vmul.f32 %v967, 1.442695
        %v998 = vpow.pop %v997
        %v999 = vmul.f32 %v968, 1.442695
        %v1000 = vpow.pop %v999
        %v1001 = vadd.f32 %v970, 1.0
        %v1002 = vadd.f32 %v972, 1.0
        %v1003 = vadd.f32 %v974, 1.0
        %v1004 = vadd.f32 %v976, 1.0
        %v1005 = vadd.f32 %v978, 1.0
        %v1006 = vadd.f32 %v980, 1.0
        %v1007 = vadd.f32 %v982, 1.0
        %v1008 = vadd.f32 %v984, 1.0
        %v1009 = vadd.f32 %v986, 1.0
        %v1010 = vadd.f32 %v988, 1.0
        %v1011 = vadd.f32 %v990, 1.0
        %v1012 = vadd.f32 %v992, 1.0
        %v1013 = vadd.f32 %v994, 1.0
        %v1014 = vadd.f32 %v996, 1.0
        %v1015 = vadd.f32 %v998, 1.0
        %v1016 = vadd.f32 %v1000, 1.0
        %v1017 = vrcp.pop %v1001
        %v1018 = vmul.f32 1.0, %v1017
        %v1019 = vrcp.pop %v1002
        %v1020 = vmul.f32 1.0, %v1019
        %v1021 = vrcp.pop %v1003
        %v1022 = vmul.f32 1.0, %v1021
        %v1023 = vrcp.pop %v1004
        %v1024 = vmul.f32 1.0, %v1023
        %v1025 = vrcp.pop %v1005
        %v1026 = vmul.f32 1.0, %v1025
        %v1027 = vrcp.pop %v1006
        %v1028 = vmul.f32 1.0, %v1027
        %v1029 = vrcp.pop %v1007
        %v1030 = vmul.f32 1.0, %v1029
        %v1031 = vrcp.pop %v1008
        %v1032 = vmul.f32 1.0, %v1031
        %v1033 = vrcp.pop %v1009
        %v1034 = vmul.f32 1.0, %v1033
        %v1035 = vrcp.pop %v1010
        %v1036 = vmul.f32 1.0, %v1035
        %v1037 = vrcp.pop %v1011
        %v1038 = vmul.f32 1.0, %v1037
        %v1039 = vrcp.pop %v1012
        %v1040 = vmul.f32 1.0, %v1039
        %v1041 = vrcp.pop %v1013
        %v1042 = vmul.f32 1.0, %v1041
        %v1043 = vrcp.pop %v1014
        %v1044 = vmul.f32 1.0, %v1043
        %v1045 = vrcp.pop %v1015
        %v1046 = vmul.f32 1.0, %v1045
        %v1047 = vrcp.pop %v1016
        %v1048 = vmul.f32 1.0, %v1047
        %v1049 = vmul.f32 %v891, %v1018
        %v1050 = vmul.f32 %v894, %v1020
        %v1051 = vmul.f32 %v899, %v1022
        %v1052 = vmul.f32 %v902, %v1024
        %v1053 = vmul.f32 %v907, %v1026
        %v1054 = vmul.f32 %v910, %v1028
        %v1055 = vmul.f32 %v915, %v1030
        %v1056 = vmul.f32 %v918, %v1032
        %v1057 = vmul.f32 %v923, %v1034
        %v1058 = vmul.f32 %v926, %v1036
        %v1059 = vmul.f32 %v931, %v1038
        %v1060 = vmul.f32 %v934, %v1040
        %v1061 = vmul.f32 %v939, %v1042
        %v1062 = vmul.f32 %v942, %v1044
        %v1063 = vmul.f32 %v947, %v1046
        %v1064 = vmul.f32 %v950, %v1048
        %v1065 = vpack.c.bf16 %v1050, %v1049
        %v1066 = vpack.c.bf16 %v1052, %v1051
        %v1067 = vpack.c.bf16 %v1054, %v1053
        %v1068 = vpack.c.bf16 %v1056, %v1055
        %v1069 = vpack.c.bf16 %v1058, %v1057
        %v1070 = vpack.c.bf16 %v1060, %v1059
        %v1071 = vpack.c.bf16 %v1062, %v1061
        %v1072 = vpack.c.bf16 %v1064, %v1063
        %s1073 = scalar_lea.vmem [#allocation3], 128
        %v1074 = vld [vmem:[%s1073] sm:$0xf]
        %v1075 = vld [vmem:[%s1073 + $0x4] sm:$0xf]
        %v1076 = vld [vmem:[%s1073 + $0x8] sm:$0xf]
        %v1077 = vld [vmem:[%s1073 + $0xc] sm:$0xf]
        %v1078 = vld [vmem:[%s1073 + $0x10] sm:$0xf]
        %v1079 = vld [vmem:[%s1073 + $0x14] sm:$0xf]
        %v1080 = vld [vmem:[%s1073 + $0x18] sm:$0xf]
        %v1081 = vld [vmem:[%s1073 + $0x1c] sm:$0xf]
        %v1082 = vld [vmem:[%s1073 + $0x20] sm:$0xf]
        %v1083 = vld [vmem:[%s1073 + $0x24] sm:$0xf]
        %v1084 = vld [vmem:[%s1073 + $0x28] sm:$0xf]
        %v1085 = vld [vmem:[%s1073 + $0x2c] sm:$0xf]
        %v1086 = vld [vmem:[%s1073 + $0x30] sm:$0xf]
        %v1087 = vld [vmem:[%s1073 + $0x34] sm:$0xf]
        %v1088 = vld [vmem:[%s1073 + $0x38] sm:$0xf]
        %v1089 = vld [vmem:[%s1073 + $0x3c] sm:$0xf]
        %s1090 = scalar_lea.vmem %s3, 3
        %v1091 = vld [vmem:[%s1090] sm:$0x1]
        %v1093 = vlaneseq
        %v1094 = vshrl.u32 %v1093, 7
        %v1095 = vsub.s32 0, %v1094
        %v1096 = vrot.slane %v1091, %v1095
        %v1114 = vunpack.c.l.b16 %v1074
        %v1115 = vunpack.c.l.b16 %v1075
        %v1116 = vunpack.c.l.b16 %v1076
        %v1117 = vunpack.c.l.b16 %v1077
        %v1118 = vunpack.c.l.b16 %v1078
        %v1119 = vunpack.c.l.b16 %v1079
        %v1120 = vunpack.c.l.b16 %v1080
        %v1121 = vunpack.c.l.b16 %v1081
        %v1122 = vunpack.c.l.b16 %v1082
        %v1123 = vunpack.c.l.b16 %v1083
        %v1124 = vunpack.c.l.b16 %v1084
        %v1125 = vunpack.c.l.b16 %v1085
        %v1126 = vunpack.c.l.b16 %v1086
        %v1127 = vunpack.c.l.b16 %v1087
        %v1128 = vunpack.c.l.b16 %v1088
        %v1129 = vunpack.c.l.b16 %v1089
        %v1130 = vpack.c.b16 %v1115, %v1114
        %v1131 = vpack.c.b16 %v1117, %v1116
        %v1132 = vpack.c.b16 %v1119, %v1118
        %v1133 = vpack.c.b16 %v1121, %v1120
        %v1134 = vpack.c.b16 %v1123, %v1122
        %v1135 = vpack.c.b16 %v1125, %v1124
        %v1136 = vpack.c.b16 %v1127, %v1126
        %v1137 = vpack.c.b16 %v1129, %v1128
        %1146 = vmatprep.subr.bf16.mxu0 0
        %1147 = vmatpush1.bf16.msra.mxu0 %v1130
        %1148 = vmatprep.subr.bf16.mxu0 0
        %1149 = vmatpush1.bf16.msra.mxu0 %v1131
        %1150 = vmatprep.subr.bf16.mxu0 0
        %1151 = vmatpush1.bf16.msra.mxu0 %v1132
        %1152 = vmatprep.subr.bf16.mxu0 0
        %1153 = vmatpush1.bf16.msra.mxu0 %v1133
        %1154 = vmatprep.subr.bf16.mxu0 0
        %1155 = vmatpush1.bf16.msra.mxu0 %v1134
        %1156 = vmatprep.subr.bf16.mxu0 0
        %1157 = vmatpush1.bf16.msra.mxu0 %v1135
        %1158 = vmatprep.subr.bf16.mxu0 0
        %1159 = vmatpush1.bf16.msra.mxu0 %v1136
        %1160 = vmatprep.subr.bf16.mxu0 0
        %1161 = vmatpush1.bf16.msra.mxu0 %v1137
        %1162 = vmatprep.subr.bf16.mxu0 0
        %1163 = vmatpush1.bf16.msra.mxu0 0
        %1164 = vmatprep.subr.bf16.mxu0 0
        %1165 = vmatpush1.bf16.msra.mxu0 0
        %1166 = vmatprep.subr.bf16.mxu0 0
        %1167 = vmatpush1.bf16.msra.mxu0 0
        %1168 = vmatprep.subr.bf16.mxu0 0
        %1169 = vmatpush1.bf16.msra.mxu0 0
        %1170 = vmatprep.subr.bf16.mxu0 0
        %1171 = vmatpush1.bf16.msra.mxu0 0
        %1172 = vmatprep.subr.bf16.mxu0 0
        %1173 = vmatpush1.bf16.msra.mxu0 0
        %1174 = vmatprep.subr.bf16.mxu0 0
        %1175 = vmatpush1.bf16.msra.mxu0 0
        %1176 = vmatprep.subr.bf16.mxu0 0
        %1177 = vmatpush1.bf16.msra.mxu0 0
        %1178 = vmatprep.mubr.bf16.mxu0 0
        %1179 = vmatmul.mubr.bf16.gmra.mrb[0].mxu0 %v1065
        %v1180 = vpop.f32.mrb[0].mxu0
        %v1181 = vadd.f32 %v1096, %v1180
        %v1182 = vpop.f32.mrb[0].mxu0
        %v1183 = vpop.f32.mrb[0].mxu0
        %v1184 = vadd.f32 %v1096, %v1183
        %v1185 = vpop.f32.mrb[0].mxu0
        %1186 = vmatprep.mubr.bf16.mxu0 0
        %1187 = vmatmul.mubr.bf16.gmra.mrb[0].mxu0 %v1066
        %v1188 = vpop.f32.mrb[0].mxu0
        %v1189 = vadd.f32 %v1096, %v1188
        %v1190 = vpop.f32.mrb[0].mxu0
        %v1191 = vpop.f32.mrb[0].mxu0
        %v1192 = vadd.f32 %v1096, %v1191
        %v1193 = vpop.f32.mrb[0].mxu0
        %1194 = vmatprep.mubr.bf16.mxu0 0
        %1195 = vmatmul.mubr.bf16.gmra.mrb[0].mxu0 %v1067
        %v1196 = vpop.f32.mrb[0].mxu0
        %v1197 = vadd.f32 %v1096, %v1196
        %v1198 = vpop.f32.mrb[0].mxu0
        %v1199 = vpop.f32.mrb[0].mxu0
        %v1200 = vadd.f32 %v1096, %v1199
        %v1201 = vpop.f32.mrb[0].mxu0
        %1202 = vmatprep.mubr.bf16.mxu0 0
        %1203 = vmatmul.mubr.bf16.gmra.mrb[0].mxu0 %v1068
        %v1204 = vpop.f32.mrb[0].mxu0
        %v1205 = vadd.f32 %v1096, %v1204
        %v1206 = vpop.f32.mrb[0].mxu0
        %v1207 = vpop.f32.mrb[0].mxu0
        %v1208 = vadd.f32 %v1096, %v1207
        %v1209 = vpop.f32.mrb[0].mxu0
        %1210 = vmatprep.mubr.bf16.mxu0 0
        %1211 = vmatmul.mubr.bf16.gmra.mrb[0].mxu0 %v1069
        %v1212 = vpop.f32.mrb[0].mxu0
        %v1213 = vadd.f32 %v1096, %v1212
        %v1214 = vpop.f32.mrb[0].mxu0
        %v1215 = vpop.f32.mrb[0].mxu0
        %v1216 = vadd.f32 %v1096, %v1215
        %v1217 = vpop.f32.mrb[0].mxu0
        %1218 = vmatprep.mubr.bf16.mxu0 0
        %1219 = vmatmul.mubr.bf16.gmra.mrb[0].mxu0 %v1070
        %v1220 = vpop.f32.mrb[0].mxu0
        %v1221 = vadd.f32 %v1096, %v1220
        %v1222 = vpop.f32.mrb[0].mxu0
        %v1223 = vpop.f32.mrb[0].mxu0
        %v1224 = vadd.f32 %v1096, %v1223
        %v1225 = vpop.f32.mrb[0].mxu0
        %1226 = vmatprep.mubr.bf16.mxu0 0
        %1227 = vmatmul.mubr.bf16.gmra.mrb[0].mxu0 %v1071
        %v1228 = vpop.f32.mrb[0].mxu0
        %v1229 = vadd.f32 %v1096, %v1228
        %v1230 = vpop.f32.mrb[0].mxu0
        %v1231 = vpop.f32.mrb[0].mxu0
        %v1232 = vadd.f32 %v1096, %v1231
        %v1233 = vpop.f32.mrb[0].mxu0
        %1234 = vmatprep.mubr.bf16.mxu0 0
        %1235 = vmatmul.mubr.bf16.gmra.mrb[0].mxu0 %v1072
        %v1236 = vpop.f32.mrb[0].mxu0
        %v1237 = vadd.f32 %v1096, %v1236
        %v1238 = vpop.f32.mrb[0].mxu0
        %v1239 = vpop.f32.mrb[0].mxu0
        %v1240 = vadd.f32 %v1096, %v1239
        %v1241 = vpop.f32.mrb[0].mxu0
        %1242 = vdwg.mxu0
        %v1243 = vxor.u32 %v1181, 2147483648
        %v1244 = vxor.u32 %v1184, 2147483648
        %v1245 = vxor.u32 %v1189, 2147483648
        %v1246 = vxor.u32 %v1192, 2147483648
        %v1247 = vxor.u32 %v1197, 2147483648
        %v1248 = vxor.u32 %v1200, 2147483648
        %v1249 = vxor.u32 %v1205, 2147483648
        %v1250 = vxor.u32 %v1208, 2147483648
        %v1251 = vxor.u32 %v1213, 2147483648
        %v1252 = vxor.u32 %v1216, 2147483648
        %v1253 = vxor.u32 %v1221, 2147483648
        %v1254 = vxor.u32 %v1224, 2147483648
        %v1255 = vxor.u32 %v1229, 2147483648
        %v1256 = vxor.u32 %v1232, 2147483648
        %v1257 = vxor.u32 %v1237, 2147483648
        %v1258 = vxor.u32 %v1240, 2147483648
        %v1259 = vmul.f32 %v1243, 1.442695
        %v1260 = vpow.pop %v1259
        %v1261 = vmul.f32 %v1244, 1.442695
        %v1262 = vpow.pop %v1261
        %v1263 = vmul.f32 %v1245, 1.442695
        %v1264 = vpow.pop %v1263
        %v1265 = vmul.f32 %v1246, 1.442695
        %v1266 = vpow.pop %v1265
        %v1267 = vmul.f32 %v1247, 1.442695
        %v1268 = vpow.pop %v1267
        %v1269 = vmul.f32 %v1248, 1.442695
        %v1270 = vpow.pop %v1269
        %v1271 = vmul.f32 %v1249, 1.442695
        %v1272 = vpow.pop %v1271
        %v1273 = vmul.f32 %v1250, 1.442695
        %v1274 = vpow.pop %v1273
        %v1275 = vmul.f32 %v1251, 1.442695
        %v1276 = vpow.pop %v1275
        %v1277 = vmul.f32 %v1252, 1.442695
        %v1278 = vpow.pop %v1277
        %v1279 = vmul.f32 %v1253, 1.442695
        %v1280 = vpow.pop %v1279
        %v1281 = vmul.f32 %v1254, 1.442695
        %v1282 = vpow.pop %v1281
        %v1283 = vmul.f32 %v1255, 1.442695
        %v1284 = vpow.pop %v1283
        %v1285 = vmul.f32 %v1256, 1.442695
        %v1286 = vpow.pop %v1285
        %v1287 = vmul.f32 %v1257, 1.442695
        %v1288 = vpow.pop %v1287
        %v1289 = vmul.f32 %v1258, 1.442695
        %v1290 = vpow.pop %v1289
        %v1291 = vadd.f32 %v1260, 1.0
        %v1292 = vadd.f32 %v1262, 1.0
        %v1293 = vadd.f32 %v1264, 1.0
        %v1294 = vadd.f32 %v1266, 1.0
        %v1295 = vadd.f32 %v1268, 1.0
        %v1296 = vadd.f32 %v1270, 1.0
        %v1297 = vadd.f32 %v1272, 1.0
        %v1298 = vadd.f32 %v1274, 1.0
        %v1299 = vadd.f32 %v1276, 1.0
        %v1300 = vadd.f32 %v1278, 1.0
        %v1301 = vadd.f32 %v1280, 1.0
        %v1302 = vadd.f32 %v1282, 1.0
        %v1303 = vadd.f32 %v1284, 1.0
        %v1304 = vadd.f32 %v1286, 1.0
        %v1305 = vadd.f32 %v1288, 1.0
        %v1306 = vadd.f32 %v1290, 1.0
        %v1307 = vrcp.pop %v1291
        %v1308 = vmul.f32 1.0, %v1307
        %v1309 = vrcp.pop %v1292
        %v1310 = vmul.f32 1.0, %v1309
        %v1311 = vrcp.pop %v1293
        %v1312 = vmul.f32 1.0, %v1311
        %v1313 = vrcp.pop %v1294
        %v1314 = vmul.f32 1.0, %v1313
        %v1315 = vrcp.pop %v1295
        %v1316 = vmul.f32 1.0, %v1315
        %v1317 = vrcp.pop %v1296
        %v1318 = vmul.f32 1.0, %v1317
        %v1319 = vrcp.pop %v1297
        %v1320 = vmul.f32 1.0, %v1319
        %v1321 = vrcp.pop %v1298
        %v1322 = vmul.f32 1.0, %v1321
        %v1323 = vrcp.pop %v1299
        %v1324 = vmul.f32 1.0, %v1323
        %v1325 = vrcp.pop %v1300
        %v1326 = vmul.f32 1.0, %v1325
        %v1327 = vrcp.pop %v1301
        %v1328 = vmul.f32 1.0, %v1327
        %v1329 = vrcp.pop %v1302
        %v1330 = vmul.f32 1.0, %v1329
        %v1331 = vrcp.pop %v1303
        %v1332 = vmul.f32 1.0, %v1331
        %v1333 = vrcp.pop %v1304
        %v1334 = vmul.f32 1.0, %v1333
        %v1335 = vrcp.pop %v1305
        %v1336 = vmul.f32 1.0, %v1335
        %v1337 = vrcp.pop %v1306
        %v1338 = vmul.f32 1.0, %v1337
        %v1339 = vmul.f32 %v1181, %v1308
        %v1340 = vmul.f32 %v1184, %v1310
        %v1341 = vmul.f32 %v1189, %v1312
        %v1342 = vmul.f32 %v1192, %v1314
        %v1343 = vmul.f32 %v1197, %v1316
        %v1344 = vmul.f32 %v1200, %v1318
        %v1345 = vmul.f32 %v1205, %v1320
        %v1346 = vmul.f32 %v1208, %v1322
        %v1347 = vmul.f32 %v1213, %v1324
        %v1348 = vmul.f32 %v1216, %v1326
        %v1349 = vmul.f32 %v1221, %v1328
        %v1350 = vmul.f32 %v1224, %v1330
        %v1351 = vmul.f32 %v1229, %v1332
        %v1352 = vmul.f32 %v1232, %v1334
        %v1353 = vmul.f32 %v1237, %v1336
        %v1354 = vmul.f32 %v1240, %v1338
        %v1355 = vadd.f32 %v470, %v1339
        %v1356 = vadd.f32 %v471, %v1340
        %v1357 = vadd.f32 %v472, %v1341
        %v1358 = vadd.f32 %v473, %v1342
        %v1359 = vadd.f32 %v474, %v1343
        %v1360 = vadd.f32 %v475, %v1344
        %v1361 = vadd.f32 %v476, %v1345
        %v1362 = vadd.f32 %v477, %v1346
        %v1363 = vadd.f32 %v478, %v1347
        %v1364 = vadd.f32 %v479, %v1348
        %v1365 = vadd.f32 %v480, %v1349
        %v1366 = vadd.f32 %v481, %v1350
        %v1367 = vadd.f32 %v482, %v1351
        %v1368 = vadd.f32 %v483, %v1352
        %v1369 = vadd.f32 %v484, %v1353
        %v1370 = vadd.f32 %v485, %v1354
        %v1371 = vmul.f32 %v1355, 0.70710677
        %v1372 = vmul.f32 %v1356, 0.70710677
        %v1373 = vmul.f32 %v1357, 0.70710677
        %v1374 = vmul.f32 %v1358, 0.70710677
        %v1375 = vmul.f32 %v1359, 0.70710677
        %v1376 = vmul.f32 %v1360, 0.70710677
        %v1377 = vmul.f32 %v1361, 0.70710677
        %v1378 = vmul.f32 %v1362, 0.70710677
        %v1379 = vmul.f32 %v1363, 0.70710677
        %v1380 = vmul.f32 %v1364, 0.70710677
        %v1381 = vmul.f32 %v1365, 0.70710677
        %v1382 = vmul.f32 %v1366, 0.70710677
        %v1383 = vmul.f32 %v1367, 0.70710677
        %v1384 = vmul.f32 %v1368, 0.70710677
        %v1385 = vmul.f32 %v1369, 0.70710677
        %v1386 = vmul.f32 %v1370, 0.70710677
        %v1387 = vpack.c.bf16 %v1372, %v1371
        %v1388 = vpack.c.bf16 %v1374, %v1373
        %v1389 = vpack.c.bf16 %v1376, %v1375
        %v1390 = vpack.c.bf16 %v1378, %v1377
        %v1391 = vpack.c.bf16 %v1380, %v1379
        %v1392 = vpack.c.bf16 %v1382, %v1381
        %v1393 = vpack.c.bf16 %v1384, %v1383
        %v1394 = vpack.c.bf16 %v1386, %v1385
        %s1395 = scalar_lea.vmem [#allocation3], 192
        %v1396 = vld [vmem:[%s1395] sm:$0xf]
        %v1397 = vld [vmem:[%s1395 + $0x4] sm:$0xf]
        %v1398 = vld [vmem:[%s1395 + $0x8] sm:$0xf]
        %v1399 = vld [vmem:[%s1395 + $0xc] sm:$0xf]
        %v1400 = vld [vmem:[%s1395 + $0x10] sm:$0xf]
        %v1401 = vld [vmem:[%s1395 + $0x14] sm:$0xf]
        %v1402 = vld [vmem:[%s1395 + $0x18] sm:$0xf]
        %v1403 = vld [vmem:[%s1395 + $0x1c] sm:$0xf]
        %v1404 = vld [vmem:[%s1395 + $0x20] sm:$0xf]
        %v1405 = vld [vmem:[%s1395 + $0x24] sm:$0xf]
        %v1406 = vld [vmem:[%s1395 + $0x28] sm:$0xf]
        %v1407 = vld [vmem:[%s1395 + $0x2c] sm:$0xf]
        %v1408 = vld [vmem:[%s1395 + $0x30] sm:$0xf]
        %v1409 = vld [vmem:[%s1395 + $0x34] sm:$0xf]
        %v1410 = vld [vmem:[%s1395 + $0x38] sm:$0xf]
        %v1411 = vld [vmem:[%s1395 + $0x3c] sm:$0xf]
        %s1412 = scalar_lea.vmem %s3, 4
        %v1413 = vld [vmem:[%s1412] sm:$0x1]
        %v1415 = vlaneseq
        %v1416 = vshrl.u32 %v1415, 7
        %v1417 = vsub.s32 0, %v1416
        %v1418 = vrot.slane %v1413, %v1417
        %v1436 = vunpack.c.l.b16 %v1396
        %v1437 = vunpack.c.l.b16 %v1397
        %v1438 = vunpack.c.l.b16 %v1398
        %v1439 = vunpack.c.l.b16 %v1399
        %v1440 = vunpack.c.l.b16 %v1400
        %v1441 = vunpack.c.l.b16 %v1401
        %v1442 = vunpack.c.l.b16 %v1402
        %v1443 = vunpack.c.l.b16 %v1403
        %v1444 = vunpack.c.l.b16 %v1404
        %v1445 = vunpack.c.l.b16 %v1405
        %v1446 = vunpack.c.l.b16 %v1406
        %v1447 = vunpack.c.l.b16 %v1407
        %v1448 = vunpack.c.l.b16 %v1408
        %v1449 = vunpack.c.l.b16 %v1409
        %v1450 = vunpack.c.l.b16 %v1410
        %v1451 = vunpack.c.l.b16 %v1411
        %v1452 = vpack.c.b16 %v1437, %v1436
        %v1453 = vpack.c.b16 %v1439, %v1438
        %v1454 = vpack.c.b16 %v1441, %v1440
        %v1455 = vpack.c.b16 %v1443, %v1442
        %v1456 = vpack.c.b16 %v1445, %v1444
        %v1457 = vpack.c.b16 %v1447, %v1446
        %v1458 = vpack.c.b16 %v1449, %v1448
        %v1459 = vpack.c.b16 %v1451, %v1450
        %1468 = vmatprep.subr.bf16.mxu0 0
        %1469 = vmatpush1.bf16.msra.mxu0 %v1452
        %1470 = vmatprep.subr.bf16.mxu0 0
        %1471 = vmatpush1.bf16.msra.mxu0 %v1453
        %1472 = vmatprep.subr.bf16.mxu0 0
        %1473 = vmatpush1.bf16.msra.mxu0 %v1454
        %1474 = vmatprep.subr.bf16.mxu0 0
        %1475 = vmatpush1.bf16.msra.mxu0 %v1455
        %1476 = vmatprep.subr.bf16.mxu0 0
        %1477 = vmatpush1.bf16.msra.mxu0 %v1456
        %1478 = vmatprep.subr.bf16.mxu0 0
        %1479 = vmatpush1.bf16.msra.mxu0 %v1457
        %1480 = vmatprep.subr.bf16.mxu0 0
        %1481 = vmatpush1.bf16.msra.mxu0 %v1458
        %1482 = vmatprep.subr.bf16.mxu0 0
        %1483 = vmatpush1.bf16.msra.mxu0 %v1459
        %1484 = vmatprep.subr.bf16.mxu0 0
        %1485 = vmatpush1.bf16.msra.mxu0 0
        %1486 = vmatprep.subr.bf16.mxu0 0
        %1487 = vmatpush1.bf16.msra.mxu0 0
        %1488 = vmatprep.subr.bf16.mxu0 0
        %1489 = vmatpush1.bf16.msra.mxu0 0
        %1490 = vmatprep.subr.bf16.mxu0 0
        %1491 = vmatpush1.bf16.msra.mxu0 0
        %1492 = vmatprep.subr.bf16.mxu0 0
        %1493 = vmatpush1.bf16.msra.mxu0 0
        %1494 = vmatprep.subr.bf16.mxu0 0
        %1495 = vmatpush1.bf16.msra.mxu0 0
        %1496 = vmatprep.subr.bf16.mxu0 0
        %1497 = vmatpush1.bf16.msra.mxu0 0
        %1498 = vmatprep.subr.bf16.mxu0 0
        %1499 = vmatpush1.bf16.msra.mxu0 0
        %1500 = vmatprep.mubr.bf16.mxu0 0
        %1501 = vmatmul.mubr.bf16.gmra.mrb[0].mxu0 %v1387
        %v1502 = vpop.f32.mrb[0].mxu0
        %v1503 = vadd.f32 %v1418, %v1502
        %v1504 = vpop.f32.mrb[0].mxu0
        %v1505 = vpop.f32.mrb[0].mxu0
        %v1506 = vadd.f32 %v1418, %v1505
        %v1507 = vpop.f32.mrb[0].mxu0
        %1508 = vmatprep.mubr.bf16.mxu0 0
        %1509 = vmatmul.mubr.bf16.gmra.mrb[0].mxu0 %v1388
        %v1510 = vpop.f32.mrb[0].mxu0
        %v1511 = vadd.f32 %v1418, %v1510
        %v1512 = vpop.f32.mrb[0].mxu0
        %v1513 = vpop.f32.mrb[0].mxu0
        %v1514 = vadd.f32 %v1418, %v1513
        %v1515 = vpop.f32.mrb[0].mxu0
        %1516 = vmatprep.mubr.bf16.mxu0 0
        %1517 = vmatmul.mubr.bf16.gmra.mrb[0].mxu0 %v1389
        %v1518 = vpop.f32.mrb[0].mxu0
        %v1519 = vadd.f32 %v1418, %v1518
        %v1520 = vpop.f32.mrb[0].mxu0
        %v1521 = vpop.f32.mrb[0].mxu0
        %v1522 = vadd.f32 %v1418, %v1521
        %v1523 = vpop.f32.mrb[0].mxu0
        %1524 = vmatprep.mubr.bf16.mxu0 0
        %1525 = vmatmul.mubr.bf16.gmra.mrb[0].mxu0 %v1390
        %v1526 = vpop.f32.mrb[0].mxu0
        %v1527 = vadd.f32 %v1418, %v1526
        %v1528 = vpop.f32.mrb[0].mxu0
        %v1529 = vpop.f32.mrb[0].mxu0
        %v1530 = vadd.f32 %v1418, %v1529
        %v1531 = vpop.f32.mrb[0].mxu0
        %1532 = vmatprep.mubr.bf16.mxu0 0
        %1533 = vmatmul.mubr.bf16.gmra.mrb[0].mxu0 %v1391
        %v1534 = vpop.f32.mrb[0].mxu0
        %v1535 = vadd.f32 %v1418, %v1534
        %v1536 = vpop.f32.mrb[0].mxu0
        %v1537 = vpop.f32.mrb[0].mxu0
        %v1538 = vadd.f32 %v1418, %v1537
        %v1539 = vpop.f32.mrb[0].mxu0
        %1540 = vmatprep.mubr.bf16.mxu0 0
        %1541 = vmatmul.mubr.bf16.gmra.mrb[0].mxu0 %v1392
        %v1542 = vpop.f32.mrb[0].mxu0
        %v1543 = vadd.f32 %v1418, %v1542
        %v1544 = vpop.f32.mrb[0].mxu0
        %v1545 = vpop.f32.mrb[0].mxu0
        %v1546 = vadd.f32 %v1418, %v1545
        %v1547 = vpop.f32.mrb[0].mxu0
        %1548 = vmatprep.mubr.bf16.mxu0 0
        %1549 = vmatmul.mubr.bf16.gmra.mrb[0].mxu0 %v1393
        %v1550 = vpop.f32.mrb[0].mxu0
        %v1551 = vadd.f32 %v1418, %v1550
        %v1552 = vpop.f32.mrb[0].mxu0
        %v1553 = vpop.f32.mrb[0].mxu0
        %v1554 = vadd.f32 %v1418, %v1553
        %v1555 = vpop.f32.mrb[0].mxu0
        %1556 = vmatprep.mubr.bf16.mxu0 0
        %1557 = vmatmul.mubr.bf16.gmra.mrb[0].mxu0 %v1394
        %v1558 = vpop.f32.mrb[0].mxu0
        %v1559 = vadd.f32 %v1418, %v1558
        %v1560 = vpop.f32.mrb[0].mxu0
        %v1561 = vpop.f32.mrb[0].mxu0
        %v1562 = vadd.f32 %v1418, %v1561
        %v1563 = vpop.f32.mrb[0].mxu0
        %1564 = vdwg.mxu0
        %v1565 = vxor.u32 %v1503, 2147483648
        %v1566 = vxor.u32 %v1506, 2147483648
        %v1567 = vxor.u32 %v1511, 2147483648
        %v1568 = vxor.u32 %v1514, 2147483648
        %v1569 = vxor.u32 %v1519, 2147483648
        %v1570 = vxor.u32 %v1522, 2147483648
        %v1571 = vxor.u32 %v1527, 2147483648
        %v1572 = vxor.u32 %v1530, 2147483648
        %v1573 = vxor.u32 %v1535, 2147483648
        %v1574 = vxor.u32 %v1538, 2147483648
        %v1575 = vxor.u32 %v1543, 2147483648
        %v1576 = vxor.u32 %v1546, 2147483648
        %v1577 = vxor.u32 %v1551, 2147483648
        %v1578 = vxor.u32 %v1554, 2147483648
        %v1579 = vxor.u32 %v1559, 2147483648
        %v1580 = vxor.u32 %v1562, 2147483648
        %v1581 = vmul.f32 %v1565, 1.442695
        %v1582 = vpow.pop %v1581
        %v1583 = vmul.f32 %v1566, 1.442695
        %v1584 = vpow.pop %v1583
        %v1585 = vmul.f32 %v1567, 1.442695
        %v1586 = vpow.pop %v1585
        %v1587 = vmul.f32 %v1568, 1.442695
        %v1588 = vpow.pop %v1587
        %v1589 = vmul.f32 %v1569, 1.442695
        %v1590 = vpow.pop %v1589
        %v1591 = vmul.f32 %v1570, 1.442695
        %v1592 = vpow.pop %v1591
        %v1593 = vmul.f32 %v1571, 1.442695
        %v1594 = vpow.pop %v1593
        %v1595 = vmul.f32 %v1572, 1.442695
        %v1596 = vpow.pop %v1595
        %v1597 = vmul.f32 %v1573, 1.442695
        %v1598 = vpow.pop %v1597
        %v1599 = vmul.f32 %v1574, 1.442695
        %v1600 = vpow.pop %v1599
        %v1601 = vmul.f32 %v1575, 1.442695
        %v1602 = vpow.pop %v1601
        %v1603 = vmul.f32 %v1576, 1.442695
        %v1604 = vpow.pop %v1603
        %v1605 = vmul.f32 %v1577, 1.442695
        %v1606 = vpow.pop %v1605
        %v1607 = vmul.f32 %v1578, 1.442695
        %v1608 = vpow.pop %v1607
        %v1609 = vmul.f32 %v1579, 1.442695
        %v1610 = vpow.pop %v1609
        %v1611 = vmul.f32 %v1580, 1.442695
        %v1612 = vpow.pop %v1611
        %v1613 = vadd.f32 %v1582, 1.0
        %v1614 = vadd.f32 %v1584, 1.0
        %v1615 = vadd.f32 %v1586, 1.0
        %v1616 = vadd.f32 %v1588, 1.0
        %v1617 = vadd.f32 %v1590, 1.0
        %v1618 = vadd.f32 %v1592, 1.0
        %v1619 = vadd.f32 %v1594, 1.0
        %v1620 = vadd.f32 %v1596, 1.0
        %v1621 = vadd.f32 %v1598, 1.0
        %v1622 = vadd.f32 %v1600, 1.0
        %v1623 = vadd.f32 %v1602, 1.0
        %v1624 = vadd.f32 %v1604, 1.0
        %v1625 = vadd.f32 %v1606, 1.0
        %v1626 = vadd.f32 %v1608, 1.0
        %v1627 = vadd.f32 %v1610, 1.0
        %v1628 = vadd.f32 %v1612, 1.0
        %v1629 = vrcp.pop %v1613
        %v1630 = vmul.f32 1.0, %v1629
        %v1631 = vrcp.pop %v1614
        %v1632 = vmul.f32 1.0, %v1631
        %v1633 = vrcp.pop %v1615
        %v1634 = vmul.f32 1.0, %v1633
        %v1635 = vrcp.pop %v1616
        %v1636 = vmul.f32 1.0, %v1635
        %v1637 = vrcp.pop %v1617
        %v1638 = vmul.f32 1.0, %v1637
        %v1639 = vrcp.pop %v1618
        %v1640 = vmul.f32 1.0, %v1639
        %v1641 = vrcp.pop %v1619
        %v1642 = vmul.f32 1.0, %v1641
        %v1643 = vrcp.pop %v1620
        %v1644 = vmul.f32 1.0, %v1643
        %v1645 = vrcp.pop %v1621
        %v1646 = vmul.f32 1.0, %v1645
        %v1647 = vrcp.pop %v1622
        %v1648 = vmul.f32 1.0, %v1647
        %v1649 = vrcp.pop %v1623
        %v1650 = vmul.f32 1.0, %v1649
        %v1651 = vrcp.pop %v1624
        %v1652 = vmul.f32 1.0, %v1651
        %v1653 = vrcp.pop %v1625
        %v1654 = vmul.f32 1.0, %v1653
        %v1655 = vrcp.pop %v1626
        %v1656 = vmul.f32 1.0, %v1655
        %v1657 = vrcp.pop %v1627
        %v1658 = vmul.f32 1.0, %v1657
        %v1659 = vrcp.pop %v1628
        %v1660 = vmul.f32 1.0, %v1659
        %v1661 = vmul.f32 %v1503, %v1630
        %v1662 = vmul.f32 %v1506, %v1632
        %v1663 = vmul.f32 %v1511, %v1634
        %v1664 = vmul.f32 %v1514, %v1636
        %v1665 = vmul.f32 %v1519, %v1638
        %v1666 = vmul.f32 %v1522, %v1640
        %v1667 = vmul.f32 %v1527, %v1642
        %v1668 = vmul.f32 %v1530, %v1644
        %v1669 = vmul.f32 %v1535, %v1646
        %v1670 = vmul.f32 %v1538, %v1648
        %v1671 = vmul.f32 %v1543, %v1650
        %v1672 = vmul.f32 %v1546, %v1652
        %v1673 = vmul.f32 %v1551, %v1654
        %v1674 = vmul.f32 %v1554, %v1656
        %v1675 = vmul.f32 %v1559, %v1658
        %v1676 = vmul.f32 %v1562, %v1660
        %v1677 = vpack.c.bf16 %v1662, %v1661
        %v1678 = vpack.c.bf16 %v1664, %v1663
        %v1679 = vpack.c.bf16 %v1666, %v1665
        %v1680 = vpack.c.bf16 %v1668, %v1667
        %v1681 = vpack.c.bf16 %v1670, %v1669
        %v1682 = vpack.c.bf16 %v1672, %v1671
        %v1683 = vpack.c.bf16 %v1674, %v1673
        %v1684 = vpack.c.bf16 %v1676, %v1675
        %s1685 = scalar_lea.vmem [#allocation3], 256
        %v1686 = vld [vmem:[%s1685] sm:$0xf]
        %v1687 = vld [vmem:[%s1685 + $0x4] sm:$0xf]
        %v1688 = vld [vmem:[%s1685 + $0x8] sm:$0xf]
        %v1689 = vld [vmem:[%s1685 + $0xc] sm:$0xf]
        %v1690 = vld [vmem:[%s1685 + $0x10] sm:$0xf]
        %v1691 = vld [vmem:[%s1685 + $0x14] sm:$0xf]
        %v1692 = vld [vmem:[%s1685 + $0x18] sm:$0xf]
        %v1693 = vld [vmem:[%s1685 + $0x1c] sm:$0xf]
        %v1694 = vld [vmem:[%s1685 + $0x20] sm:$0xf]
        %v1695 = vld [vmem:[%s1685 + $0x24] sm:$0xf]
        %v1696 = vld [vmem:[%s1685 + $0x28] sm:$0xf]
        %v1697 = vld [vmem:[%s1685 + $0x2c] sm:$0xf]
        %v1698 = vld [vmem:[%s1685 + $0x30] sm:$0xf]
        %v1699 = vld [vmem:[%s1685 + $0x34] sm:$0xf]
        %v1700 = vld [vmem:[%s1685 + $0x38] sm:$0xf]
        %v1701 = vld [vmem:[%s1685 + $0x3c] sm:$0xf]
        %s1702 = scalar_lea.vmem %s3, 5
        %v1703 = vld [vmem:[%s1702] sm:$0x1]
        %v1705 = vlaneseq
        %v1706 = vshrl.u32 %v1705, 7
        %v1707 = vsub.s32 0, %v1706
        %v1708 = vrot.slane %v1703, %v1707
        %v1726 = vunpack.c.l.b16 %v1686
        %v1727 = vunpack.c.l.b16 %v1687
        %v1728 = vunpack.c.l.b16 %v1688
        %v1729 = vunpack.c.l.b16 %v1689
        %v1730 = vunpack.c.l.b16 %v1690
        %v1731 = vunpack.c.l.b16 %v1691
        %v1732 = vunpack.c.l.b16 %v1692
        %v1733 = vunpack.c.l.b16 %v1693
        %v1734 = vunpack.c.l.b16 %v1694
        %v1735 = vunpack.c.l.b16 %v1695
        %v1736 = vunpack.c.l.b16 %v1696
        %v1737 = vunpack.c.l.b16 %v1697
        %v1738 = vunpack.c.l.b16 %v1698
        %v1739 = vunpack.c.l.b16 %v1699
        %v1740 = vunpack.c.l.b16 %v1700
        %v1741 = vunpack.c.l.b16 %v1701
        %v1742 = vpack.c.b16 %v1727, %v1726
        %v1743 = vpack.c.b16 %v1729, %v1728
        %v1744 = vpack.c.b16 %v1731, %v1730
        %v1745 = vpack.c.b16 %v1733, %v1732
        %v1746 = vpack.c.b16 %v1735, %v1734
        %v1747 = vpack.c.b16 %v1737, %v1736
        %v1748 = vpack.c.b16 %v1739, %v1738
        %v1749 = vpack.c.b16 %v1741, %v1740
        %1758 = vmatprep.subr.bf16.mxu0 0
        %1759 = vmatpush1.bf16.msra.mxu0 %v1742
        %1760 = vmatprep.subr.bf16.mxu0 0
        %1761 = vmatpush1.bf16.msra.mxu0 %v1743
        %1762 = vmatprep.subr.bf16.mxu0 0
        %1763 = vmatpush1.bf16.msra.mxu0 %v1744
        %1764 = vmatprep.subr.bf16.mxu0 0
        %1765 = vmatpush1.bf16.msra.mxu0 %v1745
        %1766 = vmatprep.subr.bf16.mxu0 0
        %1767 = vmatpush1.bf16.msra.mxu0 %v1746
        %1768 = vmatprep.subr.bf16.mxu0 0
        %1769 = vmatpush1.bf16.msra.mxu0 %v1747
        %1770 = vmatprep.subr.bf16.mxu0 0
        %1771 = vmatpush1.bf16.msra.mxu0 %v1748
        %1772 = vmatprep.subr.bf16.mxu0 0
        %1773 = vmatpush1.bf16.msra.mxu0 %v1749
        %1774 = vmatprep.subr.bf16.mxu0 0
        %1775 = vmatpush1.bf16.msra.mxu0 0
        %1776 = vmatprep.subr.bf16.mxu0 0
        %1777 = vmatpush1.bf16.msra.mxu0 0
        %1778 = vmatprep.subr.bf16.mxu0 0
        %1779 = vmatpush1.bf16.msra.mxu0 0
        %1780 = vmatprep.subr.bf16.mxu0 0
        %1781 = vmatpush1.bf16.msra.mxu0 0
        %1782 = vmatprep.subr.bf16.mxu0 0
        %1783 = vmatpush1.bf16.msra.mxu0 0
        %1784 = vmatprep.subr.bf16.mxu0 0
        %1785 = vmatpush1.bf16.msra.mxu0 0
        %1786 = vmatprep.subr.bf16.mxu0 0
        %1787 = vmatpush1.bf16.msra.mxu0 0
        %1788 = vmatprep.subr.bf16.mxu0 0
        %1789 = vmatpush1.bf16.msra.mxu0 0
        %1790 = vmatprep.mubr.bf16.mxu0 0
        %1791 = vmatmul.mubr.bf16.gmra.mrb[0].mxu0 %v1677
        %v1792 = vpop.f32.mrb[0].mxu0
        %v1793 = vadd.f32 %v1708, %v1792
        %v1794 = vpop.f32.mrb[0].mxu0
        %v1795 = vpop.f32.mrb[0].mxu0
        %v1796 = vadd.f32 %v1708, %v1795
        %v1797 = vpop.f32.mrb[0].mxu0
        %1798 = vmatprep.mubr.bf16.mxu0 0
        %1799 = vmatmul.mubr.bf16.gmra.mrb[0].mxu0 %v1678
        %v1800 = vpop.f32.mrb[0].mxu0
        %v1801 = vadd.f32 %v1708, %v1800
        %v1802 = vpop.f32.mrb[0].mxu0
        %v1803 = vpop.f32.mrb[0].mxu0
        %v1804 = vadd.f32 %v1708, %v1803
        %v1805 = vpop.f32.mrb[0].mxu0
        %1806 = vmatprep.mubr.bf16.mxu0 0
        %1807 = vmatmul.mubr.bf16.gmra.mrb[0].mxu0 %v1679
        %v1808 = vpop.f32.mrb[0].mxu0
        %v1809 = vadd.f32 %v1708, %v1808
        %v1810 = vpop.f32.mrb[0].mxu0
        %v1811 = vpop.f32.mrb[0].mxu0
        %v1812 = vadd.f32 %v1708, %v1811
        %v1813 = vpop.f32.mrb[0].mxu0
        %1814 = vmatprep.mubr.bf16.mxu0 0
        %1815 = vmatmul.mubr.bf16.gmra.mrb[0].mxu0 %v1680
        %v1816 = vpop.f32.mrb[0].mxu0
        %v1817 = vadd.f32 %v1708, %v1816
        %v1818 = vpop.f32.mrb[0].mxu0
        %v1819 = vpop.f32.mrb[0].mxu0
        %v1820 = vadd.f32 %v1708, %v1819
        %v1821 = vpop.f32.mrb[0].mxu0
        %1822 = vmatprep.mubr.bf16.mxu0 0
        %1823 = vmatmul.mubr.bf16.gmra.mrb[0].mxu0 %v1681
        %v1824 = vpop.f32.mrb[0].mxu0
        %v1825 = vadd.f32 %v1708, %v1824
        %v1826 = vpop.f32.mrb[0].mxu0
        %v1827 = vpop.f32.mrb[0].mxu0
        %v1828 = vadd.f32 %v1708, %v1827
        %v1829 = vpop.f32.mrb[0].mxu0
        %1830 = vmatprep.mubr.bf16.mxu0 0
        %1831 = vmatmul.mubr.bf16.gmra.mrb[0].mxu0 %v1682
        %v1832 = vpop.f32.mrb[0].mxu0
        %v1833 = vadd.f32 %v1708, %v1832
        %v1834 = vpop.f32.mrb[0].mxu0
        %v1835 = vpop.f32.mrb[0].mxu0
        %v1836 = vadd.f32 %v1708, %v1835
        %v1837 = vpop.f32.mrb[0].mxu0
        %1838 = vmatprep.mubr.bf16.mxu0 0
        %1839 = vmatmul.mubr.bf16.gmra.mrb[0].mxu0 %v1683
        %v1840 = vpop.f32.mrb[0].mxu0
        %v1841 = vadd.f32 %v1708, %v1840
        %v1842 = vpop.f32.mrb[0].mxu0
        %v1843 = vpop.f32.mrb[0].mxu0
        %v1844 = vadd.f32 %v1708, %v1843
        %v1845 = vpop.f32.mrb[0].mxu0
        %1846 = vmatprep.mubr.bf16.mxu0 0
        %1847 = vmatmul.mubr.bf16.gmra.mrb[0].mxu0 %v1684
        %v1848 = vpop.f32.mrb[0].mxu0
        %v1849 = vadd.f32 %v1708, %v1848
        %v1850 = vpop.f32.mrb[0].mxu0
        %v1851 = vpop.f32.mrb[0].mxu0
        %v1852 = vadd.f32 %v1708, %v1851
        %v1853 = vpop.f32.mrb[0].mxu0
        %1854 = vdwg.mxu0
        %v1855 = vxor.u32 %v1793, 2147483648
        %v1856 = vxor.u32 %v1796, 2147483648
        %v1857 = vxor.u32 %v1801, 2147483648
        %v1858 = vxor.u32 %v1804, 2147483648
        %v1859 = vxor.u32 %v1809, 2147483648
        %v1860 = vxor.u32 %v1812, 2147483648
        %v1861 = vxor.u32 %v1817, 2147483648
        %v1862 = vxor.u32 %v1820, 2147483648
        %v1863 = vxor.u32 %v1825, 2147483648
        %v1864 = vxor.u32 %v1828, 2147483648
        %v1865 = vxor.u32 %v1833, 2147483648
        %v1866 = vxor.u32 %v1836, 2147483648
        %v1867 = vxor.u32 %v1841, 2147483648
        %v1868 = vxor.u32 %v1844, 2147483648
        %v1869 = vxor.u32 %v1849, 2147483648
        %v1870 = vxor.u32 %v1852, 2147483648
        %v1871 = vmul.f32 %v1855, 1.442695
        %v1872 = vpow.pop %v1871
        %v1873 = vmul.f32 %v1856, 1.442695
        %v1874 = vpow.pop %v1873
        %v1875 = vmul.f32 %v1857, 1.442695
        %v1876 = vpow.pop %v1875
        %v1877 = vmul.f32 %v1858, 1.442695
        %v1878 = vpow.pop %v1877
        %v1879 = vmul.f32 %v1859, 1.442695
        %v1880 = vpow.pop %v1879
        %v1881 = vmul.f32 %v1860, 1.442695
        %v1882 = vpow.pop %v1881
        %v1883 = vmul.f32 %v1861, 1.442695
        %v1884 = vpow.pop %v1883
        %v1885 = vmul.f32 %v1862, 1.442695
        %v1886 = vpow.pop %v1885
        %v1887 = vmul.f32 %v1863, 1.442695
        %v1888 = vpow.pop %v1887
        %v1889 = vmul.f32 %v1864, 1.442695
        %v1890 = vpow.pop %v1889
        %v1891 = vmul.f32 %v1865, 1.442695
        %v1892 = vpow.pop %v1891
        %v1893 = vmul.f32 %v1866, 1.442695
        %v1894 = vpow.pop %v1893
        %v1895 = vmul.f32 %v1867, 1.442695
        %v1896 = vpow.pop %v1895
        %v1897 = vmul.f32 %v1868, 1.442695
        %v1898 = vpow.pop %v1897
        %v1899 = vmul.f32 %v1869, 1.442695
        %v1900 = vpow.pop %v1899
        %v1901 = vmul.f32 %v1870, 1.442695
        %v1902 = vpow.pop %v1901
        %v1903 = vadd.f32 %v1872, 1.0
        %v1904 = vadd.f32 %v1874, 1.0
        %v1905 = vadd.f32 %v1876, 1.0
        %v1906 = vadd.f32 %v1878, 1.0
        %v1907 = vadd.f32 %v1880, 1.0
        %v1908 = vadd.f32 %v1882, 1.0
        %v1909 = vadd.f32 %v1884, 1.0
        %v1910 = vadd.f32 %v1886, 1.0
        %v1911 = vadd.f32 %v1888, 1.0
        %v1912 = vadd.f32 %v1890, 1.0
        %v1913 = vadd.f32 %v1892, 1.0
        %v1914 = vadd.f32 %v1894, 1.0
        %v1915 = vadd.f32 %v1896, 1.0
        %v1916 = vadd.f32 %v1898, 1.0
        %v1917 = vadd.f32 %v1900, 1.0
        %v1918 = vadd.f32 %v1902, 1.0
        %v1919 = vrcp.pop %v1903
        %v1920 = vmul.f32 1.0, %v1919
        %v1921 = vrcp.pop %v1904
        %v1922 = vmul.f32 1.0, %v1921
        %v1923 = vrcp.pop %v1905
        %v1924 = vmul.f32 1.0, %v1923
        %v1925 = vrcp.pop %v1906
        %v1926 = vmul.f32 1.0, %v1925
        %v1927 = vrcp.pop %v1907
        %v1928 = vmul.f32 1.0, %v1927
        %v1929 = vrcp.pop %v1908
        %v1930 = vmul.f32 1.0, %v1929
        %v1931 = vrcp.pop %v1909
        %v1932 = vmul.f32 1.0, %v1931
        %v1933 = vrcp.pop %v1910
        %v1934 = vmul.f32 1.0, %v1933
        %v1935 = vrcp.pop %v1911
        %v1936 = vmul.f32 1.0, %v1935
        %v1937 = vrcp.pop %v1912
        %v1938 = vmul.f32 1.0, %v1937
        %v1939 = vrcp.pop %v1913
        %v1940 = vmul.f32 1.0, %v1939
        %v1941 = vrcp.pop %v1914
        %v1942 = vmul.f32 1.0, %v1941
        %v1943 = vrcp.pop %v1915
        %v1944 = vmul.f32 1.0, %v1943
        %v1945 = vrcp.pop %v1916
        %v1946 = vmul.f32 1.0, %v1945
        %v1947 = vrcp.pop %v1917
        %v1948 = vmul.f32 1.0, %v1947
        %v1949 = vrcp.pop %v1918
        %v1950 = vmul.f32 1.0, %v1949
        %v1951 = vmul.f32 %v1793, %v1920
        %v1952 = vmul.f32 %v1796, %v1922
        %v1953 = vmul.f32 %v1801, %v1924
        %v1954 = vmul.f32 %v1804, %v1926
        %v1955 = vmul.f32 %v1809, %v1928
        %v1956 = vmul.f32 %v1812, %v1930
        %v1957 = vmul.f32 %v1817, %v1932
        %v1958 = vmul.f32 %v1820, %v1934
        %v1959 = vmul.f32 %v1825, %v1936
        %v1960 = vmul.f32 %v1828, %v1938
        %v1961 = vmul.f32 %v1833, %v1940
        %v1962 = vmul.f32 %v1836, %v1942
        %v1963 = vmul.f32 %v1841, %v1944
        %v1964 = vmul.f32 %v1844, %v1946
        %v1965 = vmul.f32 %v1849, %v1948
        %v1966 = vmul.f32 %v1852, %v1950
        %v1967 = vpack.c.bf16 %v1952, %v1951
        %v1968 = vpack.c.bf16 %v1954, %v1953
        %v1969 = vpack.c.bf16 %v1956, %v1955
        %v1970 = vpack.c.bf16 %v1958, %v1957
        %v1971 = vpack.c.bf16 %v1960, %v1959
        %v1972 = vpack.c.bf16 %v1962, %v1961
        %v1973 = vpack.c.bf16 %v1964, %v1963
        %v1974 = vpack.c.bf16 %v1966, %v1965
        %s1975 = scalar_lea.vmem [#allocation3], 320
        %v1976 = vld [vmem:[%s1975] sm:$0xf]
        %v1977 = vld [vmem:[%s1975 + $0x4] sm:$0xf]
        %v1978 = vld [vmem:[%s1975 + $0x8] sm:$0xf]
        %v1979 = vld [vmem:[%s1975 + $0xc] sm:$0xf]
        %v1980 = vld [vmem:[%s1975 + $0x10] sm:$0xf]
        %v1981 = vld [vmem:[%s1975 + $0x14] sm:$0xf]
        %v1982 = vld [vmem:[%s1975 + $0x18] sm:$0xf]
        %v1983 = vld [vmem:[%s1975 + $0x1c] sm:$0xf]
        %v1984 = vld [vmem:[%s1975 + $0x20] sm:$0xf]
        %v1985 = vld [vmem:[%s1975 + $0x24] sm:$0xf]
        %v1986 = vld [vmem:[%s1975 + $0x28] sm:$0xf]
        %v1987 = vld [vmem:[%s1975 + $0x2c] sm:$0xf]
        %v1988 = vld [vmem:[%s1975 + $0x30] sm:$0xf]
        %v1989 = vld [vmem:[%s1975 + $0x34] sm:$0xf]
        %v1990 = vld [vmem:[%s1975 + $0x38] sm:$0xf]
        %v1991 = vld [vmem:[%s1975 + $0x3c] sm:$0xf]
        %s1992 = scalar_lea.vmem %s3, 6
        %v1993 = vld [vmem:[%s1992] sm:$0x1]
        %v1995 = vlaneseq
        %v1996 = vshrl.u32 %v1995, 7
        %v1997 = vsub.s32 0, %v1996
        %v1998 = vrot.slane %v1993, %v1997
        %v2016 = vunpack.c.l.b16 %v1976
        %v2017 = vunpack.c.l.b16 %v1977
        %v2018 = vunpack.c.l.b16 %v1978
        %v2019 = vunpack.c.l.b16 %v1979
        %v2020 = vunpack.c.l.b16 %v1980
        %v2021 = vunpack.c.l.b16 %v1981
        %v2022 = vunpack.c.l.b16 %v1982
        %v2023 = vunpack.c.l.b16 %v1983
        %v2024 = vunpack.c.l.b16 %v1984
        %v2025 = vunpack.c.l.b16 %v1985
        %v2026 = vunpack.c.l.b16 %v1986
        %v2027 = vunpack.c.l.b16 %v1987
        %v2028 = vunpack.c.l.b16 %v1988
        %v2029 = vunpack.c.l.b16 %v1989
        %v2030 = vunpack.c.l.b16 %v1990
        %v2031 = vunpack.c.l.b16 %v1991
        %v2032 = vpack.c.b16 %v2017, %v2016
        %v2033 = vpack.c.b16 %v2019, %v2018
        %v2034 = vpack.c.b16 %v2021, %v2020
        %v2035 = vpack.c.b16 %v2023, %v2022
        %v2036 = vpack.c.b16 %v2025, %v2024
        %v2037 = vpack.c.b16 %v2027, %v2026
        %v2038 = vpack.c.b16 %v2029, %v2028
        %v2039 = vpack.c.b16 %v2031, %v2030
        %2048 = vmatprep.subr.bf16.mxu0 0
        %2049 = vmatpush1.bf16.msra.mxu0 %v2032
        %2050 = vmatprep.subr.bf16.mxu0 0
        %2051 = vmatpush1.bf16.msra.mxu0 %v2033
        %2052 = vmatprep.subr.bf16.mxu0 0
        %2053 = vmatpush1.bf16.msra.mxu0 %v2034
        %2054 = vmatprep.subr.bf16.mxu0 0
        %2055 = vmatpush1.bf16.msra.mxu0 %v2035
        %2056 = vmatprep.subr.bf16.mxu0 0
        %2057 = vmatpush1.bf16.msra.mxu0 %v2036
        %2058 = vmatprep.subr.bf16.mxu0 0
        %2059 = vmatpush1.bf16.msra.mxu0 %v2037
        %2060 = vmatprep.subr.bf16.mxu0 0
        %2061 = vmatpush1.bf16.msra.mxu0 %v2038
        %2062 = vmatprep.subr.bf16.mxu0 0
        %2063 = vmatpush1.bf16.msra.mxu0 %v2039
        %2064 = vmatprep.subr.bf16.mxu0 0
        %2065 = vmatpush1.bf16.msra.mxu0 0
        %2066 = vmatprep.subr.bf16.mxu0 0
        %2067 = vmatpush1.bf16.msra.mxu0 0
        %2068 = vmatprep.subr.bf16.mxu0 0
        %2069 = vmatpush1.bf16.msra.mxu0 0
        %2070 = vmatprep.subr.bf16.mxu0 0
        %2071 = vmatpush1.bf16.msra.mxu0 0
        %2072 = vmatprep.subr.bf16.mxu0 0
        %2073 = vmatpush1.bf16.msra.mxu0 0
        %2074 = vmatprep.subr.bf16.mxu0 0
        %2075 = vmatpush1.bf16.msra.mxu0 0
        %2076 = vmatprep.subr.bf16.mxu0 0
        %2077 = vmatpush1.bf16.msra.mxu0 0
        %2078 = vmatprep.subr.bf16.mxu0 0
        %2079 = vmatpush1.bf16.msra.mxu0 0
        %2080 = vmatprep.mubr.bf16.mxu0 0
        %2081 = vmatmul.mubr.bf16.gmra.mrb[0].mxu0 %v1967
        %v2082 = vpop.f32.mrb[0].mxu0
        %v2083 = vadd.f32 %v1998, %v2082
        %v2084 = vpop.f32.mrb[0].mxu0
        %v2085 = vpop.f32.mrb[0].mxu0
        %v2086 = vadd.f32 %v1998, %v2085
        %v2087 = vpop.f32.mrb[0].mxu0
        %2088 = vmatprep.mubr.bf16.mxu0 0
        %2089 = vmatmul.mubr.bf16.gmra.mrb[0].mxu0 %v1968
        %v2090 = vpop.f32.mrb[0].mxu0
        %v2091 = vadd.f32 %v1998, %v2090
        %v2092 = vpop.f32.mrb[0].mxu0
        %v2093 = vpop.f32.mrb[0].mxu0
        %v2094 = vadd.f32 %v1998, %v2093
        %v2095 = vpop.f32.mrb[0].mxu0
        %2096 = vmatprep.mubr.bf16.mxu0 0
        %2097 = vmatmul.mubr.bf16.gmra.mrb[0].mxu0 %v1969
        %v2098 = vpop.f32.mrb[0].mxu0
        %v2099 = vadd.f32 %v1998, %v2098
        %v2100 = vpop.f32.mrb[0].mxu0
        %v2101 = vpop.f32.mrb[0].mxu0
        %v2102 = vadd.f32 %v1998, %v2101
        %v2103 = vpop.f32.mrb[0].mxu0
        %2104 = vmatprep.mubr.bf16.mxu0 0
        %2105 = vmatmul.mubr.bf16.gmra.mrb[0].mxu0 %v1970
        %v2106 = vpop.f32.mrb[0].mxu0
        %v2107 = vadd.f32 %v1998, %v2106
        %v2108 = vpop.f32.mrb[0].mxu0
        %v2109 = vpop.f32.mrb[0].mxu0
        %v2110 = vadd.f32 %v1998, %v2109
        %v2111 = vpop.f32.mrb[0].mxu0
        %2112 = vmatprep.mubr.bf16.mxu0 0
        %2113 = vmatmul.mubr.bf16.gmra.mrb[0].mxu0 %v1971
        %v2114 = vpop.f32.mrb[0].mxu0
        %v2115 = vadd.f32 %v1998, %v2114
        %v2116 = vpop.f32.mrb[0].mxu0
        %v2117 = vpop.f32.mrb[0].mxu0
        %v2118 = vadd.f32 %v1998, %v2117
        %v2119 = vpop.f32.mrb[0].mxu0
        %2120 = vmatprep.mubr.bf16.mxu0 0
        %2121 = vmatmul.mubr.bf16.gmra.mrb[0].mxu0 %v1972
        %v2122 = vpop.f32.mrb[0].mxu0
        %v2123 = vadd.f32 %v1998, %v2122
        %v2124 = vpop.f32.mrb[0].mxu0
        %v2125 = vpop.f32.mrb[0].mxu0
        %v2126 = vadd.f32 %v1998, %v2125
        %v2127 = vpop.f32.mrb[0].mxu0
        %2128 = vmatprep.mubr.bf16.mxu0 0
        %2129 = vmatmul.mubr.bf16.gmra.mrb[0].mxu0 %v1973
        %v2130 = vpop.f32.mrb[0].mxu0
        %v2131 = vadd.f32 %v1998, %v2130
        %v2132 = vpop.f32.mrb[0].mxu0
        %v2133 = vpop.f32.mrb[0].mxu0
        %v2134 = vadd.f32 %v1998, %v2133
        %v2135 = vpop.f32.mrb[0].mxu0
        %2136 = vmatprep.mubr.bf16.mxu0 0
        %2137 = vmatmul.mubr.bf16.gmra.mrb[0].mxu0 %v1974
        %v2138 = vpop.f32.mrb[0].mxu0
        %v2139 = vadd.f32 %v1998, %v2138
        %v2140 = vpop.f32.mrb[0].mxu0
        %v2141 = vpop.f32.mrb[0].mxu0
        %v2142 = vadd.f32 %v1998, %v2141
        %v2143 = vpop.f32.mrb[0].mxu0
        %2144 = vdwg.mxu0
        %v2145 = vxor.u32 %v2083, 2147483648
        %v2146 = vxor.u32 %v2086, 2147483648
        %v2147 = vxor.u32 %v2091, 2147483648
        %v2148 = vxor.u32 %v2094, 2147483648
        %v2149 = vxor.u32 %v2099, 2147483648
        %v2150 = vxor.u32 %v2102, 2147483648
        %v2151 = vxor.u32 %v2107, 2147483648
        %v2152 = vxor.u32 %v2110, 2147483648
        %v2153 = vxor.u32 %v2115, 2147483648
        %v2154 = vxor.u32 %v2118, 2147483648
        %v2155 = vxor.u32 %v2123, 2147483648
        %v2156 = vxor.u32 %v2126, 2147483648
        %v2157 = vxor.u32 %v2131, 2147483648
        %v2158 = vxor.u32 %v2134, 2147483648
        %v2159 = vxor.u32 %v2139, 2147483648
        %v2160 = vxor.u32 %v2142, 2147483648
        %v2161 = vmul.f32 %v2145, 1.442695
        %v2162 = vpow.pop %v2161
        %v2163 = vmul.f32 %v2146, 1.442695
        %v2164 = vpow.pop %v2163
        %v2165 = vmul.f32 %v2147, 1.442695
        %v2166 = vpow.pop %v2165
        %v2167 = vmul.f32 %v2148, 1.442695
        %v2168 = vpow.pop %v2167
        %v2169 = vmul.f32 %v2149, 1.442695
        %v2170 = vpow.pop %v2169
        %v2171 = vmul.f32 %v2150, 1.442695
        %v2172 = vpow.pop %v2171
        %v2173 = vmul.f32 %v2151, 1.442695
        %v2174 = vpow.pop %v2173
        %v2175 = vmul.f32 %v2152, 1.442695
        %v2176 = vpow.pop %v2175
        %v2177 = vmul.f32 %v2153, 1.442695
        %v2178 = vpow.pop %v2177
        %v2179 = vmul.f32 %v2154, 1.442695
        %v2180 = vpow.pop %v2179
        %v2181 = vmul.f32 %v2155, 1.442695
        %v2182 = vpow.pop %v2181
        %v2183 = vmul.f32 %v2156, 1.442695
        %v2184 = vpow.pop %v2183
        %v2185 = vmul.f32 %v2157, 1.442695
        %v2186 = vpow.pop %v2185
        %v2187 = vmul.f32 %v2158, 1.442695
        %v2188 = vpow.pop %v2187
        %v2189 = vmul.f32 %v2159, 1.442695
        %v2190 = vpow.pop %v2189
        %v2191 = vmul.f32 %v2160, 1.442695
        %v2192 = vpow.pop %v2191
        %v2193 = vadd.f32 %v2162, 1.0
        %v2194 = vadd.f32 %v2164, 1.0
        %v2195 = vadd.f32 %v2166, 1.0
        %v2196 = vadd.f32 %v2168, 1.0
        %v2197 = vadd.f32 %v2170, 1.0
        %v2198 = vadd.f32 %v2172, 1.0
        %v2199 = vadd.f32 %v2174, 1.0
        %v2200 = vadd.f32 %v2176, 1.0
        %v2201 = vadd.f32 %v2178, 1.0
        %v2202 = vadd.f32 %v2180, 1.0
        %v2203 = vadd.f32 %v2182, 1.0
        %v2204 = vadd.f32 %v2184, 1.0
        %v2205 = vadd.f32 %v2186, 1.0
        %v2206 = vadd.f32 %v2188, 1.0
        %v2207 = vadd.f32 %v2190, 1.0
        %v2208 = vadd.f32 %v2192, 1.0
        %v2209 = vrcp.pop %v2193
        %v2210 = vmul.f32 1.0, %v2209
        %v2211 = vrcp.pop %v2194
        %v2212 = vmul.f32 1.0, %v2211
        %v2213 = vrcp.pop %v2195
        %v2214 = vmul.f32 1.0, %v2213
        %v2215 = vrcp.pop %v2196
        %v2216 = vmul.f32 1.0, %v2215
        %v2217 = vrcp.pop %v2197
        %v2218 = vmul.f32 1.0, %v2217
        %v2219 = vrcp.pop %v2198
        %v2220 = vmul.f32 1.0, %v2219
        %v2221 = vrcp.pop %v2199
        %v2222 = vmul.f32 1.0, %v2221
        %v2223 = vrcp.pop %v2200
        %v2224 = vmul.f32 1.0, %v2223
        %v2225 = vrcp.pop %v2201
        %v2226 = vmul.f32 1.0, %v2225
        %v2227 = vrcp.pop %v2202
        %v2228 = vmul.f32 1.0, %v2227
        %v2229 = vrcp.pop %v2203
        %v2230 = vmul.f32 1.0, %v2229
        %v2231 = vrcp.pop %v2204
        %v2232 = vmul.f32 1.0, %v2231
        %v2233 = vrcp.pop %v2205
        %v2234 = vmul.f32 1.0, %v2233
        %v2235 = vrcp.pop %v2206
        %v2236 = vmul.f32 1.0, %v2235
        %v2237 = vrcp.pop %v2207
        %v2238 = vmul.f32 1.0, %v2237
        %v2239 = vrcp.pop %v2208
        %v2240 = vmul.f32 1.0, %v2239
        %v2241 = vmul.f32 %v2083, %v2210
        %v2242 = vmul.f32 %v2086, %v2212
        %v2243 = vmul.f32 %v2091, %v2214
        %v2244 = vmul.f32 %v2094, %v2216
        %v2245 = vmul.f32 %v2099, %v2218
        %v2246 = vmul.f32 %v2102, %v2220
        %v2247 = vmul.f32 %v2107, %v2222
        %v2248 = vmul.f32 %v2110, %v2224
        %v2249 = vmul.f32 %v2115, %v2226
        %v2250 = vmul.f32 %v2118, %v2228
        %v2251 = vmul.f32 %v2123, %v2230
        %v2252 = vmul.f32 %v2126, %v2232
        %v2253 = vmul.f32 %v2131, %v2234
        %v2254 = vmul.f32 %v2134, %v2236
        %v2255 = vmul.f32 %v2139, %v2238
        %v2256 = vmul.f32 %v2142, %v2240
        %v2257 = vadd.f32 %v1371, %v2241
        %v2258 = vadd.f32 %v1372, %v2242
        %v2259 = vadd.f32 %v1373, %v2243
        %v2260 = vadd.f32 %v1374, %v2244
        %v2261 = vadd.f32 %v1375, %v2245
        %v2262 = vadd.f32 %v1376, %v2246
        %v2263 = vadd.f32 %v1377, %v2247
        %v2264 = vadd.f32 %v1378, %v2248
        %v2265 = vadd.f32 %v1379, %v2249
        %v2266 = vadd.f32 %v1380, %v2250
        %v2267 = vadd.f32 %v1381, %v2251
        %v2268 = vadd.f32 %v1382, %v2252
        %v2269 = vadd.f32 %v1383, %v2253
        %v2270 = vadd.f32 %v1384, %v2254
        %v2271 = vadd.f32 %v1385, %v2255
        %v2272 = vadd.f32 %v1386, %v2256
        %v2273 = vmul.f32 %v2257, 0.70710677
        %v2274 = vmul.f32 %v2258, 0.70710677
        %v2275 = vmul.f32 %v2259, 0.70710677
        %v2276 = vmul.f32 %v2260, 0.70710677
        %v2277 = vmul.f32 %v2261, 0.70710677
        %v2278 = vmul.f32 %v2262, 0.70710677
        %v2279 = vmul.f32 %v2263, 0.70710677
        %v2280 = vmul.f32 %v2264, 0.70710677
        %v2281 = vmul.f32 %v2265, 0.70710677
        %v2282 = vmul.f32 %v2266, 0.70710677
        %v2283 = vmul.f32 %v2267, 0.70710677
        %v2284 = vmul.f32 %v2268, 0.70710677
        %v2285 = vmul.f32 %v2269, 0.70710677
        %v2286 = vmul.f32 %v2270, 0.70710677
        %v2287 = vmul.f32 %v2271, 0.70710677
        %v2288 = vmul.f32 %v2272, 0.70710677
        %v2289 = vpack.c.bf16 %v2274, %v2273
        %v2290 = vpack.c.bf16 %v2276, %v2275
        %v2291 = vpack.c.bf16 %v2278, %v2277
        %v2292 = vpack.c.bf16 %v2280, %v2279
        %v2293 = vpack.c.bf16 %v2282, %v2281
        %v2294 = vpack.c.bf16 %v2284, %v2283
        %v2295 = vpack.c.bf16 %v2286, %v2285
        %v2296 = vpack.c.bf16 %v2288, %v2287
        %s2297 = scalar_lea.vmem [#allocation3], 384
        %v2298 = vld [vmem:[%s2297] sm:$0xf]
        %v2299 = vld [vmem:[%s2297 + $0x4] sm:$0xf]
        %v2300 = vld [vmem:[%s2297 + $0x8] sm:$0xf]
        %v2301 = vld [vmem:[%s2297 + $0xc] sm:$0xf]
        %v2302 = vld [vmem:[%s2297 + $0x10] sm:$0xf]
        %v2303 = vld [vmem:[%s2297 + $0x14] sm:$0xf]
        %v2304 = vld [vmem:[%s2297 + $0x18] sm:$0xf]
        %v2305 = vld [vmem:[%s2297 + $0x1c] sm:$0xf]
        %v2306 = vld [vmem:[%s2297 + $0x20] sm:$0xf]
        %v2307 = vld [vmem:[%s2297 + $0x24] sm:$0xf]
        %v2308 = vld [vmem:[%s2297 + $0x28] sm:$0xf]
        %v2309 = vld [vmem:[%s2297 + $0x2c] sm:$0xf]
        %v2310 = vld [vmem:[%s2297 + $0x30] sm:$0xf]
        %v2311 = vld [vmem:[%s2297 + $0x34] sm:$0xf]
        %v2312 = vld [vmem:[%s2297 + $0x38] sm:$0xf]
        %v2313 = vld [vmem:[%s2297 + $0x3c] sm:$0xf]
        %s2314 = scalar_lea.vmem %s3, 7
        %v2315 = vld [vmem:[%s2314] sm:$0x1]
        %v2317 = vlaneseq
        %v2318 = vshrl.u32 %v2317, 7
        %v2319 = vsub.s32 0, %v2318
        %v2320 = vrot.slane %v2315, %v2319
        %v2338 = vunpack.c.l.b16 %v2298
        %v2339 = vunpack.c.l.b16 %v2299
        %v2340 = vunpack.c.l.b16 %v2300
        %v2341 = vunpack.c.l.b16 %v2301
        %v2342 = vunpack.c.l.b16 %v2302
        %v2343 = vunpack.c.l.b16 %v2303
        %v2344 = vunpack.c.l.b16 %v2304
        %v2345 = vunpack.c.l.b16 %v2305
        %v2346 = vunpack.c.l.b16 %v2306
        %v2347 = vunpack.c.l.b16 %v2307
        %v2348 = vunpack.c.l.b16 %v2308
        %v2349 = vunpack.c.l.b16 %v2309
        %v2350 = vunpack.c.l.b16 %v2310
        %v2351 = vunpack.c.l.b16 %v2311
        %v2352 = vunpack.c.l.b16 %v2312
        %v2353 = vunpack.c.l.b16 %v2313
        %v2354 = vpack.c.b16 %v2339, %v2338
        %v2355 = vpack.c.b16 %v2341, %v2340
        %v2356 = vpack.c.b16 %v2343, %v2342
        %v2357 = vpack.c.b16 %v2345, %v2344
        %v2358 = vpack.c.b16 %v2347, %v2346
        %v2359 = vpack.c.b16 %v2349, %v2348
        %v2360 = vpack.c.b16 %v2351, %v2350
        %v2361 = vpack.c.b16 %v2353, %v2352
        %2370 = vmatprep.subr.bf16.mxu0 0
        %2371 = vmatpush1.bf16.msra.mxu0 %v2354
        %2372 = vmatprep.subr.bf16.mxu0 0
        %2373 = vmatpush1.bf16.msra.mxu0 %v2355
        %2374 = vmatprep.subr.bf16.mxu0 0
        %2375 = vmatpush1.bf16.msra.mxu0 %v2356
        %2376 = vmatprep.subr.bf16.mxu0 0
        %2377 = vmatpush1.bf16.msra.mxu0 %v2357
        %2378 = vmatprep.subr.bf16.mxu0 0
        %2379 = vmatpush1.bf16.msra.mxu0 %v2358
        %2380 = vmatprep.subr.bf16.mxu0 0
        %2381 = vmatpush1.bf16.msra.mxu0 %v2359
        %2382 = vmatprep.subr.bf16.mxu0 0
        %2383 = vmatpush1.bf16.msra.mxu0 %v2360
        %2384 = vmatprep.subr.bf16.mxu0 0
        %2385 = vmatpush1.bf16.msra.mxu0 %v2361
        %2386 = vmatprep.subr.bf16.mxu0 0
        %2387 = vmatpush1.bf16.msra.mxu0 0
        %2388 = vmatprep.subr.bf16.mxu0 0
        %2389 = vmatpush1.bf16.msra.mxu0 0
        %2390 = vmatprep.subr.bf16.mxu0 0
        %2391 = vmatpush1.bf16.msra.mxu0 0
        %2392 = vmatprep.subr.bf16.mxu0 0
        %2393 = vmatpush1.bf16.msra.mxu0 0
        %2394 = vmatprep.subr.bf16.mxu0 0
        %2395 = vmatpush1.bf16.msra.mxu0 0
        %2396 = vmatprep.subr.bf16.mxu0 0
        %2397 = vmatpush1.bf16.msra.mxu0 0
        %2398 = vmatprep.subr.bf16.mxu0 0
        %2399 = vmatpush1.bf16.msra.mxu0 0
        %2400 = vmatprep.subr.bf16.mxu0 0
        %2401 = vmatpush1.bf16.msra.mxu0 0
        %2402 = vmatprep.mubr.bf16.mxu0 0
        %2403 = vmatmul.mubr.bf16.gmra.mrb[0].mxu0 %v2289
        %v2404 = vpop.f32.mrb[0].mxu0
        %v2405 = vadd.f32 %v2320, %v2404
        %v2406 = vpop.f32.mrb[0].mxu0
        %v2407 = vpop.f32.mrb[0].mxu0
        %v2408 = vadd.f32 %v2320, %v2407
        %v2409 = vpop.f32.mrb[0].mxu0
        %2410 = vmatprep.mubr.bf16.mxu0 0
        %2411 = vmatmul.mubr.bf16.gmra.mrb[0].mxu0 %v2290
        %v2412 = vpop.f32.mrb[0].mxu0
        %v2413 = vadd.f32 %v2320, %v2412
        %v2414 = vpop.f32.mrb[0].mxu0
        %v2415 = vpop.f32.mrb[0].mxu0
        %v2416 = vadd.f32 %v2320, %v2415
        %v2417 = vpop.f32.mrb[0].mxu0
        %2418 = vmatprep.mubr.bf16.mxu0 0
        %2419 = vmatmul.mubr.bf16.gmra.mrb[0].mxu0 %v2291
        %v2420 = vpop.f32.mrb[0].mxu0
        %v2421 = vadd.f32 %v2320, %v2420
        %v2422 = vpop.f32.mrb[0].mxu0
        %v2423 = vpop.f32.mrb[0].mxu0
        %v2424 = vadd.f32 %v2320, %v2423
        %v2425 = vpop.f32.mrb[0].mxu0
        %2426 = vmatprep.mubr.bf16.mxu0 0
        %2427 = vmatmul.mubr.bf16.gmra.mrb[0].mxu0 %v2292
        %v2428 = vpop.f32.mrb[0].mxu0
        %v2429 = vadd.f32 %v2320, %v2428
        %v2430 = vpop.f32.mrb[0].mxu0
        %v2431 = vpop.f32.mrb[0].mxu0
        %v2432 = vadd.f32 %v2320, %v2431
        %v2433 = vpop.f32.mrb[0].mxu0
        %2434 = vmatprep.mubr.bf16.mxu0 0
        %2435 = vmatmul.mubr.bf16.gmra.mrb[0].mxu0 %v2293
        %v2436 = vpop.f32.mrb[0].mxu0
        %v2437 = vadd.f32 %v2320, %v2436
        %v2438 = vpop.f32.mrb[0].mxu0
        %v2439 = vpop.f32.mrb[0].mxu0
        %v2440 = vadd.f32 %v2320, %v2439
        %v2441 = vpop.f32.mrb[0].mxu0
        %2442 = vmatprep.mubr.bf16.mxu0 0
        %2443 = vmatmul.mubr.bf16.gmra.mrb[0].mxu0 %v2294
        %v2444 = vpop.f32.mrb[0].mxu0
        %v2445 = vadd.f32 %v2320, %v2444
        %v2446 = vpop.f32.mrb[0].mxu0
        %v2447 = vpop.f32.mrb[0].mxu0
        %v2448 = vadd.f32 %v2320, %v2447
        %v2449 = vpop.f32.mrb[0].mxu0
        %2450 = vmatprep.mubr.bf16.mxu0 0
        %2451 = vmatmul.mubr.bf16.gmra.mrb[0].mxu0 %v2295
        %v2452 = vpop.f32.mrb[0].mxu0
        %v2453 = vadd.f32 %v2320, %v2452
        %v2454 = vpop.f32.mrb[0].mxu0
        %v2455 = vpop.f32.mrb[0].mxu0
        %v2456 = vadd.f32 %v2320, %v2455
        %v2457 = vpop.f32.mrb[0].mxu0
        %2458 = vmatprep.mubr.bf16.mxu0 0
        %2459 = vmatmul.mubr.bf16.gmra.mrb[0].mxu0 %v2296
        %v2460 = vpop.f32.mrb[0].mxu0
        %v2461 = vadd.f32 %v2320, %v2460
        %v2462 = vpop.f32.mrb[0].mxu0
        %v2463 = vpop.f32.mrb[0].mxu0
        %v2464 = vadd.f32 %v2320, %v2463
        %v2465 = vpop.f32.mrb[0].mxu0
        %2466 = vdwg.mxu0
        %v2467 = vxor.u32 %v2405, 2147483648
        %v2468 = vxor.u32 %v2408, 2147483648
        %v2469 = vxor.u32 %v2413, 2147483648
        %v2470 = vxor.u32 %v2416, 2147483648
        %v2471 = vxor.u32 %v2421, 2147483648
        %v2472 = vxor.u32 %v2424, 2147483648
        %v2473 = vxor.u32 %v2429, 2147483648
        %v2474 = vxor.u32 %v2432, 2147483648
        %v2475 = vxor.u32 %v2437, 2147483648
        %v2476 = vxor.u32 %v2440, 2147483648
        %v2477 = vxor.u32 %v2445, 2147483648
        %v2478 = vxor.u32 %v2448, 2147483648
        %v2479 = vxor.u32 %v2453, 2147483648
        %v2480 = vxor.u32 %v2456, 2147483648
        %v2481 = vxor.u32 %v2461, 2147483648
        %v2482 = vxor.u32 %v2464, 2147483648
        %v2483 = vmul.f32 %v2467, 1.442695
        %v2484 = vpow.pop %v2483
        %v2485 = vmul.f32 %v2468, 1.442695
        %v2486 = vpow.pop %v2485
        %v2487 = vmul.f32 %v2469, 1.442695
        %v2488 = vpow.pop %v2487
        %v2489 = vmul.f32 %v2470, 1.442695
        %v2490 = vpow.pop %v2489
        %v2491 = vmul.f32 %v2471, 1.442695
        %v2492 = vpow.pop %v2491
        %v2493 = vmul.f32 %v2472, 1.442695
        %v2494 = vpow.pop %v2493
        %v2495 = vmul.f32 %v2473, 1.442695
        %v2496 = vpow.pop %v2495
        %v2497 = vmul.f32 %v2474, 1.442695
        %v2498 = vpow.pop %v2497
        %v2499 = vmul.f32 %v2475, 1.442695
        %v2500 = vpow.pop %v2499
        %v2501 = vmul.f32 %v2476, 1.442695
        %v2502 = vpow.pop %v2501
        %v2503 = vmul.f32 %v2477, 1.442695
        %v2504 = vpow.pop %v2503
        %v2505 = vmul.f32 %v2478, 1.442695
        %v2506 = vpow.pop %v2505
        %v2507 = vmul.f32 %v2479, 1.442695
        %v2508 = vpow.pop %v2507
        %v2509 = vmul.f32 %v2480, 1.442695
        %v2510 = vpow.pop %v2509
        %v2511 = vmul.f32 %v2481, 1.442695
        %v2512 = vpow.pop %v2511
        %v2513 = vmul.f32 %v2482, 1.442695
        %v2514 = vpow.pop %v2513
        %v2515 = vadd.f32 %v2484, 1.0
        %v2516 = vadd.f32 %v2486, 1.0
        %v2517 = vadd.f32 %v2488, 1.0
        %v2518 = vadd.f32 %v2490, 1.0
        %v2519 = vadd.f32 %v2492, 1.0
        %v2520 = vadd.f32 %v2494, 1.0
        %v2521 = vadd.f32 %v2496, 1.0
        %v2522 = vadd.f32 %v2498, 1.0
        %v2523 = vadd.f32 %v2500, 1.0
        %v2524 = vadd.f32 %v2502, 1.0
        %v2525 = vadd.f32 %v2504, 1.0
        %v2526 = vadd.f32 %v2506, 1.0
        %v2527 = vadd.f32 %v2508, 1.0
        %v2528 = vadd.f32 %v2510, 1.0
        %v2529 = vadd.f32 %v2512, 1.0
        %v2530 = vadd.f32 %v2514, 1.0
        %v2531 = vrcp.pop %v2515
        %v2532 = vmul.f32 1.0, %v2531
        %v2533 = vrcp.pop %v2516
        %v2534 = vmul.f32 1.0, %v2533
        %v2535 = vrcp.pop %v2517
        %v2536 = vmul.f32 1.0, %v2535
        %v2537 = vrcp.pop %v2518
        %v2538 = vmul.f32 1.0, %v2537
        %v2539 = vrcp.pop %v2519
        %v2540 = vmul.f32 1.0, %v2539
        %v2541 = vrcp.pop %v2520
        %v2542 = vmul.f32 1.0, %v2541
        %v2543 = vrcp.pop %v2521
        %v2544 = vmul.f32 1.0, %v2543
        %v2545 = vrcp.pop %v2522
        %v2546 = vmul.f32 1.0, %v2545
        %v2547 = vrcp.pop %v2523
        %v2548 = vmul.f32 1.0, %v2547
        %v2549 = vrcp.pop %v2524
        %v2550 = vmul.f32 1.0, %v2549
        %v2551 = vrcp.pop %v2525
        %v2552 = vmul.f32 1.0, %v2551
        %v2553 = vrcp.pop %v2526
        %v2554 = vmul.f32 1.0, %v2553
        %v2555 = vrcp.pop %v2527
        %v2556 = vmul.f32 1.0, %v2555
        %v2557 = vrcp.pop %v2528
        %v2558 = vmul.f32 1.0, %v2557
        %v2559 = vrcp.pop %v2529
        %v2560 = vmul.f32 1.0, %v2559
        %v2561 = vrcp.pop %v2530
        %v2562 = vmul.f32 1.0, %v2561
        %v2563 = vmul.f32 %v2405, %v2532
        %v2564 = vmul.f32 %v2408, %v2534
        %v2565 = vmul.f32 %v2413, %v2536
        %v2566 = vmul.f32 %v2416, %v2538
        %v2567 = vmul.f32 %v2421, %v2540
        %v2568 = vmul.f32 %v2424, %v2542
        %v2569 = vmul.f32 %v2429, %v2544
        %v2570 = vmul.f32 %v2432, %v2546
        %v2571 = vmul.f32 %v2437, %v2548
        %v2572 = vmul.f32 %v2440, %v2550
        %v2573 = vmul.f32 %v2445, %v2552
        %v2574 = vmul.f32 %v2448, %v2554
        %v2575 = vmul.f32 %v2453, %v2556
        %v2576 = vmul.f32 %v2456, %v2558
        %v2577 = vmul.f32 %v2461, %v2560
        %v2578 = vmul.f32 %v2464, %v2562
        %v2579 = vpack.c.bf16 %v2564, %v2563
        %v2580 = vpack.c.bf16 %v2566, %v2565
        %v2581 = vpack.c.bf16 %v2568, %v2567
        %v2582 = vpack.c.bf16 %v2570, %v2569
        %v2583 = vpack.c.bf16 %v2572, %v2571
        %v2584 = vpack.c.bf16 %v2574, %v2573
        %v2585 = vpack.c.bf16 %v2576, %v2575
        %v2586 = vpack.c.bf16 %v2578, %v2577
        %s2587 = scalar_lea.vmem [#allocation3], 448
        %v2588 = vld [vmem:[%s2587] sm:$0xf]
        %v2589 = vld [vmem:[%s2587 + $0x4] sm:$0xf]
        %v2590 = vld [vmem:[%s2587 + $0x8] sm:$0xf]
        %v2591 = vld [vmem:[%s2587 + $0xc] sm:$0xf]
        %v2592 = vld [vmem:[%s2587 + $0x10] sm:$0xf]
        %v2593 = vld [vmem:[%s2587 + $0x14] sm:$0xf]
        %v2594 = vld [vmem:[%s2587 + $0x18] sm:$0xf]
        %v2595 = vld [vmem:[%s2587 + $0x1c] sm:$0xf]
        %v2596 = vld [vmem:[%s2587 + $0x20] sm:$0xf]
        %v2597 = vld [vmem:[%s2587 + $0x24] sm:$0xf]
        %v2598 = vld [vmem:[%s2587 + $0x28] sm:$0xf]
        %v2599 = vld [vmem:[%s2587 + $0x2c] sm:$0xf]
        %v2600 = vld [vmem:[%s2587 + $0x30] sm:$0xf]
        %v2601 = vld [vmem:[%s2587 + $0x34] sm:$0xf]
        %v2602 = vld [vmem:[%s2587 + $0x38] sm:$0xf]
        %v2603 = vld [vmem:[%s2587 + $0x3c] sm:$0xf]
        %s2604 = scalar_lea.vmem %s3, 8
        %v2605 = vld [vmem:[%s2604] sm:$0x1]
        %v2607 = vlaneseq
        %v2608 = vshrl.u32 %v2607, 7
        %v2609 = vsub.s32 0, %v2608
        %v2610 = vrot.slane %v2605, %v2609
        %v2628 = vunpack.c.l.b16 %v2588
        %v2629 = vunpack.c.l.b16 %v2589
        %v2630 = vunpack.c.l.b16 %v2590
        %v2631 = vunpack.c.l.b16 %v2591
        %v2632 = vunpack.c.l.b16 %v2592
        %v2633 = vunpack.c.l.b16 %v2593
        %v2634 = vunpack.c.l.b16 %v2594
        %v2635 = vunpack.c.l.b16 %v2595
        %v2636 = vunpack.c.l.b16 %v2596
        %v2637 = vunpack.c.l.b16 %v2597
        %v2638 = vunpack.c.l.b16 %v2598
        %v2639 = vunpack.c.l.b16 %v2599
        %v2640 = vunpack.c.l.b16 %v2600
        %v2641 = vunpack.c.l.b16 %v2601
        %v2642 = vunpack.c.l.b16 %v2602
        %v2643 = vunpack.c.l.b16 %v2603
        %v2644 = vpack.c.b16 %v2629, %v2628
        %v2645 = vpack.c.b16 %v2631, %v2630
        %v2646 = vpack.c.b16 %v2633, %v2632
        %v2647 = vpack.c.b16 %v2635, %v2634
        %v2648 = vpack.c.b16 %v2637, %v2636
        %v2649 = vpack.c.b16 %v2639, %v2638
        %v2650 = vpack.c.b16 %v2641, %v2640
        %v2651 = vpack.c.b16 %v2643, %v2642
        %2660 = vmatprep.subr.bf16.mxu0 0
        %2661 = vmatpush1.bf16.msra.mxu0 %v2644
        %2662 = vmatprep.subr.bf16.mxu0 0
        %2663 = vmatpush1.bf16.msra.mxu0 %v2645
        %2664 = vmatprep.subr.bf16.mxu0 0
        %2665 = vmatpush1.bf16.msra.mxu0 %v2646
        %2666 = vmatprep.subr.bf16.mxu0 0
        %2667 = vmatpush1.bf16.msra.mxu0 %v2647
        %2668 = vmatprep.subr.bf16.mxu0 0
        %2669 = vmatpush1.bf16.msra.mxu0 %v2648
        %2670 = vmatprep.subr.bf16.mxu0 0
        %2671 = vmatpush1.bf16.msra.mxu0 %v2649
        %2672 = vmatprep.subr.bf16.mxu0 0
        %2673 = vmatpush1.bf16.msra.mxu0 %v2650
        %2674 = vmatprep.subr.bf16.mxu0 0
        %2675 = vmatpush1.bf16.msra.mxu0 %v2651
        %2676 = vmatprep.subr.bf16.mxu0 0
        %2677 = vmatpush1.bf16.msra.mxu0 0
        %2678 = vmatprep.subr.bf16.mxu0 0
        %2679 = vmatpush1.bf16.msra.mxu0 0
        %2680 = vmatprep.subr.bf16.mxu0 0
        %2681 = vmatpush1.bf16.msra.mxu0 0
        %2682 = vmatprep.subr.bf16.mxu0 0
        %2683 = vmatpush1.bf16.msra.mxu0 0
        %2684 = vmatprep.subr.bf16.mxu0 0
        %2685 = vmatpush1.bf16.msra.mxu0 0
        %2686 = vmatprep.subr.bf16.mxu0 0
        %2687 = vmatpush1.bf16.msra.mxu0 0
        %2688 = vmatprep.subr.bf16.mxu0 0
        %2689 = vmatpush1.bf16.msra.mxu0 0
        %2690 = vmatprep.subr.bf16.mxu0 0
        %2691 = vmatpush1.bf16.msra.mxu0 0
        %2692 = vmatprep.mubr.bf16.mxu0 0
        %2693 = vmatmul.mubr.bf16.gmra.mrb[0].mxu0 %v2579
        %v2694 = vpop.f32.mrb[0].mxu0
        %v2695 = vadd.f32 %v2610, %v2694
        %v2696 = vpop.f32.mrb[0].mxu0
        %v2697 = vpop.f32.mrb[0].mxu0
        %v2698 = vadd.f32 %v2610, %v2697
        %v2699 = vpop.f32.mrb[0].mxu0
        %2700 = vmatprep.mubr.bf16.mxu0 0
        %2701 = vmatmul.mubr.bf16.gmra.mrb[0].mxu0 %v2580
        %v2702 = vpop.f32.mrb[0].mxu0
        %v2703 = vadd.f32 %v2610, %v2702
        %v2704 = vpop.f32.mrb[0].mxu0
        %v2705 = vpop.f32.mrb[0].mxu0
        %v2706 = vadd.f32 %v2610, %v2705
        %v2707 = vpop.f32.mrb[0].mxu0
        %2708 = vmatprep.mubr.bf16.mxu0 0
        %2709 = vmatmul.mubr.bf16.gmra.mrb[0].mxu0 %v2581
        %v2710 = vpop.f32.mrb[0].mxu0
        %v2711 = vadd.f32 %v2610, %v2710
        %v2712 = vpop.f32.mrb[0].mxu0
        %v2713 = vpop.f32.mrb[0].mxu0
        %v2714 = vadd.f32 %v2610, %v2713
        %v2715 = vpop.f32.mrb[0].mxu0
        %2716 = vmatprep.mubr.bf16.mxu0 0
        %2717 = vmatmul.mubr.bf16.gmra.mrb[0].mxu0 %v2582
        %v2718 = vpop.f32.mrb[0].mxu0
        %v2719 = vadd.f32 %v2610, %v2718
        %v2720 = vpop.f32.mrb[0].mxu0
        %v2721 = vpop.f32.mrb[0].mxu0
        %v2722 = vadd.f32 %v2610, %v2721
        %v2723 = vpop.f32.mrb[0].mxu0
        %2724 = vmatprep.mubr.bf16.mxu0 0
        %2725 = vmatmul.mubr.bf16.gmra.mrb[0].mxu0 %v2583
        %v2726 = vpop.f32.mrb[0].mxu0
        %v2727 = vadd.f32 %v2610, %v2726
        %v2728 = vpop.f32.mrb[0].mxu0
        %v2729 = vpop.f32.mrb[0].mxu0
        %v2730 = vadd.f32 %v2610, %v2729
        %v2731 = vpop.f32.mrb[0].mxu0
        %2732 = vmatprep.mubr.bf16.mxu0 0
        %2733 = vmatmul.mubr.bf16.gmra.mrb[0].mxu0 %v2584
        %v2734 = vpop.f32.mrb[0].mxu0
        %v2735 = vadd.f32 %v2610, %v2734
        %v2736 = vpop.f32.mrb[0].mxu0
        %v2737 = vpop.f32.mrb[0].mxu0
        %v2738 = vadd.f32 %v2610, %v2737
        %v2739 = vpop.f32.mrb[0].mxu0
        %2740 = vmatprep.mubr.bf16.mxu0 0
        %2741 = vmatmul.mubr.bf16.gmra.mrb[0].mxu0 %v2585
        %v2742 = vpop.f32.mrb[0].mxu0
        %v2743 = vadd.f32 %v2610, %v2742
        %v2744 = vpop.f32.mrb[0].mxu0
        %v2745 = vpop.f32.mrb[0].mxu0
        %v2746 = vadd.f32 %v2610, %v2745
        %v2747 = vpop.f32.mrb[0].mxu0
        %2748 = vmatprep.mubr.bf16.mxu0 0
        %2749 = vmatmul.mubr.bf16.gmra.mrb[0].mxu0 %v2586
        %v2750 = vpop.f32.mrb[0].mxu0
        %v2751 = vadd.f32 %v2610, %v2750
        %v2752 = vpop.f32.mrb[0].mxu0
        %v2753 = vpop.f32.mrb[0].mxu0
        %v2754 = vadd.f32 %v2610, %v2753
        %v2755 = vpop.f32.mrb[0].mxu0
        %2756 = vdwg.mxu0
        %v2757 = vxor.u32 %v2695, 2147483648
        %v2758 = vxor.u32 %v2698, 2147483648
        %v2759 = vxor.u32 %v2703, 2147483648
        %v2760 = vxor.u32 %v2706, 2147483648
        %v2761 = vxor.u32 %v2711, 2147483648
        %v2762 = vxor.u32 %v2714, 2147483648
        %v2763 = vxor.u32 %v2719, 2147483648
        %v2764 = vxor.u32 %v2722, 2147483648
        %v2765 = vxor.u32 %v2727, 2147483648
        %v2766 = vxor.u32 %v2730, 2147483648
        %v2767 = vxor.u32 %v2735, 2147483648
        %v2768 = vxor.u32 %v2738, 2147483648
        %v2769 = vxor.u32 %v2743, 2147483648
        %v2770 = vxor.u32 %v2746, 2147483648
        %v2771 = vxor.u32 %v2751, 2147483648
        %v2772 = vxor.u32 %v2754, 2147483648
        %v2773 = vmul.f32 %v2757, 1.442695
        %v2774 = vpow.pop %v2773
        %v2775 = vmul.f32 %v2758, 1.442695
        %v2776 = vpow.pop %v2775
        %v2777 = vmul.f32 %v2759, 1.442695
        %v2778 = vpow.pop %v2777
        %v2779 = vmul.f32 %v2760, 1.442695
        %v2780 = vpow.pop %v2779
        %v2781 = vmul.f32 %v2761, 1.442695
        %v2782 = vpow.pop %v2781
        %v2783 = vmul.f32 %v2762, 1.442695
        %v2784 = vpow.pop %v2783
        %v2785 = vmul.f32 %v2763, 1.442695
        %v2786 = vpow.pop %v2785
        %v2787 = vmul.f32 %v2764, 1.442695
        %v2788 = vpow.pop %v2787
        %v2789 = vmul.f32 %v2765, 1.442695
        %v2790 = vpow.pop %v2789
        %v2791 = vmul.f32 %v2766, 1.442695
        %v2792 = vpow.pop %v2791
        %v2793 = vmul.f32 %v2767, 1.442695
        %v2794 = vpow.pop %v2793
        %v2795 = vmul.f32 %v2768, 1.442695
        %v2796 = vpow.pop %v2795
        %v2797 = vmul.f32 %v2769, 1.442695
        %v2798 = vpow.pop %v2797
        %v2799 = vmul.f32 %v2770, 1.442695
        %v2800 = vpow.pop %v2799
        %v2801 = vmul.f32 %v2771, 1.442695
        %v2802 = vpow.pop %v2801
        %v2803 = vmul.f32 %v2772, 1.442695
        %v2804 = vpow.pop %v2803
        %v2805 = vadd.f32 %v2774, 1.0
        %v2806 = vadd.f32 %v2776, 1.0
        %v2807 = vadd.f32 %v2778, 1.0
        %v2808 = vadd.f32 %v2780, 1.0
        %v2809 = vadd.f32 %v2782, 1.0
        %v2810 = vadd.f32 %v2784, 1.0
        %v2811 = vadd.f32 %v2786, 1.0
        %v2812 = vadd.f32 %v2788, 1.0
        %v2813 = vadd.f32 %v2790, 1.0
        %v2814 = vadd.f32 %v2792, 1.0
        %v2815 = vadd.f32 %v2794, 1.0
        %v2816 = vadd.f32 %v2796, 1.0
        %v2817 = vadd.f32 %v2798, 1.0
        %v2818 = vadd.f32 %v2800, 1.0
        %v2819 = vadd.f32 %v2802, 1.0
        %v2820 = vadd.f32 %v2804, 1.0
        %v2821 = vrcp.pop %v2805
        %v2822 = vmul.f32 1.0, %v2821
        %v2823 = vrcp.pop %v2806
        %v2824 = vmul.f32 1.0, %v2823
        %v2825 = vrcp.pop %v2807
        %v2826 = vmul.f32 1.0, %v2825
        %v2827 = vrcp.pop %v2808
        %v2828 = vmul.f32 1.0, %v2827
        %v2829 = vrcp.pop %v2809
        %v2830 = vmul.f32 1.0, %v2829
        %v2831 = vrcp.pop %v2810
        %v2832 = vmul.f32 1.0, %v2831
        %v2833 = vrcp.pop %v2811
        %v2834 = vmul.f32 1.0, %v2833
        %v2835 = vrcp.pop %v2812
        %v2836 = vmul.f32 1.0, %v2835
        %v2837 = vrcp.pop %v2813
        %v2838 = vmul.f32 1.0, %v2837
        %v2839 = vrcp.pop %v2814
        %v2840 = vmul.f32 1.0, %v2839
        %v2841 = vrcp.pop %v2815
        %v2842 = vmul.f32 1.0, %v2841
        %v2843 = vrcp.pop %v2816
        %v2844 = vmul.f32 1.0, %v2843
        %v2845 = vrcp.pop %v2817
        %v2846 = vmul.f32 1.0, %v2845
        %v2847 = vrcp.pop %v2818
        %v2848 = vmul.f32 1.0, %v2847
        %v2849 = vrcp.pop %v2819
        %v2850 = vmul.f32 1.0, %v2849
        %v2851 = vrcp.pop %v2820
        %v2852 = vmul.f32 1.0, %v2851
        %v2853 = vmul.f32 %v2695, %v2822
        %v2854 = vmul.f32 %v2698, %v2824
        %v2855 = vmul.f32 %v2703, %v2826
        %v2856 = vmul.f32 %v2706, %v2828
        %v2857 = vmul.f32 %v2711, %v2830
        %v2858 = vmul.f32 %v2714, %v2832
        %v2859 = vmul.f32 %v2719, %v2834
        %v2860 = vmul.f32 %v2722, %v2836
        %v2861 = vmul.f32 %v2727, %v2838
        %v2862 = vmul.f32 %v2730, %v2840
        %v2863 = vmul.f32 %v2735, %v2842
        %v2864 = vmul.f32 %v2738, %v2844
        %v2865 = vmul.f32 %v2743, %v2846
        %v2866 = vmul.f32 %v2746, %v2848
        %v2867 = vmul.f32 %v2751, %v2850
        %v2868 = vmul.f32 %v2754, %v2852
        %v2869 = vpack.c.bf16 %v2854, %v2853
        %v2870 = vpack.c.bf16 %v2856, %v2855
        %v2871 = vpack.c.bf16 %v2858, %v2857
        %v2872 = vpack.c.bf16 %v2860, %v2859
        %v2873 = vpack.c.bf16 %v2862, %v2861
        %v2874 = vpack.c.bf16 %v2864, %v2863
        %v2875 = vpack.c.bf16 %v2866, %v2865
        %v2876 = vpack.c.bf16 %v2868, %v2867
        %s2877 = scalar_lea.vmem [#allocation3], 512
        %v2878 = vld [vmem:[%s2877] sm:$0xf]
        %v2879 = vld [vmem:[%s2877 + $0x4] sm:$0xf]
        %v2880 = vld [vmem:[%s2877 + $0x8] sm:$0xf]
        %v2881 = vld [vmem:[%s2877 + $0xc] sm:$0xf]
        %v2882 = vld [vmem:[%s2877 + $0x10] sm:$0xf]
        %v2883 = vld [vmem:[%s2877 + $0x14] sm:$0xf]
        %v2884 = vld [vmem:[%s2877 + $0x18] sm:$0xf]
        %v2885 = vld [vmem:[%s2877 + $0x1c] sm:$0xf]
        %v2886 = vld [vmem:[%s2877 + $0x20] sm:$0xf]
        %v2887 = vld [vmem:[%s2877 + $0x24] sm:$0xf]
        %v2888 = vld [vmem:[%s2877 + $0x28] sm:$0xf]
        %v2889 = vld [vmem:[%s2877 + $0x2c] sm:$0xf]
        %v2890 = vld [vmem:[%s2877 + $0x30] sm:$0xf]
        %v2891 = vld [vmem:[%s2877 + $0x34] sm:$0xf]
        %v2892 = vld [vmem:[%s2877 + $0x38] sm:$0xf]
        %v2893 = vld [vmem:[%s2877 + $0x3c] sm:$0xf]
        %s2894 = scalar_lea.vmem %s3, 9
        %v2895 = vld [vmem:[%s2894] sm:$0x1]
        %v2897 = vlaneseq
        %v2898 = vshrl.u32 %v2897, 7
        %v2899 = vsub.s32 0, %v2898
        %v2900 = vrot.slane %v2895, %v2899
        %v2918 = vunpack.c.l.b16 %v2878
        %v2919 = vunpack.c.l.b16 %v2879
        %v2920 = vunpack.c.l.b16 %v2880
        %v2921 = vunpack.c.l.b16 %v2881
        %v2922 = vunpack.c.l.b16 %v2882
        %v2923 = vunpack.c.l.b16 %v2883
        %v2924 = vunpack.c.l.b16 %v2884
        %v2925 = vunpack.c.l.b16 %v2885
        %v2926 = vunpack.c.l.b16 %v2886
        %v2927 = vunpack.c.l.b16 %v2887
        %v2928 = vunpack.c.l.b16 %v2888
        %v2929 = vunpack.c.l.b16 %v2889
        %v2930 = vunpack.c.l.b16 %v2890
        %v2931 = vunpack.c.l.b16 %v2891
        %v2932 = vunpack.c.l.b16 %v2892
        %v2933 = vunpack.c.l.b16 %v2893
        %v2934 = vpack.c.b16 %v2919, %v2918
        %v2935 = vpack.c.b16 %v2921, %v2920
        %v2936 = vpack.c.b16 %v2923, %v2922
        %v2937 = vpack.c.b16 %v2925, %v2924
        %v2938 = vpack.c.b16 %v2927, %v2926
        %v2939 = vpack.c.b16 %v2929, %v2928
        %v2940 = vpack.c.b16 %v2931, %v2930
        %v2941 = vpack.c.b16 %v2933, %v2932
        %2950 = vmatprep.subr.bf16.mxu0 0
        %2951 = vmatpush1.bf16.msra.mxu0 %v2934
        %2952 = vmatprep.subr.bf16.mxu0 0
        %2953 = vmatpush1.bf16.msra.mxu0 %v2935
        %2954 = vmatprep.subr.bf16.mxu0 0
        %2955 = vmatpush1.bf16.msra.mxu0 %v2936
        %2956 = vmatprep.subr.bf16.mxu0 0
        %2957 = vmatpush1.bf16.msra.mxu0 %v2937
        %2958 = vmatprep.subr.bf16.mxu0 0
        %2959 = vmatpush1.bf16.msra.mxu0 %v2938
        %2960 = vmatprep.subr.bf16.mxu0 0
        %2961 = vmatpush1.bf16.msra.mxu0 %v2939
        %2962 = vmatprep.subr.bf16.mxu0 0
        %2963 = vmatpush1.bf16.msra.mxu0 %v2940
        %2964 = vmatprep.subr.bf16.mxu0 0
        %2965 = vmatpush1.bf16.msra.mxu0 %v2941
        %2966 = vmatprep.subr.bf16.mxu0 0
        %2967 = vmatpush1.bf16.msra.mxu0 0
        %2968 = vmatprep.subr.bf16.mxu0 0
        %2969 = vmatpush1.bf16.msra.mxu0 0
        %2970 = vmatprep.subr.bf16.mxu0 0
        %2971 = vmatpush1.bf16.msra.mxu0 0
        %2972 = vmatprep.subr.bf16.mxu0 0
        %2973 = vmatpush1.bf16.msra.mxu0 0
        %2974 = vmatprep.subr.bf16.mxu0 0
        %2975 = vmatpush1.bf16.msra.mxu0 0
        %2976 = vmatprep.subr.bf16.mxu0 0
        %2977 = vmatpush1.bf16.msra.mxu0 0
        %2978 = vmatprep.subr.bf16.mxu0 0
        %2979 = vmatpush1.bf16.msra.mxu0 0
        %2980 = vmatprep.subr.bf16.mxu0 0
        %2981 = vmatpush1.bf16.msra.mxu0 0
        %2982 = vmatprep.mubr.bf16.mxu0 0
        %2983 = vmatmul.mubr.bf16.gmra.mrb[0].mxu0 %v2869
        %v2984 = vpop.f32.mrb[0].mxu0
        %v2985 = vadd.f32 %v2900, %v2984
        %v2986 = vpop.f32.mrb[0].mxu0
        %v2987 = vpop.f32.mrb[0].mxu0
        %v2988 = vadd.f32 %v2900, %v2987
        %v2989 = vpop.f32.mrb[0].mxu0
        %2990 = vmatprep.mubr.bf16.mxu0 0
        %2991 = vmatmul.mubr.bf16.gmra.mrb[0].mxu0 %v2870
        %v2992 = vpop.f32.mrb[0].mxu0
        %v2993 = vadd.f32 %v2900, %v2992
        %v2994 = vpop.f32.mrb[0].mxu0
        %v2995 = vpop.f32.mrb[0].mxu0
        %v2996 = vadd.f32 %v2900, %v2995
        %v2997 = vpop.f32.mrb[0].mxu0
        %2998 = vmatprep.mubr.bf16.mxu0 0
        %2999 = vmatmul.mubr.bf16.gmra.mrb[0].mxu0 %v2871
        %v3000 = vpop.f32.mrb[0].mxu0
        %v3001 = vadd.f32 %v2900, %v3000
        %v3002 = vpop.f32.mrb[0].mxu0
        %v3003 = vpop.f32.mrb[0].mxu0
        %v3004 = vadd.f32 %v2900, %v3003
        %v3005 = vpop.f32.mrb[0].mxu0
        %3006 = vmatprep.mubr.bf16.mxu0 0
        %3007 = vmatmul.mubr.bf16.gmra.mrb[0].mxu0 %v2872
        %v3008 = vpop.f32.mrb[0].mxu0
        %v3009 = vadd.f32 %v2900, %v3008
        %v3010 = vpop.f32.mrb[0].mxu0
        %v3011 = vpop.f32.mrb[0].mxu0
        %v3012 = vadd.f32 %v2900, %v3011
        %v3013 = vpop.f32.mrb[0].mxu0
        %3014 = vmatprep.mubr.bf16.mxu0 0
        %3015 = vmatmul.mubr.bf16.gmra.mrb[0].mxu0 %v2873
        %v3016 = vpop.f32.mrb[0].mxu0
        %v3017 = vadd.f32 %v2900, %v3016
        %v3018 = vpop.f32.mrb[0].mxu0
        %v3019 = vpop.f32.mrb[0].mxu0
        %v3020 = vadd.f32 %v2900, %v3019
        %v3021 = vpop.f32.mrb[0].mxu0
        %3022 = vmatprep.mubr.bf16.mxu0 0
        %3023 = vmatmul.mubr.bf16.gmra.mrb[0].mxu0 %v2874
        %v3024 = vpop.f32.mrb[0].mxu0
        %v3025 = vadd.f32 %v2900, %v3024
        %v3026 = vpop.f32.mrb[0].mxu0
        %v3027 = vpop.f32.mrb[0].mxu0
        %v3028 = vadd.f32 %v2900, %v3027
        %v3029 = vpop.f32.mrb[0].mxu0
        %3030 = vmatprep.mubr.bf16.mxu0 0
        %3031 = vmatmul.mubr.bf16.gmra.mrb[0].mxu0 %v2875
        %v3032 = vpop.f32.mrb[0].mxu0
        %v3033 = vadd.f32 %v2900, %v3032
        %v3034 = vpop.f32.mrb[0].mxu0
        %v3035 = vpop.f32.mrb[0].mxu0
        %v3036 = vadd.f32 %v2900, %v3035
        %v3037 = vpop.f32.mrb[0].mxu0
        %3038 = vmatprep.mubr.bf16.mxu0 0
        %3039 = vmatmul.mubr.bf16.gmra.mrb[0].mxu0 %v2876
        %v3040 = vpop.f32.mrb[0].mxu0
        %v3041 = vadd.f32 %v2900, %v3040
        %v3042 = vpop.f32.mrb[0].mxu0
        %v3043 = vpop.f32.mrb[0].mxu0
        %v3044 = vadd.f32 %v2900, %v3043
        %v3045 = vpop.f32.mrb[0].mxu0
        %3046 = vdwg.mxu0
        %v3047 = vxor.u32 %v2985, 2147483648
        %v3048 = vxor.u32 %v2988, 2147483648
        %v3049 = vxor.u32 %v2993, 2147483648
        %v3050 = vxor.u32 %v2996, 2147483648
        %v3051 = vxor.u32 %v3001, 2147483648
        %v3052 = vxor.u32 %v3004, 2147483648
        %v3053 = vxor.u32 %v3009, 2147483648
        %v3054 = vxor.u32 %v3012, 2147483648
        %v3055 = vxor.u32 %v3017, 2147483648
        %v3056 = vxor.u32 %v3020, 2147483648
        %v3057 = vxor.u32 %v3025, 2147483648
        %v3058 = vxor.u32 %v3028, 2147483648
        %v3059 = vxor.u32 %v3033, 2147483648
        %v3060 = vxor.u32 %v3036, 2147483648
        %v3061 = vxor.u32 %v3041, 2147483648
        %v3062 = vxor.u32 %v3044, 2147483648
        %v3063 = vmul.f32 %v3047, 1.442695
        %v3064 = vpow.pop %v3063
        %v3065 = vmul.f32 %v3048, 1.442695
        %v3066 = vpow.pop %v3065
        %v3067 = vmul.f32 %v3049, 1.442695
        %v3068 = vpow.pop %v3067
        %v3069 = vmul.f32 %v3050, 1.442695
        %v3070 = vpow.pop %v3069
        %v3071 = vmul.f32 %v3051, 1.442695
        %v3072 = vpow.pop %v3071
        %v3073 = vmul.f32 %v3052, 1.442695
        %v3074 = vpow.pop %v3073
        %v3075 = vmul.f32 %v3053, 1.442695
        %v3076 = vpow.pop %v3075
        %v3077 = vmul.f32 %v3054, 1.442695
        %v3078 = vpow.pop %v3077
        %v3079 = vmul.f32 %v3055, 1.442695
        %v3080 = vpow.pop %v3079
        %v3081 = vmul.f32 %v3056, 1.442695
        %v3082 = vpow.pop %v3081
        %v3083 = vmul.f32 %v3057, 1.442695
        %v3084 = vpow.pop %v3083
        %v3085 = vmul.f32 %v3058, 1.442695
        %v3086 = vpow.pop %v3085
        %v3087 = vmul.f32 %v3059, 1.442695
        %v3088 = vpow.pop %v3087
        %v3089 = vmul.f32 %v3060, 1.442695
        %v3090 = vpow.pop %v3089
        %v3091 = vmul.f32 %v3061, 1.442695
        %v3092 = vpow.pop %v3091
        %v3093 = vmul.f32 %v3062, 1.442695
        %v3094 = vpow.pop %v3093
        %v3095 = vadd.f32 %v3064, 1.0
        %v3096 = vadd.f32 %v3066, 1.0
        %v3097 = vadd.f32 %v3068, 1.0
        %v3098 = vadd.f32 %v3070, 1.0
        %v3099 = vadd.f32 %v3072, 1.0
        %v3100 = vadd.f32 %v3074, 1.0
        %v3101 = vadd.f32 %v3076, 1.0
        %v3102 = vadd.f32 %v3078, 1.0
        %v3103 = vadd.f32 %v3080, 1.0
        %v3104 = vadd.f32 %v3082, 1.0
        %v3105 = vadd.f32 %v3084, 1.0
        %v3106 = vadd.f32 %v3086, 1.0
        %v3107 = vadd.f32 %v3088, 1.0
        %v3108 = vadd.f32 %v3090, 1.0
        %v3109 = vadd.f32 %v3092, 1.0
        %v3110 = vadd.f32 %v3094, 1.0
        %v3111 = vrcp.pop %v3095
        %v3112 = vmul.f32 1.0, %v3111
        %v3113 = vrcp.pop %v3096
        %v3114 = vmul.f32 1.0, %v3113
        %v3115 = vrcp.pop %v3097
        %v3116 = vmul.f32 1.0, %v3115
        %v3117 = vrcp.pop %v3098
        %v3118 = vmul.f32 1.0, %v3117
        %v3119 = vrcp.pop %v3099
        %v3120 = vmul.f32 1.0, %v3119
        %v3121 = vrcp.pop %v3100
        %v3122 = vmul.f32 1.0, %v3121
        %v3123 = vrcp.pop %v3101
        %v3124 = vmul.f32 1.0, %v3123
        %v3125 = vrcp.pop %v3102
        %v3126 = vmul.f32 1.0, %v3125
        %v3127 = vrcp.pop %v3103
        %v3128 = vmul.f32 1.0, %v3127
        %v3129 = vrcp.pop %v3104
        %v3130 = vmul.f32 1.0, %v3129
        %v3131 = vrcp.pop %v3105
        %v3132 = vmul.f32 1.0, %v3131
        %v3133 = vrcp.pop %v3106
        %v3134 = vmul.f32 1.0, %v3133
        %v3135 = vrcp.pop %v3107
        %v3136 = vmul.f32 1.0, %v3135
        %v3137 = vrcp.pop %v3108
        %v3138 = vmul.f32 1.0, %v3137
        %v3139 = vrcp.pop %v3109
        %v3140 = vmul.f32 1.0, %v3139
        %v3141 = vrcp.pop %v3110
        %v3142 = vmul.f32 1.0, %v3141
        %v3143 = vmul.f32 %v2985, %v3112
        %v3144 = vmul.f32 %v2988, %v3114
        %v3145 = vmul.f32 %v2993, %v3116
        %v3146 = vmul.f32 %v2996, %v3118
        %v3147 = vmul.f32 %v3001, %v3120
        %v3148 = vmul.f32 %v3004, %v3122
        %v3149 = vmul.f32 %v3009, %v3124
        %v3150 = vmul.f32 %v3012, %v3126
        %v3151 = vmul.f32 %v3017, %v3128
        %v3152 = vmul.f32 %v3020, %v3130
        %v3153 = vmul.f32 %v3025, %v3132
        %v3154 = vmul.f32 %v3028, %v3134
        %v3155 = vmul.f32 %v3033, %v3136
        %v3156 = vmul.f32 %v3036, %v3138
        %v3157 = vmul.f32 %v3041, %v3140
        %v3158 = vmul.f32 %v3044, %v3142
        %v3159 = vadd.f32 %v2273, %v3143
        %v3160 = vadd.f32 %v2274, %v3144
        %v3161 = vadd.f32 %v2275, %v3145
        %v3162 = vadd.f32 %v2276, %v3146
        %v3163 = vadd.f32 %v2277, %v3147
        %v3164 = vadd.f32 %v2278, %v3148
        %v3165 = vadd.f32 %v2279, %v3149
        %v3166 = vadd.f32 %v2280, %v3150
        %v3167 = vadd.f32 %v2281, %v3151
        %v3168 = vadd.f32 %v2282, %v3152
        %v3169 = vadd.f32 %v2283, %v3153
        %v3170 = vadd.f32 %v2284, %v3154
        %v3171 = vadd.f32 %v2285, %v3155
        %v3172 = vadd.f32 %v2286, %v3156
        %v3173 = vadd.f32 %v2287, %v3157
        %v3174 = vadd.f32 %v2288, %v3158
        %v3175 = vmul.f32 %v3159, 0.70710677
        %v3176 = vmul.f32 %v3160, 0.70710677
        %v3177 = vmul.f32 %v3161, 0.70710677
        %v3178 = vmul.f32 %v3162, 0.70710677
        %v3179 = vmul.f32 %v3163, 0.70710677
        %v3180 = vmul.f32 %v3164, 0.70710677
        %v3181 = vmul.f32 %v3165, 0.70710677
        %v3182 = vmul.f32 %v3166, 0.70710677
        %v3183 = vmul.f32 %v3167, 0.70710677
        %v3184 = vmul.f32 %v3168, 0.70710677
        %v3185 = vmul.f32 %v3169, 0.70710677
        %v3186 = vmul.f32 %v3170, 0.70710677
        %v3187 = vmul.f32 %v3171, 0.70710677
        %v3188 = vmul.f32 %v3172, 0.70710677
        %v3189 = vmul.f32 %v3173, 0.70710677
        %v3190 = vmul.f32 %v3174, 0.70710677
        %v3191 = vpack.c.bf16 %v3176, %v3175
        %v3192 = vpack.c.bf16 %v3178, %v3177
        %v3193 = vpack.c.bf16 %v3180, %v3179
        %v3194 = vpack.c.bf16 %v3182, %v3181
        %v3195 = vpack.c.bf16 %v3184, %v3183
        %v3196 = vpack.c.bf16 %v3186, %v3185
        %v3197 = vpack.c.bf16 %v3188, %v3187
        %v3198 = vpack.c.bf16 %v3190, %v3189
        %s3199 = scalar_lea.vmem [#allocation3], 576
        %v3200 = vld [vmem:[%s3199] sm:$0xf]
        %v3201 = vld [vmem:[%s3199 + $0x4] sm:$0xf]
        %v3202 = vld [vmem:[%s3199 + $0x8] sm:$0xf]
        %v3203 = vld [vmem:[%s3199 + $0xc] sm:$0xf]
        %v3204 = vld [vmem:[%s3199 + $0x10] sm:$0xf]
        %v3205 = vld [vmem:[%s3199 + $0x14] sm:$0xf]
        %v3206 = vld [vmem:[%s3199 + $0x18] sm:$0xf]
        %v3207 = vld [vmem:[%s3199 + $0x1c] sm:$0xf]
        %v3208 = vld [vmem:[%s3199 + $0x20] sm:$0xf]
        %v3209 = vld [vmem:[%s3199 + $0x24] sm:$0xf]
        %v3210 = vld [vmem:[%s3199 + $0x28] sm:$0xf]
        %v3211 = vld [vmem:[%s3199 + $0x2c] sm:$0xf]
        %v3212 = vld [vmem:[%s3199 + $0x30] sm:$0xf]
        %v3213 = vld [vmem:[%s3199 + $0x34] sm:$0xf]
        %v3214 = vld [vmem:[%s3199 + $0x38] sm:$0xf]
        %v3215 = vld [vmem:[%s3199 + $0x3c] sm:$0xf]
        %s3216 = scalar_lea.vmem %s3, 10
        %v3217 = vld [vmem:[%s3216] sm:$0x1]
        %v3219 = vlaneseq
        %v3220 = vshrl.u32 %v3219, 7
        %v3221 = vsub.s32 0, %v3220
        %v3222 = vrot.slane %v3217, %v3221
        %v3240 = vunpack.c.l.b16 %v3200
        %v3241 = vunpack.c.l.b16 %v3201
        %v3242 = vunpack.c.l.b16 %v3202
        %v3243 = vunpack.c.l.b16 %v3203
        %v3244 = vunpack.c.l.b16 %v3204
        %v3245 = vunpack.c.l.b16 %v3205
        %v3246 = vunpack.c.l.b16 %v3206
        %v3247 = vunpack.c.l.b16 %v3207
        %v3248 = vunpack.c.l.b16 %v3208
        %v3249 = vunpack.c.l.b16 %v3209
        %v3250 = vunpack.c.l.b16 %v3210
        %v3251 = vunpack.c.l.b16 %v3211
        %v3252 = vunpack.c.l.b16 %v3212
        %v3253 = vunpack.c.l.b16 %v3213
        %v3254 = vunpack.c.l.b16 %v3214
        %v3255 = vunpack.c.l.b16 %v3215
        %v3256 = vpack.c.b16 %v3241, %v3240
        %v3257 = vpack.c.b16 %v3243, %v3242
        %v3258 = vpack.c.b16 %v3245, %v3244
        %v3259 = vpack.c.b16 %v3247, %v3246
        %v3260 = vpack.c.b16 %v3249, %v3248
        %v3261 = vpack.c.b16 %v3251, %v3250
        %v3262 = vpack.c.b16 %v3253, %v3252
        %v3263 = vpack.c.b16 %v3255, %v3254
        %3272 = vmatprep.subr.bf16.mxu0 0
        %3273 = vmatpush1.bf16.msra.mxu0 %v3256
        %3274 = vmatprep.subr.bf16.mxu0 0
        %3275 = vmatpush1.bf16.msra.mxu0 %v3257
        %3276 = vmatprep.subr.bf16.mxu0 0
        %3277 = vmatpush1.bf16.msra.mxu0 %v3258
        %3278 = vmatprep.subr.bf16.mxu0 0
        %3279 = vmatpush1.bf16.msra.mxu0 %v3259
        %3280 = vmatprep.subr.bf16.mxu0 0
        %3281 = vmatpush1.bf16.msra.mxu0 %v3260
        %3282 = vmatprep.subr.bf16.mxu0 0
        %3283 = vmatpush1.bf16.msra.mxu0 %v3261
        %3284 = vmatprep.subr.bf16.mxu0 0
        %3285 = vmatpush1.bf16.msra.mxu0 %v3262
        %3286 = vmatprep.subr.bf16.mxu0 0
        %3287 = vmatpush1.bf16.msra.mxu0 %v3263
        %3288 = vmatprep.subr.bf16.mxu0 0
        %3289 = vmatpush1.bf16.msra.mxu0 0
        %3290 = vmatprep.subr.bf16.mxu0 0
        %3291 = vmatpush1.bf16.msra.mxu0 0
        %3292 = vmatprep.subr.bf16.mxu0 0
        %3293 = vmatpush1.bf16.msra.mxu0 0
        %3294 = vmatprep.subr.bf16.mxu0 0
        %3295 = vmatpush1.bf16.msra.mxu0 0
        %3296 = vmatprep.subr.bf16.mxu0 0
        %3297 = vmatpush1.bf16.msra.mxu0 0
        %3298 = vmatprep.subr.bf16.mxu0 0
        %3299 = vmatpush1.bf16.msra.mxu0 0
        %3300 = vmatprep.subr.bf16.mxu0 0
        %3301 = vmatpush1.bf16.msra.mxu0 0
        %3302 = vmatprep.subr.bf16.mxu0 0
        %3303 = vmatpush1.bf16.msra.mxu0 0
        %3304 = vmatprep.mubr.bf16.mxu0 0
        %3305 = vmatmul.mubr.bf16.gmra.mrb[0].mxu0 %v3191
        %v3306 = vpop.f32.mrb[0].mxu0
        %v3307 = vadd.f32 %v3222, %v3306
        %v3308 = vpop.f32.mrb[0].mxu0
        %v3309 = vpop.f32.mrb[0].mxu0
        %v3310 = vadd.f32 %v3222, %v3309
        %v3311 = vpop.f32.mrb[0].mxu0
        %3312 = vmatprep.mubr.bf16.mxu0 0
        %3313 = vmatmul.mubr.bf16.gmra.mrb[0].mxu0 %v3192
        %v3314 = vpop.f32.mrb[0].mxu0
        %v3315 = vadd.f32 %v3222, %v3314
        %v3316 = vpop.f32.mrb[0].mxu0
        %v3317 = vpop.f32.mrb[0].mxu0
        %v3318 = vadd.f32 %v3222, %v3317
        %v3319 = vpop.f32.mrb[0].mxu0
        %3320 = vmatprep.mubr.bf16.mxu0 0
        %3321 = vmatmul.mubr.bf16.gmra.mrb[0].mxu0 %v3193
        %v3322 = vpop.f32.mrb[0].mxu0
        %v3323 = vadd.f32 %v3222, %v3322
        %v3324 = vpop.f32.mrb[0].mxu0
        %v3325 = vpop.f32.mrb[0].mxu0
        %v3326 = vadd.f32 %v3222, %v3325
        %v3327 = vpop.f32.mrb[0].mxu0
        %3328 = vmatprep.mubr.bf16.mxu0 0
        %3329 = vmatmul.mubr.bf16.gmra.mrb[0].mxu0 %v3194
        %v3330 = vpop.f32.mrb[0].mxu0
        %v3331 = vadd.f32 %v3222, %v3330
        %v3332 = vpop.f32.mrb[0].mxu0
        %v3333 = vpop.f32.mrb[0].mxu0
        %v3334 = vadd.f32 %v3222, %v3333
        %v3335 = vpop.f32.mrb[0].mxu0
        %3336 = vmatprep.mubr.bf16.mxu0 0
        %3337 = vmatmul.mubr.bf16.gmra.mrb[0].mxu0 %v3195
        %v3338 = vpop.f32.mrb[0].mxu0
        %v3339 = vadd.f32 %v3222, %v3338
        %v3340 = vpop.f32.mrb[0].mxu0
        %v3341 = vpop.f32.mrb[0].mxu0
        %v3342 = vadd.f32 %v3222, %v3341
        %v3343 = vpop.f32.mrb[0].mxu0
        %3344 = vmatprep.mubr.bf16.mxu0 0
        %3345 = vmatmul.mubr.bf16.gmra.mrb[0].mxu0 %v3196
        %v3346 = vpop.f32.mrb[0].mxu0
        %v3347 = vadd.f32 %v3222, %v3346
        %v3348 = vpop.f32.mrb[0].mxu0
        %v3349 = vpop.f32.mrb[0].mxu0
        %v3350 = vadd.f32 %v3222, %v3349
        %v3351 = vpop.f32.mrb[0].mxu0
        %3352 = vmatprep.mubr.bf16.mxu0 0
        %3353 = vmatmul.mubr.bf16.gmra.mrb[0].mxu0 %v3197
        %v3354 = vpop.f32.mrb[0].mxu0
        %v3355 = vadd.f32 %v3222, %v3354
        %v3356 = vpop.f32.mrb[0].mxu0
        %v3357 = vpop.f32.mrb[0].mxu0
        %v3358 = vadd.f32 %v3222, %v3357
        %v3359 = vpop.f32.mrb[0].mxu0
        %3360 = vmatprep.mubr.bf16.mxu0 0
        %3361 = vmatmul.mubr.bf16.gmra.mrb[0].mxu0 %v3198
        %v3362 = vpop.f32.mrb[0].mxu0
        %v3363 = vadd.f32 %v3222, %v3362
        %v3364 = vpop.f32.mrb[0].mxu0
        %v3365 = vpop.f32.mrb[0].mxu0
        %v3366 = vadd.f32 %v3222, %v3365
        %v3367 = vpop.f32.mrb[0].mxu0
        %3368 = vdwg.mxu0
        %v3369 = vxor.u32 %v3307, 2147483648
        %v3370 = vxor.u32 %v3310, 2147483648
        %v3371 = vxor.u32 %v3315, 2147483648
        %v3372 = vxor.u32 %v3318, 2147483648
        %v3373 = vxor.u32 %v3323, 2147483648
        %v3374 = vxor.u32 %v3326, 2147483648
        %v3375 = vxor.u32 %v3331, 2147483648
        %v3376 = vxor.u32 %v3334, 2147483648
        %v3377 = vxor.u32 %v3339, 2147483648
        %v3378 = vxor.u32 %v3342, 2147483648
        %v3379 = vxor.u32 %v3347, 2147483648
        %v3380 = vxor.u32 %v3350, 2147483648
        %v3381 = vxor.u32 %v3355, 2147483648
        %v3382 = vxor.u32 %v3358, 2147483648
        %v3383 = vxor.u32 %v3363, 2147483648
        %v3384 = vxor.u32 %v3366, 2147483648
        %v3385 = vmul.f32 %v3369, 1.442695
        %v3386 = vpow.pop %v3385
        %v3387 = vmul.f32 %v3370, 1.442695
        %v3388 = vpow.pop %v3387
        %v3389 = vmul.f32 %v3371, 1.442695
        %v3390 = vpow.pop %v3389
        %v3391 = vmul.f32 %v3372, 1.442695
        %v3392 = vpow.pop %v3391
        %v3393 = vmul.f32 %v3373, 1.442695
        %v3394 = vpow.pop %v3393
        %v3395 = vmul.f32 %v3374, 1.442695
        %v3396 = vpow.pop %v3395
        %v3397 = vmul.f32 %v3375, 1.442695
        %v3398 = vpow.pop %v3397
        %v3399 = vmul.f32 %v3376, 1.442695
        %v3400 = vpow.pop %v3399
        %v3401 = vmul.f32 %v3377, 1.442695
        %v3402 = vpow.pop %v3401
        %v3403 = vmul.f32 %v3378, 1.442695
        %v3404 = vpow.pop %v3403
        %v3405 = vmul.f32 %v3379, 1.442695
        %v3406 = vpow.pop %v3405
        %v3407 = vmul.f32 %v3380, 1.442695
        %v3408 = vpow.pop %v3407
        %v3409 = vmul.f32 %v3381, 1.442695
        %v3410 = vpow.pop %v3409
        %v3411 = vmul.f32 %v3382, 1.442695
        %v3412 = vpow.pop %v3411
        %v3413 = vmul.f32 %v3383, 1.442695
        %v3414 = vpow.pop %v3413
        %v3415 = vmul.f32 %v3384, 1.442695
        %v3416 = vpow.pop %v3415
        %v3417 = vadd.f32 %v3386, 1.0
        %v3418 = vadd.f32 %v3388, 1.0
        %v3419 = vadd.f32 %v3390, 1.0
        %v3420 = vadd.f32 %v3392, 1.0
        %v3421 = vadd.f32 %v3394, 1.0
        %v3422 = vadd.f32 %v3396, 1.0
        %v3423 = vadd.f32 %v3398, 1.0
        %v3424 = vadd.f32 %v3400, 1.0
        %v3425 = vadd.f32 %v3402, 1.0
        %v3426 = vadd.f32 %v3404, 1.0
        %v3427 = vadd.f32 %v3406, 1.0
        %v3428 = vadd.f32 %v3408, 1.0
        %v3429 = vadd.f32 %v3410, 1.0
        %v3430 = vadd.f32 %v3412, 1.0
        %v3431 = vadd.f32 %v3414, 1.0
        %v3432 = vadd.f32 %v3416, 1.0
        %v3433 = vrcp.pop %v3417
        %v3434 = vmul.f32 1.0, %v3433
        %v3435 = vrcp.pop %v3418
        %v3436 = vmul.f32 1.0, %v3435
        %v3437 = vrcp.pop %v3419
        %v3438 = vmul.f32 1.0, %v3437
        %v3439 = vrcp.pop %v3420
        %v3440 = vmul.f32 1.0, %v3439
        %v3441 = vrcp.pop %v3421
        %v3442 = vmul.f32 1.0, %v3441
        %v3443 = vrcp.pop %v3422
        %v3444 = vmul.f32 1.0, %v3443
        %v3445 = vrcp.pop %v3423
        %v3446 = vmul.f32 1.0, %v3445
        %v3447 = vrcp.pop %v3424
        %v3448 = vmul.f32 1.0, %v3447
        %v3449 = vrcp.pop %v3425
        %v3450 = vmul.f32 1.0, %v3449
        %v3451 = vrcp.pop %v3426
        %v3452 = vmul.f32 1.0, %v3451
        %v3453 = vrcp.pop %v3427
        %v3454 = vmul.f32 1.0, %v3453
        %v3455 = vrcp.pop %v3428
        %v3456 = vmul.f32 1.0, %v3455
        %v3457 = vrcp.pop %v3429
        %v3458 = vmul.f32 1.0, %v3457
        %v3459 = vrcp.pop %v3430
        %v3460 = vmul.f32 1.0, %v3459
        %v3461 = vrcp.pop %v3431
        %v3462 = vmul.f32 1.0, %v3461
        %v3463 = vrcp.pop %v3432
        %v3464 = vmul.f32 1.0, %v3463
        %v3465 = vmul.f32 %v3307, %v3434
        %v3466 = vmul.f32 %v3310, %v3436
        %v3467 = vmul.f32 %v3315, %v3438
        %v3468 = vmul.f32 %v3318, %v3440
        %v3469 = vmul.f32 %v3323, %v3442
        %v3470 = vmul.f32 %v3326, %v3444
        %v3471 = vmul.f32 %v3331, %v3446
        %v3472 = vmul.f32 %v3334, %v3448
        %v3473 = vmul.f32 %v3339, %v3450
        %v3474 = vmul.f32 %v3342, %v3452
        %v3475 = vmul.f32 %v3347, %v3454
        %v3476 = vmul.f32 %v3350, %v3456
        %v3477 = vmul.f32 %v3355, %v3458
        %v3478 = vmul.f32 %v3358, %v3460
        %v3479 = vmul.f32 %v3363, %v3462
        %v3480 = vmul.f32 %v3366, %v3464
        %s3481 = scalar_lea.vmem %s3, 11
        %v3482 = vld [vmem:[%s3481] sm:$0x1]
        %v3484 = vlaneseq
        %v3485 = vshrl.u32 %v3484, 7
        %v3486 = vsub.s32 0, %v3485
        %v3487 = vrot.slane %v3482, %v3486
        %v3489 = vmul.f32 %v3465, %v3487
        %v3490 = vmul.f32 %v3466, %v3487
        %v3491 = vmul.f32 %v3467, %v3487
        %v3492 = vmul.f32 %v3468, %v3487
        %v3493 = vmul.f32 %v3469, %v3487
        %v3494 = vmul.f32 %v3470, %v3487
        %v3495 = vmul.f32 %v3471, %v3487
        %v3496 = vmul.f32 %v3472, %v3487
        %v3497 = vmul.f32 %v3473, %v3487
        %v3498 = vmul.f32 %v3474, %v3487
        %v3499 = vmul.f32 %v3475, %v3487
        %v3500 = vmul.f32 %v3476, %v3487
        %v3501 = vmul.f32 %v3477, %v3487
        %v3502 = vmul.f32 %v3478, %v3487
        %v3503 = vmul.f32 %v3479, %v3487
        %v3504 = vmul.f32 %v3480, %v3487
        %3505 = vadd.xlane.f32.xlu0 %v3489
        %v3506 = vpop.xlane.xlu0 %3505
        %3507 = vadd.xlane.f32.xlu0 %v3490
        %v3508 = vpop.xlane.xlu0 %3507
        %3509 = vadd.xlane.f32.xlu0 %v3491
        %v3510 = vpop.xlane.xlu0 %3509
        %3511 = vadd.xlane.f32.xlu0 %v3492
        %v3512 = vpop.xlane.xlu0 %3511
        %3513 = vadd.xlane.f32.xlu0 %v3493
        %v3514 = vpop.xlane.xlu0 %3513
        %3515 = vadd.xlane.f32.xlu0 %v3494
        %v3516 = vpop.xlane.xlu0 %3515
        %3517 = vadd.xlane.f32.xlu0 %v3495
        %v3518 = vpop.xlane.xlu0 %3517
        %3519 = vadd.xlane.f32.xlu0 %v3496
        %v3520 = vpop.xlane.xlu0 %3519
        %3521 = vadd.xlane.f32.xlu0 %v3497
        %v3522 = vpop.xlane.xlu0 %3521
        %3523 = vadd.xlane.f32.xlu0 %v3498
        %v3524 = vpop.xlane.xlu0 %3523
        %3525 = vadd.xlane.f32.xlu0 %v3499
        %v3526 = vpop.xlane.xlu0 %3525
        %3527 = vadd.xlane.f32.xlu0 %v3500
        %v3528 = vpop.xlane.xlu0 %3527
        %3529 = vadd.xlane.f32.xlu0 %v3501
        %v3530 = vpop.xlane.xlu0 %3529
        %3531 = vadd.xlane.f32.xlu0 %v3502
        %v3532 = vpop.xlane.xlu0 %3531
        %3533 = vadd.xlane.f32.xlu0 %v3503
        %v3534 = vpop.xlane.xlu0 %3533
        %3535 = vadd.xlane.f32.xlu0 %v3504
        %v3536 = vpop.xlane.xlu0 %3535
        %s3537 = sld [smem:[#allocation2]]
        %v3538 = vstv %s3537
        %v3539 = vadd.f32 %v3506, %v3538
        %v3540 = vadd.f32 %v3508, %v3538
        %v3541 = vadd.f32 %v3510, %v3538
        %v3542 = vadd.f32 %v3512, %v3538
        %v3543 = vadd.f32 %v3514, %v3538
        %v3544 = vadd.f32 %v3516, %v3538
        %v3545 = vadd.f32 %v3518, %v3538
        %v3546 = vadd.f32 %v3520, %v3538
        %v3547 = vadd.f32 %v3522, %v3538
        %v3548 = vadd.f32 %v3524, %v3538
        %v3549 = vadd.f32 %v3526, %v3538
        %v3550 = vadd.f32 %v3528, %v3538
        %v3551 = vadd.f32 %v3530, %v3538
        %v3552 = vadd.f32 %v3532, %v3538
        %v3553 = vadd.f32 %v3534, %v3538
        %v3554 = vadd.f32 %v3536, %v3538
        %vm3555 = vcmask 7168
        %3556 = vst.msk [vmem:[%s242] sm:$0xff] %vm3555, %v3539
        %3557 = vst.msk [vmem:[%s242 + $0x8] sm:$0xff] %vm3555, %v3540
        %3558 = vst.msk [vmem:[%s242 + $0x10] sm:$0xff] %vm3555, %v3541
        %3559 = vst.msk [vmem:[%s242 + $0x18] sm:$0xff] %vm3555, %v3542
        %3560 = vst.msk [vmem:[%s242 + $0x20] sm:$0xff] %vm3555, %v3543
        %3561 = vst.msk [vmem:[%s242 + $0x28] sm:$0xff] %vm3555, %v3544
        %3562 = vst.msk [vmem:[%s242 + $0x30] sm:$0xff] %vm3555, %v3545
        %3563 = vst.msk [vmem:[%s242 + $0x38] sm:$0xff] %vm3555, %v3546
        %3564 = vst.msk [vmem:[%s242 + $0x40] sm:$0xff] %vm3555, %v3547
        %3565 = vst.msk [vmem:[%s242 + $0x48] sm:$0xff] %vm3555, %v3548
        %3566 = vst.msk [vmem:[%s242 + $0x50] sm:$0xff] %vm3555, %v3549
        %3567 = vst.msk [vmem:[%s242 + $0x58] sm:$0xff] %vm3555, %v3550
        %3568 = vst.msk [vmem:[%s242 + $0x60] sm:$0xff] %vm3555, %v3551
        %3569 = vst.msk [vmem:[%s242 + $0x68] sm:$0xff] %vm3555, %v3552
        %3570 = vst.msk [vmem:[%s242 + $0x70] sm:$0xff] %vm3555, %v3553
        %3571 = vst.msk [vmem:[%s242 + $0x78] sm:$0xff] %vm3555, %v3554
        %s3572 = smul.u32 16, %s18
        %p3573 = scmp.lt.s32.totalorder %s3572, 31
        %s3574 = scalar_select %p3573, %s3572, 31
        %s3575 = smul.addr %s3574, 8
        %s3576 = scalar_lea.vmem %s5, %s3575
        // Predicated region
        $region45: #{tpu_custom_call.1} parent=39 // pred_check
          %p3577 = pneg %p146
        $region46: #{tpu_custom_call.1} parent=39 // pred_check_branch
          %3579 = sbr.rel (%p3577) target = $region48
        $region47: #{tpu_custom_call.1} parent=39 // pred_region
          %s3580 = smul.u32 16, %s18
        $region48: #{tpu_custom_call.1} parent=39 // pred_fallthru
          _
      $region40: #{tpu_custom_call.1} parent=5 // pred_fallthru
        _
      %p3581 = scmp.le.s32.totalorder 2, %s13
      // Predicated region
      $region49: #{tpu_custom_call.1} parent=5 // pred_check
        %p3582 = pneg %p3581
      $region50: #{tpu_custom_call.1} parent=5 // pred_check_branch
        %3584 = sbr.rel (%p3582) target = $region52
      $region51: #{tpu_custom_call.1} parent=5 // pred_region
        %s3585 = ssub.s32 %s13, 2
        // Predicated region
        $region53: #{tpu_custom_call.1} parent=51 // pred_check
          %p3586 = pneg %p152
        $region54: #{tpu_custom_call.1} parent=51 // pred_check_branch
          %3588 = sbr.rel (%p3586) target = $region56
        $region55: #{tpu_custom_call.1} parent=51 // pred_region
          %s3589 = smul.u32 16, %s19
          %p3590 = scmp.lt.s32.totalorder %s3589, 31
          %s3591 = scalar_select %p3590, %s3589, 31
          %s3592 = smul.addr %s3591, 8
          %s3593 = scalar_lea.vmem %s5, %s3592
        $region56: #{tpu_custom_call.1} parent=51 // pred_fallthru
          _
      $region52: #{tpu_custom_call.1} parent=5 // pred_fallthru
        _
    $region6: #{tpu_custom_call.1} parent=1 // loop_footer
      %s17 = sadd.s32 1, %s13
    $region7: #{tpu_custom_call.1} parent=1 // loop_footer_branch
      %12 = sbr.rel target = $region3
    $region8: #{tpu_custom_call.1} parent=1 // loop_exit
      _
    %3594 = vsyncpa [#allocation4], 1
    %s3595 = scalar_lea.sflag [#allocation4], 1
    %3596 = vsyncpa %s3595, 1

</llo_original>
